<compile_context>
chip_gen: v7x
topology: tpu7x:2x2x1
jax: 0.10.0
libtpu: 0.0.40
codegen_flags: <defaults>
</compile_context>

<pallas_src>
import jax
import jax.numpy as jnp
from jax.experimental import pallas as pl
from jax.experimental.pallas import tpu as pltpu

WEIGHT_DTYPE = jnp.bfloat16   # MXU weight/operand dtype; accumulation + epilogue are f32
A_IMG = 2.0
B_IMG = 0.3


# ----------------------------------------------------------------------------
# Fused matmul Pallas kernel
# ----------------------------------------------------------------------------

def _pick_tm(m):
    """Largest tile (prefer 256) that divides M exactly; else one full-extent block."""
    for tm in (256, 512, 128, 64, 32, 16, 8):
        if m % tm == 0:
            return tm
    return m


def fused_matmul(a, b, post_scale, post_shift, *, pre=None,
                 pre_relu=False, post_relu=False):
    """out = [relu]( prologue(a) @ b * post_scale + post_shift )

    prologue(a) = [relu](a * pre_scale + pre_shift) when `pre` is given, else a.
      a: (M, K) f32,  b: (K, N) weight (bf16/f32),
      post_scale: (N,) f32 or None, post_shift: (N,) f32, pre: ((K,), (K,)) or None.
    """
    M, K = a.shape
    Kb, N = b.shape
    assert K == Kb
    TM = _pick_tm(M)
    has_pre = pre is not None
    has_post_scale = post_scale is not None

    args = [a, b]
    in_specs = [pl.BlockSpec((TM, K), lambda i: (i, 0)),
                pl.BlockSpec((K, N), lambda i: (0, 0))]
    if has_pre:
        args += [pre[0].reshape(1, K).astype(jnp.float32),
                 pre[1].reshape(1, K).astype(jnp.float32)]
        in_specs += [pl.BlockSpec((1, K), lambda i: (0, 0)),
                     pl.BlockSpec((1, K), lambda i: (0, 0))]
    if has_post_scale:
        args.append(post_scale.reshape(1, N).astype(jnp.float32))
        in_specs.append(pl.BlockSpec((1, N), lambda i: (0, 0)))
    args.append(post_shift.reshape(1, N).astype(jnp.float32))
    in_specs.append(pl.BlockSpec((1, N), lambda i: (0, 0)))

    def kernel(*refs):
        it = iter(refs)
        a_ref = next(it)
        b_ref = next(it)
        prs = next(it) if has_pre else None
        prb = next(it) if has_pre else None
        pos = next(it) if has_post_scale else None
        pob = next(it)
        o_ref = next(it)

        x = a_ref[...]
        if has_pre:                       # fused BatchNorm (+ReLU) prologue, f32
            x = x * prs[...] + prb[...]
            if pre_relu:
                x = jnp.maximum(x, 0.0)
        y = jnp.dot(x.astype(b_ref.dtype), b_ref[...],
                    preferred_element_type=jnp.float32)
        if has_post_scale:                # fused BatchNorm epilogue, f32
            y = y * pos[...]
        y = y + pob[...]                  # bias / BN shift
        if post_relu:
            y = jnp.maximum(y, 0.0)
        o_ref[...] = y

    return pl.pallas_call(
        kernel,
        out_shape=jax.ShapeDtypeStruct((M, N), jnp.float32),
        grid=(M // TM,),
        in_specs=in_specs,
        out_specs=pl.BlockSpec((TM, N), lambda i: (i, 0)),
        compiler_params=pltpu.CompilerParams(dimension_semantics=("parallel",)),
    )(*args)


# ----------------------------------------------------------------------------
# Transposed-conv lowering (sub-pixel / 2x2-window, no zero dilation)  — JAX glue only
# ----------------------------------------------------------------------------

def _fold_bn(bn):
    gamma, beta, mean, var, eps = bn
    scale = gamma / jnp.sqrt(var + eps)
    shift = beta - mean * scale
    return scale, shift


def _subpix_weight_k4s2p1(w_t):
    """(Cin, Cout, 4, 4) ConvTranspose(s=2,p=1) weight -> (4*Cin, 4*Cout) matmul weight.

    Rows ordered (d_h, d_w, ci) to match 2x2-window patches; cols ordered (ph_h, ph_w, co).
    Derivation: output row 2j+ph uses padded-input rows {j+ph, j+ph+1} with taps
    kh = 3 - ph - 2*d (d = offset within the 2-row window)."""
    cin, cout = w_t.shape[0], w_t.shape[1]
    w = jnp.transpose(w_t, (2, 3, 0, 1))               # (kh, kw, ci, co)
    kidx = jnp.array([[3, 2], [1, 0]], dtype=jnp.int32)  # [d, ph] -> kh
    w1 = w[kidx]                                        # (d_h, ph_h, kw, ci, co)
    w2 = w1[:, :, kidx]                                 # (d_h, ph_h, d_w, ph_w, ci, co)
    w3 = jnp.transpose(w2, (0, 2, 4, 1, 3, 5))          # (d_h, d_w, ci, ph_h, ph_w, co)
    return w3.reshape(4 * cin, 4 * cout)


def _subpix_weight_k3s2p1op1(w_t):
    """(Cin, Cout, 3, 3) ConvTranspose(s=2,p=1,op=1) weight -> (4*Cin, 4*Cout)."""
    cin, cout = w_t.shape[0], w_t.shape[1]
    w = jnp.transpose(w_t, (2, 3, 0, 1))                # (kh, kw, ci, co)
    wz = jnp.pad(w, ((0, 1), (0, 1), (0, 0), (0, 0)))   # index 3 -> zero tap
    kidx = jnp.array([[1, 2], [3, 0]], dtype=jnp.int32)  # [d, ph] -> kh (3 = no tap)
    w1 = wz[kidx]
    w2 = w1[:, :, kidx]
    w3 = jnp.transpose(w2, (0, 2, 4, 1, 3, 5))
    return w3.reshape(4 * cin, 4 * cout)


def _im2col_2x2(xp):
    """(B, Hp, Wp, C) -> (B*(Hp-1)*(Wp-1), 4*C), patch order (d_h, d_w, ci)."""
    B, Hp, Wp, C = xp.shape
    Ho, Wo = Hp - 1, Wp - 1
    cols = [xp[:, dh:dh + Ho, dw:dw + Wo, :] for dh in range(2) for dw in range(2)]
    p = jnp.stack(cols, axis=3)                         # (B, Ho, Wo, 4, C)
    return p.reshape(B * Ho * Wo, 4 * C)


def _interleave_k4(R):
    """R: (B, H+1, W+1, 2, 2, C) sub-pixel results -> (B, 2H, 2W, C)."""
    B, Hp1, Wp1, _, _, C = R.shape
    H, W = Hp1 - 1, Wp1 - 1
    even_r = R[:, 0:H, :, 0]                            # (B, H, W+1, 2, C)
    odd_r = R[:, 1:H + 1, :, 1]
    rows = jnp.stack([even_r, odd_r], axis=2).reshape(B, 2 * H, W + 1, 2, C)
    even_c = rows[:, :, 0:W, 0]                         # (B, 2H, W, C)
    odd_c = rows[:, :, 1:W + 1, 1]
    return jnp.stack([even_c, odd_c], axis=3).reshape(B, 2 * H, 2 * W, C)


def _pixel_shuffle2(R):
    """R: (B, H, W, 2, 2, C) -> (B, 2H, 2W, C)."""
    B, H, W, _, _, C = R.shape
    return jnp.transpose(R, (0, 1, 3, 2, 4, 5)).reshape(B, 2 * H, 2 * W, C)


# ----------------------------------------------------------------------------
# One-time parameter folding / relayout (outside jit)
# ----------------------------------------------------------------------------

def prepare_params(params, a_val=A_IMG, b_val=B_IMG, w_dtype=WEIGHT_DTYPE):
    def prep_block(p, first):
        s1, t1 = _fold_bn(p["bn1"])
        s2, t2 = _fold_bn(p["bn2"])
        w1 = p["conv1_w"][:, :, 0, 0].astype(w_dtype)          # (Cin, Cin) 1x1 conv
        su, tu = _fold_bn(p["up_bn"])                          # fold up_bn into up conv
        w_up = p["up_w"] * su[None, :, None, None]
        b_up = su * p["up_b"] + tu
        w_comb = jnp.concatenate([a_val * w_up, b_val * p["conv2_w"]], axis=0)
        if first:                                              # stride-1 conv on 1x1 input
            cin2, cout = w_comb.shape[0], w_comb.shape[1]
            w_cat = jnp.transpose(w_comb, (0, 2, 3, 1)).reshape(cin2, 16 * cout)
            bias = jnp.tile(a_val * b_up, 16)
        else:                                                  # stride-2, K=4, p=1
            w_cat = _subpix_weight_k4s2p1(w_comb)
            bias = jnp.tile(a_val * b_up, 4)
        return dict(s1=s1, t1=t1, s2=s2, t2=t2, w1=w1,
                    w_cat=w_cat.astype(w_dtype), bias=bias)

    return dict(
        fc_w=params["fc_w"].T.astype(w_dtype),
        fc_b=params["fc_b"],
        rb1=prep_block(params["rb1"], True),
        rb2=prep_block(params["rb2"], False),
        rb3=prep_block(params["rb3"], False),
        rb4=prep_block(params["rb4"], False),
        conv_w=_subpix_weight_k3s2p1op1(params["conv_w"]).astype(w_dtype),
        conv_b=jnp.tile(params["conv_b"], 4),
    )


# ----------------------------------------------------------------------------
# Forward pass
# ----------------------------------------------------------------------------

def res_block_s2(x, p):
    """ResidualBlock2dTransposeConv (stride 2, K=4, pad 1), eval mode: 2 pallas_calls."""
    B, H, W, Cin = x.shape
    # (1) h = relu(bn2(conv1(relu(bn1(x)))))  — fused prologue/epilogue matmul
    h2 = fused_matmul(x.reshape(B * H * W, Cin), p["w1"], p["s2"], p["t2"],
                      pre=(p["s1"], p["t1"]), pre_relu=True, post_relu=True)
    # (2) a*bn_up(convT_up(x)) + b*convT2(h)  — single sub-pixel matmul on concat channels
    cat = jnp.concatenate([x, h2.reshape(B, H, W, Cin)], axis=-1)
    catp = jnp.pad(cat, ((0, 0), (1, 1), (1, 1), (0, 0)))
    patches = _im2col_2x2(catp)                                # (B*(H+1)*(W+1), 8*Cin)
    cout = p["bias"].shape[0] // 4
    R = fused_matmul(patches, p["w_cat"], None, p["bias"])
    return _interleave_k4(R.reshape(B, H + 1, W + 1, 2, 2, cout))


def celeba_img_decoder_forward(z, prep):
    B = z.shape[0]
    # feature_generator: Linear(latent -> 5*DIM) with fused bias
    feat = fused_matmul(z, prep["fc_w"], None, prep["fc_b"])   # (B, 5*DIM), spatial 1x1
    # resblock1 (stride 1, K=4, p=0 on a 1x1 map): both convs are plain matmuls
    p = prep["rb1"]
    h = fused_matmul(feat, p["w1"], p["s2"], p["t2"],
                     pre=(p["s1"], p["t1"]), pre_relu=True, post_relu=True)
    cat = jnp.concatenate([feat, h], axis=-1)
    cout1 = p["bias"].shape[0] // 16
    x = fused_matmul(cat, p["w_cat"], None, p["bias"]).reshape(B, 4, 4, cout1)
    # resblocks 2-4 (stride 2)
    x = res_block_s2(x, prep["rb2"])
    x = res_block_s2(x, prep["rb3"])
    x = res_block_s2(x, prep["rb4"])
    # final ConvTranspose2d(DIM -> 3, K=3, s=2, p=1, op=1) via sub-pixel matmul
    Bq, H, W, Cin = x.shape
    xp = jnp.pad(x, ((0, 0), (0, 1), (0, 1), (0, 0)))
    patches = _im2col_2x2(xp)                                  # (B*H*W, 4*Cin)
    cout = prep["conv_b"].shape[0] // 4
    R = fused_matmul(patches, prep["conv_w"], None, prep["conv_b"])
    y = _pixel_shuffle2(R.reshape(Bq, H, W, 2, 2, cout))       # (B, 2H, 2W, 3)
    return jnp.transpose(y, (0, 3, 1, 2))                      # NCHW like PyTorch


# ----------------------------------------------------------------------------
# Deterministic parameter initialization (synthetic, no checkpoint)
# ----------------------------------------------------------------------------

def init_bn(key, c):
    k1, k2, k3, k4 = jax.random.split(key, 4)
    gamma = 1.0 + 0.1 * jax.random.normal(k1, (c,), jnp.float32)
    beta = 0.1 * jax.random.normal(k2, (c,), jnp.float32)
    mean = 0.1 * jax.random.normal(k3, (c,), jnp.float32)
    var = 0.9 + 0.2 * jnp.abs(jax.random.normal(k4, (c,), jnp.float32))
    return (gamma, beta, mean, var, 1e-5)


def init_resblock(key, cin, cout, k):
    ks = jax.random.split(key, 7)
    return dict(
        bn1=init_bn(ks[0], cin),
        conv1_w=0.05 * jax.random.normal(ks[1], (cin, cin, 1, 1), jnp.float32),
        bn2=init_bn(ks[2], cin),
        conv2_w=0.05 * jax.random.normal(ks[3], (cin, cout, k, k), jnp.float32),
        up_w=0.05 * jax.random.normal(ks[4], (cin, cout, k, k), jnp.float32),
        up_b=0.05 * jax.random.normal(ks[5], (cout,), jnp.float32),
        up_bn=init_bn(ks[6], cout),
    )


def init_params(key, latent_dim, dim_img, image_channels=3, kernelsize_dec_img=3):
    ks = jax.random.split(key, 8)
    return dict(
        fc_w=0.05 * jax.random.normal(ks[0], (5 * dim_img, latent_dim), jnp.float32),
        fc_b=0.05 * jax.random.normal(ks[1], (5 * dim_img,), jnp.float32),
        rb1=init_resblock(ks[2], 5 * dim_img, 4 * dim_img, 4),
        rb2=init_resblock(ks[3], 4 * dim_img, 3 * dim_img, 4),
        rb3=init_resblock(ks[4], 3 * dim_img, 2 * dim_img, 4),
        rb4=init_resblock(ks[5], 2 * dim_img, 1 * dim_img, 4),
        conv_w=0.05 * jax.random.normal(
            ks[6], (dim_img, image_channels, kernelsize_dec_img, kernelsize_dec_img),
            jnp.float32),
        conv_b=0.05 * jax.random.normal(ks[7], (image_channels,), jnp.float32),
    )


if __name__ == "__main__":
    # Small but architecture-consistent config: latent=16, DIM_img=16, batch=2.
    LATENT_DIM = 16
    DIM_IMG = 16
    BATCH = 2

    key = jax.random.PRNGKey(0)
    kp, kz = jax.random.split(key)
    params = init_params(kp, LATENT_DIM, DIM_IMG)
    prep = prepare_params(params)            # one-time weight fold / relayout, outside jit
    z = jax.random.normal(kz, (BATCH, LATENT_DIM), jnp.float32)

    fwd = jax.jit(celeba_img_decoder_forward)
    out = jax.block_until_ready(fwd(z, prep))

    # spatial path: 1 -> 4 -> 8 -> 16 -> 32 -> 64 ; channels end at 3 (NCHW output)
    assert out.shape == (BATCH, 3, 64, 64), out.shape
    assert bool(jnp.all(jnp.isfinite(out)))
    print("KERNEL_OK")
</pallas_src>

<mosaic_0001>
module attributes {stable_mosaic.version = 11 : i64} {
  func.func @kernel(%arg0: i32, %arg1: memref<2x16xf32, #tpu.memory_space<vmem>>, %arg2: memref<16x80xbf16, #tpu.memory_space<vmem>>, %arg3: memref<1x80xf32, #tpu.memory_space<vmem>>, %arg4: memref<2x80xf32, #tpu.memory_space<vmem>>) attributes {dimension_semantics = [#tpu.dimension_semantics<parallel>], iteration_bounds = array<i64: 1>, scalar_prefetch = 0 : i64, scratch_operands = 0 : i64, tpu.core_type = #tpu.core_type<tc>, window_params = [{transform_indices = @transform_0, window_bounds = array<i64: 2, 16>}, {pipeline_mode = #tpu.pipeline_mode<synchronous>, transform_indices = @transform_1, window_bounds = array<i64: 16, 80>}, {pipeline_mode = #tpu.pipeline_mode<synchronous>, transform_indices = @transform_2, window_bounds = array<i64: 1, 80>}, {transform_indices = @transform_3, window_bounds = array<i64: 2, 80>}]} {
    %c0 = arith.constant 0 : index
    %c0_0 = arith.constant 0 : index
    %0 = vector.load %arg1[%c0, %c0_0] : memref<2x16xf32, #tpu.memory_space<vmem>>, vector<2x16xf32>
    %1 = arith.truncf %0 : vector<2x16xf32> to vector<2x16xbf16>
    %c0_1 = arith.constant 0 : index
    %c0_2 = arith.constant 0 : index
    %2 = vector.load %arg2[%c0_1, %c0_2] : memref<16x80xbf16, #tpu.memory_space<vmem>>, vector<16x80xbf16>
    %cst = arith.constant dense<0.000000e+00> : vector<2x80xf32>
    %3 = tpu.matmul %1, %2, %cst {dimension_numbers = #tpu.dot_dimension_numbers<[1], [0], [0], [1], [0, 0, 1, 1], [], []>} : vector<2x16xbf16>, vector<16x80xbf16>, vector<2x80xf32> -> vector<2x80xf32>
    %c0_3 = arith.constant 0 : index
    %c0_4 = arith.constant 0 : index
    %4 = vector.load %arg3[%c0_3, %c0_4] : memref<1x80xf32, #tpu.memory_space<vmem>>, vector<1x80xf32>
    %5 = vector.broadcast %4 : vector<1x80xf32> to vector<2x80xf32>
    %6 = arith.addf %3, %5 : vector<2x80xf32>
    %c0_5 = arith.constant 0 : index
    %c0_6 = arith.constant 0 : index
    %7 = vector.load %arg4[%c0_5, %c0_6] : memref<2x80xf32, #tpu.memory_space<vmem>>, vector<2x80xf32>
    tpu.vector_store %arg4[%c0_5, %c0_6], %6 {strides = array<i32>} : memref<2x80xf32, #tpu.memory_space<vmem>>, vector<2x80xf32>,
    return
  }
  func.func @transform_0(%arg0: i32) -> (i32, i32) {
    %c0_i32 = arith.constant 0 : i32
    %c0_i32_0 = arith.constant 0 : i32
    return %arg0, %c0_i32 : i32, i32
  }
  func.func @transform_1(%arg0: i32) -> (i32, i32) {
    %c0_i32 = arith.constant 0 : i32
    %c0_i32_0 = arith.constant 0 : i32
    %c0_i32_1 = arith.constant 0 : i32
    return %c0_i32, %c0_i32_0 : i32, i32
  }
  func.func @transform_2(%arg0: i32) -> (i32, i32) {
    %c0_i32 = arith.constant 0 : i32
    %c0_i32_0 = arith.constant 0 : i32
    %c0_i32_1 = arith.constant 0 : i32
    return %c0_i32, %c0_i32_0 : i32, i32
  }
  func.func @transform_3(%arg0: i32) -> (i32, i32) {
    %c0_i32 = arith.constant 0 : i32
    %c0_i32_0 = arith.constant 0 : i32
    return %arg0, %c0_i32 : i32, i32
  }
}

module attributes {stable_mosaic.version = 11 : i64} {
  func.func @kernel(%arg0: i32, %arg1: memref<2x160xf32, #tpu.memory_space<vmem>>, %arg2: memref<160x1024xbf16, #tpu.memory_space<vmem>>, %arg3: memref<1x1024xf32, #tpu.memory_space<vmem>>, %arg4: memref<2x1024xf32, #tpu.memory_space<vmem>>) attributes {dimension_semantics = [#tpu.dimension_semantics<parallel>], iteration_bounds = array<i64: 1>, scalar_prefetch = 0 : i64, scratch_operands = 0 : i64, tpu.core_type = #tpu.core_type<tc>, window_params = [{transform_indices = @transform_0, window_bounds = array<i64: 2, 160>}, {pipeline_mode = #tpu.pipeline_mode<synchronous>, transform_indices = @transform_1, window_bounds = array<i64: 160, 1024>}, {pipeline_mode = #tpu.pipeline_mode<synchronous>, transform_indices = @transform_2, window_bounds = array<i64: 1, 1024>}, {transform_indices = @transform_3, window_bounds = array<i64: 2, 1024>}]} {
    %c0 = arith.constant 0 : index
    %c0_0 = arith.constant 0 : index
    %0 = vector.load %arg1[%c0, %c0_0] : memref<2x160xf32, #tpu.memory_space<vmem>>, vector<2x160xf32>
    %1 = arith.truncf %0 : vector<2x160xf32> to vector<2x160xbf16>
    %c0_1 = arith.constant 0 : index
    %c0_2 = arith.constant 0 : index
    %2 = vector.load %arg2[%c0_1, %c0_2] : memref<160x1024xbf16, #tpu.memory_space<vmem>>, vector<160x1024xbf16>
    %cst = arith.constant dense<0.000000e+00> : vector<2x1024xf32>
    %3 = tpu.matmul %1, %2, %cst {dimension_numbers = #tpu.dot_dimension_numbers<[1], [0], [0], [1], [0, 0, 1, 1], [], []>} : vector<2x160xbf16>, vector<160x1024xbf16>, vector<2x1024xf32> -> vector<2x1024xf32>
    %c0_3 = arith.constant 0 : index
    %c0_4 = arith.constant 0 : index
    %4 = vector.load %arg3[%c0_3, %c0_4] : memref<1x1024xf32, #tpu.memory_space<vmem>>, vector<1x1024xf32>
    %5 = vector.broadcast %4 : vector<1x1024xf32> to vector<2x1024xf32>
    %6 = arith.addf %3, %5 : vector<2x1024xf32>
    %c0_5 = arith.constant 0 : index
    %c0_6 = arith.constant 0 : index
    %7 = vector.load %arg4[%c0_5, %c0_6] : memref<2x1024xf32, #tpu.memory_space<vmem>>, vector<2x1024xf32>
    tpu.vector_store %arg4[%c0_5, %c0_6], %6 {strides = array<i32>} : memref<2x1024xf32, #tpu.memory_space<vmem>>, vector<2x1024xf32>,
    return
  }
  func.func @transform_0(%arg0: i32) -> (i32, i32) {
    %c0_i32 = arith.constant 0 : i32
    %c0_i32_0 = arith.constant 0 : i32
    return %arg0, %c0_i32 : i32, i32
  }
  func.func @transform_1(%arg0: i32) -> (i32, i32) {
    %c0_i32 = arith.constant 0 : i32
    %c0_i32_0 = arith.constant 0 : i32
    %c0_i32_1 = arith.constant 0 : i32
    return %c0_i32, %c0_i32_0 : i32, i32
  }
  func.func @transform_2(%arg0: i32) -> (i32, i32) {
    %c0_i32 = arith.constant 0 : i32
    %c0_i32_0 = arith.constant 0 : i32
    %c0_i32_1 = arith.constant 0 : i32
    return %c0_i32, %c0_i32_0 : i32, i32
  }
  func.func @transform_3(%arg0: i32) -> (i32, i32) {
    %c0_i32 = arith.constant 0 : i32
    %c0_i32_0 = arith.constant 0 : i32
    return %arg0, %c0_i32 : i32, i32
  }
}

module attributes {stable_mosaic.version = 11 : i64} {
  func.func @kernel(%arg0: i32, %arg1: memref<2x80xf32, #tpu.memory_space<vmem>>, %arg2: memref<80x80xbf16, #tpu.memory_space<vmem>>, %arg3: memref<1x80xf32, #tpu.memory_space<vmem>>, %arg4: memref<1x80xf32, #tpu.memory_space<vmem>>, %arg5: memref<1x80xf32, #tpu.memory_space<vmem>>, %arg6: memref<1x80xf32, #tpu.memory_space<vmem>>, %arg7: memref<2x80xf32, #tpu.memory_space<vmem>>) attributes {dimension_semantics = [#tpu.dimension_semantics<parallel>], iteration_bounds = array<i64: 1>, scalar_prefetch = 0 : i64, scratch_operands = 0 : i64, tpu.core_type = #tpu.core_type<tc>, window_params = [{transform_indices = @transform_0, window_bounds = array<i64: 2, 80>}, {pipeline_mode = #tpu.pipeline_mode<synchronous>, transform_indices = @transform_1, window_bounds = array<i64: 80, 80>}, {pipeline_mode = #tpu.pipeline_mode<synchronous>, transform_indices = @transform_2, window_bounds = array<i64: 1, 80>}, {pipeline_mode = #tpu.pipeline_mode<synchronous>, transform_indices = @transform_3, window_bounds = array<i64: 1, 80>}, {pipeline_mode = #tpu.pipeline_mode<synchronous>, transform_indices = @transform_4, window_bounds = array<i64: 1, 80>}, {pipeline_mode = #tpu.pipeline_mode<synchronous>, transform_indices = @transform_5, window_bounds = array<i64: 1, 80>}, {transform_indices = @transform_6, window_bounds = array<i64: 2, 80>}]} {
    %c0 = arith.constant 0 : index
    %c0_0 = arith.constant 0 : index
    %0 = vector.load %arg1[%c0, %c0_0] : memref<2x80xf32, #tpu.memory_space<vmem>>, vector<2x80xf32>
    %c0_1 = arith.constant 0 : index
    %c0_2 = arith.constant 0 : index
    %1 = vector.load %arg3[%c0_1, %c0_2] : memref<1x80xf32, #tpu.memory_space<vmem>>, vector<1x80xf32>
    %2 = vector.broadcast %1 : vector<1x80xf32> to vector<2x80xf32>
    %3 = arith.mulf %0, %2 : vector<2x80xf32>
    %c0_3 = arith.constant 0 : index
    %c0_4 = arith.constant 0 : index
    %4 = vector.load %arg4[%c0_3, %c0_4] : memref<1x80xf32, #tpu.memory_space<vmem>>, vector<1x80xf32>
    %5 = vector.broadcast %4 : vector<1x80xf32> to vector<2x80xf32>
    %6 = arith.addf %3, %5 : vector<2x80xf32>
    %cst = arith.constant 0.000000e+00 : f32
    %7 = vector.broadcast %cst : f32 to vector<2x80xf32>
    %8 = arith.maximumf %6, %7 : vector<2x80xf32>
    %9 = arith.truncf %8 : vector<2x80xf32> to vector<2x80xbf16>
    %c0_5 = arith.constant 0 : index
    %c0_6 = arith.constant 0 : index
    %10 = vector.load %arg2[%c0_5, %c0_6] : memref<80x80xbf16, #tpu.memory_space<vmem>>, vector<80x80xbf16>
    %cst_7 = arith.constant dense<0.000000e+00> : vector<2x80xf32>
    %11 = tpu.matmul %9, %10, %cst_7 {dimension_numbers = #tpu.dot_dimension_numbers<[1], [0], [0], [1], [0, 0, 1, 1], [], []>} : vector<2x80xbf16>, vector<80x80xbf16>, vector<2x80xf32> -> vector<2x80xf32>
    %c0_8 = arith.constant 0 : index
    %c0_9 = arith.constant 0 : index
    %12 = vector.load %arg5[%c0_8, %c0_9] : memref<1x80xf32, #tpu.memory_space<vmem>>, vector<1x80xf32>
    %13 = vector.broadcast %12 : vector<1x80xf32> to vector<2x80xf32>
    %14 = arith.mulf %11, %13 : vector<2x80xf32>
    %c0_10 = arith.constant 0 : index
    %c0_11 = arith.constant 0 : index
    %15 = vector.load %arg6[%c0_10, %c0_11] : memref<1x80xf32, #tpu.memory_space<vmem>>, vector<1x80xf32>
    %16 = vector.broadcast %15 : vector<1x80xf32> to vector<2x80xf32>
    %17 = arith.addf %14, %16 : vector<2x80xf32>
    %cst_12 = arith.constant 0.000000e+00 : f32
    %18 = vector.broadcast %cst_12 : f32 to vector<2x80xf32>
    %19 = arith.maximumf %17, %18 : vector<2x80xf32>
    %c0_13 = arith.constant 0 : index
    %c0_14 = arith.constant 0 : index
    %20 = vector.load %arg7[%c0_13, %c0_14] : memref<2x80xf32, #tpu.memory_space<vmem>>, vector<2x80xf32>
    tpu.vector_store %arg7[%c0_13, %c0_14], %19 {strides = array<i32>} : memref<2x80xf32, #tpu.memory_space<vmem>>, vector<2x80xf32>,
    return
  }
  func.func @transform_0(%arg0: i32) -> (i32, i32) {
    %c0_i32 = arith.constant 0 : i32
    %c0_i32_0 = arith.constant 0 : i32
    return %arg0, %c0_i32 : i32, i32
  }
  func.func @transform_1(%arg0: i32) -> (i32, i32) {
    %c0_i32 = arith.constant 0 : i32
    %c0_i32_0 = arith.constant 0 : i32
    %c0_i32_1 = arith.constant 0 : i32
    return %c0_i32, %c0_i32_0 : i32, i32
  }
  func.func @transform_2(%arg0: i32) -> (i32, i32) {
    %c0_i32 = arith.constant 0 : i32
    %c0_i32_0 = arith.constant 0 : i32
    %c0_i32_1 = arith.constant 0 : i32
    return %c0_i32, %c0_i32_0 : i32, i32
  }
  func.func @transform_3(%arg0: i32) -> (i32, i32) {
    %c0_i32 = arith.constant 0 : i32
    %c0_i32_0 = arith.constant 0 : i32
    %c0_i32_1 = arith.constant 0 : i32
    return %c0_i32, %c0_i32_0 : i32, i32
  }
  func.func @transform_4(%arg0: i32) -> (i32, i32) {
    %c0_i32 = arith.constant 0 : i32
    %c0_i32_0 = arith.constant 0 : i32
    %c0_i32_1 = arith.constant 0 : i32
    return %c0_i32, %c0_i32_0 : i32, i32
  }
  func.func @transform_5(%arg0: i32) -> (i32, i32) {
    %c0_i32 = arith.constant 0 : i32
    %c0_i32_0 = arith.constant 0 : i32
    %c0_i32_1 = arith.constant 0 : i32
    return %c0_i32, %c0_i32_0 : i32, i32
  }
  func.func @transform_6(%arg0: i32) -> (i32, i32) {
    %c0_i32 = arith.constant 0 : i32
    %c0_i32_0 = arith.constant 0 : i32
    return %arg0, %c0_i32 : i32, i32
  }
}

module attributes {stable_mosaic.version = 11 : i64} {
  func.func @kernel(%arg0: i32, %arg1: memref<32x64xf32, #tpu.memory_space<vmem>>, %arg2: memref<64x64xbf16, #tpu.memory_space<vmem>>, %arg3: memref<1x64xf32, #tpu.memory_space<vmem>>, %arg4: memref<1x64xf32, #tpu.memory_space<vmem>>, %arg5: memref<1x64xf32, #tpu.memory_space<vmem>>, %arg6: memref<1x64xf32, #tpu.memory_space<vmem>>, %arg7: memref<32x64xf32, #tpu.memory_space<vmem>>) attributes {dimension_semantics = [#tpu.dimension_semantics<parallel>], iteration_bounds = array<i64: 1>, scalar_prefetch = 0 : i64, scratch_operands = 0 : i64, tpu.core_type = #tpu.core_type<tc>, window_params = [{transform_indices = @transform_0, window_bounds = array<i64: 32, 64>}, {pipeline_mode = #tpu.pipeline_mode<synchronous>, transform_indices = @transform_1, window_bounds = array<i64: 64, 64>}, {pipeline_mode = #tpu.pipeline_mode<synchronous>, transform_indices = @transform_2, window_bounds = array<i64: 1, 64>}, {pipeline_mode = #tpu.pipeline_mode<synchronous>, transform_indices = @transform_3, window_bounds = array<i64: 1, 64>}, {pipeline_mode = #tpu.pipeline_mode<synchronous>, transform_indices = @transform_4, window_bounds = array<i64: 1, 64>}, {pipeline_mode = #tpu.pipeline_mode<synchronous>, transform_indices = @transform_5, window_bounds = array<i64: 1, 64>}, {transform_indices = @transform_6, window_bounds = array<i64: 32, 64>}]} {
    %c0 = arith.constant 0 : index
    %c0_0 = arith.constant 0 : index
    %0 = vector.load %arg1[%c0, %c0_0] : memref<32x64xf32, #tpu.memory_space<vmem>>, vector<32x64xf32>
    %c0_1 = arith.constant 0 : index
    %c0_2 = arith.constant 0 : index
    %1 = vector.load %arg3[%c0_1, %c0_2] : memref<1x64xf32, #tpu.memory_space<vmem>>, vector<1x64xf32>
    %2 = vector.broadcast %1 : vector<1x64xf32> to vector<32x64xf32>
    %3 = arith.mulf %0, %2 : vector<32x64xf32>
    %c0_3 = arith.constant 0 : index
    %c0_4 = arith.constant 0 : index
    %4 = vector.load %arg4[%c0_3, %c0_4] : memref<1x64xf32, #tpu.memory_space<vmem>>, vector<1x64xf32>
    %5 = vector.broadcast %4 : vector<1x64xf32> to vector<32x64xf32>
    %6 = arith.addf %3, %5 : vector<32x64xf32>
    %cst = arith.constant 0.000000e+00 : f32
    %7 = vector.broadcast %cst : f32 to vector<32x64xf32>
    %8 = arith.maximumf %6, %7 : vector<32x64xf32>
    %9 = arith.truncf %8 : vector<32x64xf32> to vector<32x64xbf16>
    %c0_5 = arith.constant 0 : index
    %c0_6 = arith.constant 0 : index
    %10 = vector.load %arg2[%c0_5, %c0_6] : memref<64x64xbf16, #tpu.memory_space<vmem>>, vector<64x64xbf16>
    %cst_7 = arith.constant dense<0.000000e+00> : vector<32x64xf32>
    %11 = tpu.matmul %9, %10, %cst_7 {dimension_numbers = #tpu.dot_dimension_numbers<[1], [0], [0], [1], [0, 0, 1, 1], [], []>} : vector<32x64xbf16>, vector<64x64xbf16>, vector<32x64xf32> -> vector<32x64xf32>
    %c0_8 = arith.constant 0 : index
    %c0_9 = arith.constant 0 : index
    %12 = vector.load %arg5[%c0_8, %c0_9] : memref<1x64xf32, #tpu.memory_space<vmem>>, vector<1x64xf32>
    %13 = vector.broadcast %12 : vector<1x64xf32> to vector<32x64xf32>
    %14 = arith.mulf %11, %13 : vector<32x64xf32>
    %c0_10 = arith.constant 0 : index
    %c0_11 = arith.constant 0 : index
    %15 = vector.load %arg6[%c0_10, %c0_11] : memref<1x64xf32, #tpu.memory_space<vmem>>, vector<1x64xf32>
    %16 = vector.broadcast %15 : vector<1x64xf32> to vector<32x64xf32>
    %17 = arith.addf %14, %16 : vector<32x64xf32>
    %cst_12 = arith.constant 0.000000e+00 : f32
    %18 = vector.broadcast %cst_12 : f32 to vector<32x64xf32>
    %19 = arith.maximumf %17, %18 : vector<32x64xf32>
    %c0_13 = arith.constant 0 : index
    %c0_14 = arith.constant 0 : index
    %20 = vector.load %arg7[%c0_13, %c0_14] : memref<32x64xf32, #tpu.memory_space<vmem>>, vector<32x64xf32>
    tpu.vector_store %arg7[%c0_13, %c0_14], %19 {strides = array<i32>} : memref<32x64xf32, #tpu.memory_space<vmem>>, vector<32x64xf32>,
    return
  }
  func.func @transform_0(%arg0: i32) -> (i32, i32) {
    %c0_i32 = arith.constant 0 : i32
    %c0_i32_0 = arith.constant 0 : i32
    return %arg0, %c0_i32 : i32, i32
  }
  func.func @transform_1(%arg0: i32) -> (i32, i32) {
    %c0_i32 = arith.constant 0 : i32
    %c0_i32_0 = arith.constant 0 : i32
    %c0_i32_1 = arith.constant 0 : i32
    return %c0_i32, %c0_i32_0 : i32, i32
  }
  func.func @transform_2(%arg0: i32) -> (i32, i32) {
    %c0_i32 = arith.constant 0 : i32
    %c0_i32_0 = arith.constant 0 : i32
    %c0_i32_1 = arith.constant 0 : i32
    return %c0_i32, %c0_i32_0 : i32, i32
  }
  func.func @transform_3(%arg0: i32) -> (i32, i32) {
    %c0_i32 = arith.constant 0 : i32
    %c0_i32_0 = arith.constant 0 : i32
    %c0_i32_1 = arith.constant 0 : i32
    return %c0_i32, %c0_i32_0 : i32, i32
  }
  func.func @transform_4(%arg0: i32) -> (i32, i32) {
    %c0_i32 = arith.constant 0 : i32
    %c0_i32_0 = arith.constant 0 : i32
    %c0_i32_1 = arith.constant 0 : i32
    return %c0_i32, %c0_i32_0 : i32, i32
  }
  func.func @transform_5(%arg0: i32) -> (i32, i32) {
    %c0_i32 = arith.constant 0 : i32
    %c0_i32_0 = arith.constant 0 : i32
    %c0_i32_1 = arith.constant 0 : i32
    return %c0_i32, %c0_i32_0 : i32, i32
  }
  func.func @transform_6(%arg0: i32) -> (i32, i32) {
    %c0_i32 = arith.constant 0 : i32
    %c0_i32_0 = arith.constant 0 : i32
    return %arg0, %c0_i32 : i32, i32
  }
}

module attributes {stable_mosaic.version = 11 : i64} {
  func.func @kernel(%arg0: i32, %arg1: memref<50x512xf32, #tpu.memory_space<vmem>>, %arg2: memref<512x192xbf16, #tpu.memory_space<vmem>>, %arg3: memref<1x192xf32, #tpu.memory_space<vmem>>, %arg4: memref<50x192xf32, #tpu.memory_space<vmem>>) attributes {dimension_semantics = [#tpu.dimension_semantics<parallel>], iteration_bounds = array<i64: 1>, scalar_prefetch = 0 : i64, scratch_operands = 0 : i64, tpu.core_type = #tpu.core_type<tc>, window_params = [{transform_indices = @transform_0, window_bounds = array<i64: 50, 512>}, {pipeline_mode = #tpu.pipeline_mode<synchronous>, transform_indices = @transform_1, window_bounds = array<i64: 512, 192>}, {pipeline_mode = #tpu.pipeline_mode<synchronous>, transform_indices = @transform_2, window_bounds = array<i64: 1, 192>}, {transform_indices = @transform_3, window_bounds = array<i64: 50, 192>}]} {
    %c0 = arith.constant 0 : index
    %c0_0 = arith.constant 0 : index
    %0 = vector.load %arg1[%c0, %c0_0] : memref<50x512xf32, #tpu.memory_space<vmem>>, vector<50x512xf32>
    %1 = arith.truncf %0 : vector<50x512xf32> to vector<50x512xbf16>
    %c0_1 = arith.constant 0 : index
    %c0_2 = arith.constant 0 : index
    %2 = vector.load %arg2[%c0_1, %c0_2] : memref<512x192xbf16, #tpu.memory_space<vmem>>, vector<512x192xbf16>
    %cst = arith.constant dense<0.000000e+00> : vector<50x192xf32>
    %3 = tpu.matmul %1, %2, %cst {dimension_numbers = #tpu.dot_dimension_numbers<[1], [0], [0], [1], [0, 0, 1, 1], [], []>} : vector<50x512xbf16>, vector<512x192xbf16>, vector<50x192xf32> -> vector<50x192xf32>
    %c0_3 = arith.constant 0 : index
    %c0_4 = arith.constant 0 : index
    %4 = vector.load %arg3[%c0_3, %c0_4] : memref<1x192xf32, #tpu.memory_space<vmem>>, vector<1x192xf32>
    %5 = vector.broadcast %4 : vector<1x192xf32> to vector<50x192xf32>
    %6 = arith.addf %3, %5 : vector<50x192xf32>
    %c0_5 = arith.constant 0 : index
    %c0_6 = arith.constant 0 : index
    %7 = vector.load %arg4[%c0_5, %c0_6] : memref<50x192xf32, #tpu.memory_space<vmem>>, vector<50x192xf32>
    tpu.vector_store %arg4[%c0_5, %c0_6], %6 {strides = array<i32>} : memref<50x192xf32, #tpu.memory_space<vmem>>, vector<50x192xf32>,
    return
  }
  func.func @transform_0(%arg0: i32) -> (i32, i32) {
    %c0_i32 = arith.constant 0 : i32
    %c0_i32_0 = arith.constant 0 : i32
    return %arg0, %c0_i32 : i32, i32
  }
  func.func @transform_1(%arg0: i32) -> (i32, i32) {
    %c0_i32 = arith.constant 0 : i32
    %c0_i32_0 = arith.constant 0 : i32
    %c0_i32_1 = arith.constant 0 : i32
    return %c0_i32, %c0_i32_0 : i32, i32
  }
  func.func @transform_2(%arg0: i32) -> (i32, i32) {
    %c0_i32 = arith.constant 0 : i32
    %c0_i32_0 = arith.constant 0 : i32
    %c0_i32_1 = arith.constant 0 : i32
    return %c0_i32, %c0_i32_0 : i32, i32
  }
  func.func @transform_3(%arg0: i32) -> (i32, i32) {
    %c0_i32 = arith.constant 0 : i32
    %c0_i32_0 = arith.constant 0 : i32
    return %arg0, %c0_i32 : i32, i32
  }
}

module attributes {stable_mosaic.version = 11 : i64} {
  func.func @kernel(%arg0: i32, %arg1: memref<128x48xf32, #tpu.memory_space<vmem>>, %arg2: memref<48x48xbf16, #tpu.memory_space<vmem>>, %arg3: memref<1x48xf32, #tpu.memory_space<vmem>>, %arg4: memref<1x48xf32, #tpu.memory_space<vmem>>, %arg5: memref<1x48xf32, #tpu.memory_space<vmem>>, %arg6: memref<1x48xf32, #tpu.memory_space<vmem>>, %arg7: memref<128x48xf32, #tpu.memory_space<vmem>>) attributes {dimension_semantics = [#tpu.dimension_semantics<parallel>], iteration_bounds = array<i64: 1>, scalar_prefetch = 0 : i64, scratch_operands = 0 : i64, tpu.core_type = #tpu.core_type<tc>, window_params = [{transform_indices = @transform_0, window_bounds = array<i64: 128, 48>}, {pipeline_mode = #tpu.pipeline_mode<synchronous>, transform_indices = @transform_1, window_bounds = array<i64: 48, 48>}, {pipeline_mode = #tpu.pipeline_mode<synchronous>, transform_indices = @transform_2, window_bounds = array<i64: 1, 48>}, {pipeline_mode = #tpu.pipeline_mode<synchronous>, transform_indices = @transform_3, window_bounds = array<i64: 1, 48>}, {pipeline_mode = #tpu.pipeline_mode<synchronous>, transform_indices = @transform_4, window_bounds = array<i64: 1, 48>}, {pipeline_mode = #tpu.pipeline_mode<synchronous>, transform_indices = @transform_5, window_bounds = array<i64: 1, 48>}, {transform_indices = @transform_6, window_bounds = array<i64: 128, 48>}]} {
    %c0 = arith.constant 0 : index
    %c0_0 = arith.constant 0 : index
    %0 = vector.load %arg1[%c0, %c0_0] : memref<128x48xf32, #tpu.memory_space<vmem>>, vector<128x48xf32>
    %c0_1 = arith.constant 0 : index
    %c0_2 = arith.constant 0 : index
    %1 = vector.load %arg3[%c0_1, %c0_2] : memref<1x48xf32, #tpu.memory_space<vmem>>, vector<1x48xf32>
    %2 = vector.broadcast %1 : vector<1x48xf32> to vector<128x48xf32>
    %3 = arith.mulf %0, %2 : vector<128x48xf32>
    %c0_3 = arith.constant 0 : index
    %c0_4 = arith.constant 0 : index
    %4 = vector.load %arg4[%c0_3, %c0_4] : memref<1x48xf32, #tpu.memory_space<vmem>>, vector<1x48xf32>
    %5 = vector.broadcast %4 : vector<1x48xf32> to vector<128x48xf32>
    %6 = arith.addf %3, %5 : vector<128x48xf32>
    %cst = arith.constant 0.000000e+00 : f32
    %7 = vector.broadcast %cst : f32 to vector<128x48xf32>
    %8 = arith.maximumf %6, %7 : vector<128x48xf32>
    %9 = arith.truncf %8 : vector<128x48xf32> to vector<128x48xbf16>
    %c0_5 = arith.constant 0 : index
    %c0_6 = arith.constant 0 : index
    %10 = vector.load %arg2[%c0_5, %c0_6] : memref<48x48xbf16, #tpu.memory_space<vmem>>, vector<48x48xbf16>
    %cst_7 = arith.constant dense<0.000000e+00> : vector<128x48xf32>
    %11 = tpu.matmul %9, %10, %cst_7 {dimension_numbers = #tpu.dot_dimension_numbers<[1], [0], [0], [1], [0, 0, 1, 1], [], []>} : vector<128x48xbf16>, vector<48x48xbf16>, vector<128x48xf32> -> vector<128x48xf32>
    %c0_8 = arith.constant 0 : index
    %c0_9 = arith.constant 0 : index
    %12 = vector.load %arg5[%c0_8, %c0_9] : memref<1x48xf32, #tpu.memory_space<vmem>>, vector<1x48xf32>
    %13 = vector.broadcast %12 : vector<1x48xf32> to vector<128x48xf32>
    %14 = arith.mulf %11, %13 : vector<128x48xf32>
    %c0_10 = arith.constant 0 : index
    %c0_11 = arith.constant 0 : index
    %15 = vector.load %arg6[%c0_10, %c0_11] : memref<1x48xf32, #tpu.memory_space<vmem>>, vector<1x48xf32>
    %16 = vector.broadcast %15 : vector<1x48xf32> to vector<128x48xf32>
    %17 = arith.addf %14, %16 : vector<128x48xf32>
    %cst_12 = arith.constant 0.000000e+00 : f32
    %18 = vector.broadcast %cst_12 : f32 to vector<128x48xf32>
    %19 = arith.maximumf %17, %18 : vector<128x48xf32>
    %c0_13 = arith.constant 0 : index
    %c0_14 = arith.constant 0 : index
    %20 = vector.load %arg7[%c0_13, %c0_14] : memref<128x48xf32, #tpu.memory_space<vmem>>, vector<128x48xf32>
    tpu.vector_store %arg7[%c0_13, %c0_14], %19 {strides = array<i32>} : memref<128x48xf32, #tpu.memory_space<vmem>>, vector<128x48xf32>,
    return
  }
  func.func @transform_0(%arg0: i32) -> (i32, i32) {
    %c0_i32 = arith.constant 0 : i32
    %c0_i32_0 = arith.constant 0 : i32
    return %arg0, %c0_i32 : i32, i32
  }
  func.func @transform_1(%arg0: i32) -> (i32, i32) {
    %c0_i32 = arith.constant 0 : i32
    %c0_i32_0 = arith.constant 0 : i32
    %c0_i32_1 = arith.constant 0 : i32
    return %c0_i32, %c0_i32_0 : i32, i32
  }
  func.func @transform_2(%arg0: i32) -> (i32, i32) {
    %c0_i32 = arith.constant 0 : i32
    %c0_i32_0 = arith.constant 0 : i32
    %c0_i32_1 = arith.constant 0 : i32
    return %c0_i32, %c0_i32_0 : i32, i32
  }
  func.func @transform_3(%arg0: i32) -> (i32, i32) {
    %c0_i32 = arith.constant 0 : i32
    %c0_i32_0 = arith.constant 0 : i32
    %c0_i32_1 = arith.constant 0 : i32
    return %c0_i32, %c0_i32_0 : i32, i32
  }
  func.func @transform_4(%arg0: i32) -> (i32, i32) {
    %c0_i32 = arith.constant 0 : i32
    %c0_i32_0 = arith.constant 0 : i32
    %c0_i32_1 = arith.constant 0 : i32
    return %c0_i32, %c0_i32_0 : i32, i32
  }
  func.func @transform_5(%arg0: i32) -> (i32, i32) {
    %c0_i32 = arith.constant 0 : i32
    %c0_i32_0 = arith.constant 0 : i32
    %c0_i32_1 = arith.constant 0 : i32
    return %c0_i32, %c0_i32_0 : i32, i32
  }
  func.func @transform_6(%arg0: i32) -> (i32, i32) {
    %c0_i32 = arith.constant 0 : i32
    %c0_i32_0 = arith.constant 0 : i32
    return %arg0, %c0_i32 : i32, i32
  }
}

module attributes {stable_mosaic.version = 11 : i64} {
  func.func @kernel(%arg0: i32, %arg1: memref<162x384xf32, #tpu.memory_space<vmem>>, %arg2: memref<384x128xbf16, #tpu.memory_space<vmem>>, %arg3: memref<1x128xf32, #tpu.memory_space<vmem>>, %arg4: memref<162x128xf32, #tpu.memory_space<vmem>>) attributes {dimension_semantics = [#tpu.dimension_semantics<parallel>], iteration_bounds = array<i64: 1>, scalar_prefetch = 0 : i64, scratch_operands = 0 : i64, tpu.core_type = #tpu.core_type<tc>, window_params = [{transform_indices = @transform_0, window_bounds = array<i64: 162, 384>}, {pipeline_mode = #tpu.pipeline_mode<synchronous>, transform_indices = @transform_1, window_bounds = array<i64: 384, 128>}, {pipeline_mode = #tpu.pipeline_mode<synchronous>, transform_indices = @transform_2, window_bounds = array<i64: 1, 128>}, {transform_indices = @transform_3, window_bounds = array<i64: 162, 128>}]} {
    %c0 = arith.constant 0 : index
    %c0_0 = arith.constant 0 : index
    %0 = vector.load %arg1[%c0, %c0_0] : memref<162x384xf32, #tpu.memory_space<vmem>>, vector<162x384xf32>
    %1 = arith.truncf %0 : vector<162x384xf32> to vector<162x384xbf16>
    %c0_1 = arith.constant 0 : index
    %c0_2 = arith.constant 0 : index
    %2 = vector.load %arg2[%c0_1, %c0_2] : memref<384x128xbf16, #tpu.memory_space<vmem>>, vector<384x128xbf16>
    %cst = arith.constant dense<0.000000e+00> : vector<162x128xf32>
    %3 = tpu.matmul %1, %2, %cst {dimension_numbers = #tpu.dot_dimension_numbers<[1], [0], [0], [1], [0, 0, 1, 1], [], []>} : vector<162x384xbf16>, vector<384x128xbf16>, vector<162x128xf32> -> vector<162x128xf32>
    %c0_3 = arith.constant 0 : index
    %c0_4 = arith.constant 0 : index
    %4 = vector.load %arg3[%c0_3, %c0_4] : memref<1x128xf32, #tpu.memory_space<vmem>>, vector<1x128xf32>
    %5 = vector.broadcast %4 : vector<1x128xf32> to vector<162x128xf32>
    %6 = arith.addf %3, %5 : vector<162x128xf32>
    %c0_5 = arith.constant 0 : index
    %c0_6 = arith.constant 0 : index
    %7 = vector.load %arg4[%c0_5, %c0_6] : memref<162x128xf32, #tpu.memory_space<vmem>>, vector<162x128xf32>
    tpu.vector_store %arg4[%c0_5, %c0_6], %6 {strides = array<i32>} : memref<162x128xf32, #tpu.memory_space<vmem>>, vector<162x128xf32>,
    return
  }
  func.func @transform_0(%arg0: i32) -> (i32, i32) {
    %c0_i32 = arith.constant 0 : i32
    %c0_i32_0 = arith.constant 0 : i32
    return %arg0, %c0_i32 : i32, i32
  }
  func.func @transform_1(%arg0: i32) -> (i32, i32) {
    %c0_i32 = arith.constant 0 : i32
    %c0_i32_0 = arith.constant 0 : i32
    %c0_i32_1 = arith.constant 0 : i32
    return %c0_i32, %c0_i32_0 : i32, i32
  }
  func.func @transform_2(%arg0: i32) -> (i32, i32) {
    %c0_i32 = arith.constant 0 : i32
    %c0_i32_0 = arith.constant 0 : i32
    %c0_i32_1 = arith.constant 0 : i32
    return %c0_i32, %c0_i32_0 : i32, i32
  }
  func.func @transform_3(%arg0: i32) -> (i32, i32) {
    %c0_i32 = arith.constant 0 : i32
    %c0_i32_0 = arith.constant 0 : i32
    return %arg0, %c0_i32 : i32, i32
  }
}

module attributes {stable_mosaic.version = 11 : i64} {
  func.func @kernel(%arg0: i32, %arg1: memref<256x32xf32, #tpu.memory_space<vmem>>, %arg2: memref<32x32xbf16, #tpu.memory_space<vmem>>, %arg3: memref<1x32xf32, #tpu.memory_space<vmem>>, %arg4: memref<1x32xf32, #tpu.memory_space<vmem>>, %arg5: memref<1x32xf32, #tpu.memory_space<vmem>>, %arg6: memref<1x32xf32, #tpu.memory_space<vmem>>, %arg7: memref<256x32xf32, #tpu.memory_space<vmem>>) attributes {dimension_semantics = [#tpu.dimension_semantics<parallel>], iteration_bounds = array<i64: 2>, scalar_prefetch = 0 : i64, scratch_operands = 0 : i64, tpu.core_type = #tpu.core_type<tc>, window_params = [{transform_indices = @transform_0, window_bounds = array<i64: 256, 32>}, {pipeline_mode = #tpu.pipeline_mode<synchronous>, transform_indices = @transform_1, window_bounds = array<i64: 32, 32>}, {pipeline_mode = #tpu.pipeline_mode<synchronous>, transform_indices = @transform_2, window_bounds = array<i64: 1, 32>}, {pipeline_mode = #tpu.pipeline_mode<synchronous>, transform_indices = @transform_3, window_bounds = array<i64: 1, 32>}, {pipeline_mode = #tpu.pipeline_mode<synchronous>, transform_indices = @transform_4, window_bounds = array<i64: 1, 32>}, {pipeline_mode = #tpu.pipeline_mode<synchronous>, transform_indices = @transform_5, window_bounds = array<i64: 1, 32>}, {transform_indices = @transform_6, window_bounds = array<i64: 256, 32>}]} {
    %c0 = arith.constant 0 : index
    %c0_0 = arith.constant 0 : index
    %0 = vector.load %arg1[%c0, %c0_0] : memref<256x32xf32, #tpu.memory_space<vmem>>, vector<256x32xf32>
    %c0_1 = arith.constant 0 : index
    %c0_2 = arith.constant 0 : index
    %1 = vector.load %arg3[%c0_1, %c0_2] : memref<1x32xf32, #tpu.memory_space<vmem>>, vector<1x32xf32>
    %2 = vector.broadcast %1 : vector<1x32xf32> to vector<256x32xf32>
    %3 = arith.mulf %0, %2 : vector<256x32xf32>
    %c0_3 = arith.constant 0 : index
    %c0_4 = arith.constant 0 : index
    %4 = vector.load %arg4[%c0_3, %c0_4] : memref<1x32xf32, #tpu.memory_space<vmem>>, vector<1x32xf32>
    %5 = vector.broadcast %4 : vector<1x32xf32> to vector<256x32xf32>
    %6 = arith.addf %3, %5 : vector<256x32xf32>
    %cst = arith.constant 0.000000e+00 : f32
    %7 = vector.broadcast %cst : f32 to vector<256x32xf32>
    %8 = arith.maximumf %6, %7 : vector<256x32xf32>
    %9 = arith.truncf %8 : vector<256x32xf32> to vector<256x32xbf16>
    %c0_5 = arith.constant 0 : index
    %c0_6 = arith.constant 0 : index
    %10 = vector.load %arg2[%c0_5, %c0_6] : memref<32x32xbf16, #tpu.memory_space<vmem>>, vector<32x32xbf16>
    %cst_7 = arith.constant dense<0.000000e+00> : vector<256x32xf32>
    %11 = tpu.matmul %9, %10, %cst_7 {dimension_numbers = #tpu.dot_dimension_numbers<[1], [0], [0], [1], [0, 0, 1, 1], [], []>} : vector<256x32xbf16>, vector<32x32xbf16>, vector<256x32xf32> -> vector<256x32xf32>
    %c0_8 = arith.constant 0 : index
    %c0_9 = arith.constant 0 : index
    %12 = vector.load %arg5[%c0_8, %c0_9] : memref<1x32xf32, #tpu.memory_space<vmem>>, vector<1x32xf32>
    %13 = vector.broadcast %12 : vector<1x32xf32> to vector<256x32xf32>
    %14 = arith.mulf %11, %13 : vector<256x32xf32>
    %c0_10 = arith.constant 0 : index
    %c0_11 = arith.constant 0 : index
    %15 = vector.load %arg6[%c0_10, %c0_11] : memref<1x32xf32, #tpu.memory_space<vmem>>, vector<1x32xf32>
    %16 = vector.broadcast %15 : vector<1x32xf32> to vector<256x32xf32>
    %17 = arith.addf %14, %16 : vector<256x32xf32>
    %cst_12 = arith.constant 0.000000e+00 : f32
    %18 = vector.broadcast %cst_12 : f32 to vector<256x32xf32>
    %19 = arith.maximumf %17, %18 : vector<256x32xf32>
    %c0_13 = arith.constant 0 : index
    %c0_14 = arith.constant 0 : index
    %20 = vector.load %arg7[%c0_13, %c0_14] : memref<256x32xf32, #tpu.memory_space<vmem>>, vector<256x32xf32>
    tpu.vector_store %arg7[%c0_13, %c0_14], %19 {strides = array<i32>} : memref<256x32xf32, #tpu.memory_space<vmem>>, vector<256x32xf32>,
    return
  }
  func.func @transform_0(%arg0: i32) -> (i32, i32) {
    %c0_i32 = arith.constant 0 : i32
    %c0_i32_0 = arith.constant 0 : i32
    return %arg0, %c0_i32 : i32, i32
  }
  func.func @transform_1(%arg0: i32) -> (i32, i32) {
    %c0_i32 = arith.constant 0 : i32
    %c0_i32_0 = arith.constant 0 : i32
    %c0_i32_1 = arith.constant 0 : i32
    return %c0_i32, %c0_i32_0 : i32, i32
  }
  func.func @transform_2(%arg0: i32) -> (i32, i32) {
    %c0_i32 = arith.constant 0 : i32
    %c0_i32_0 = arith.constant 0 : i32
    %c0_i32_1 = arith.constant 0 : i32
    return %c0_i32, %c0_i32_0 : i32, i32
  }
  func.func @transform_3(%arg0: i32) -> (i32, i32) {
    %c0_i32 = arith.constant 0 : i32
    %c0_i32_0 = arith.constant 0 : i32
    %c0_i32_1 = arith.constant 0 : i32
    return %c0_i32, %c0_i32_0 : i32, i32
  }
  func.func @transform_4(%arg0: i32) -> (i32, i32) {
    %c0_i32 = arith.constant 0 : i32
    %c0_i32_0 = arith.constant 0 : i32
    %c0_i32_1 = arith.constant 0 : i32
    return %c0_i32, %c0_i32_0 : i32, i32
  }
  func.func @transform_5(%arg0: i32) -> (i32, i32) {
    %c0_i32 = arith.constant 0 : i32
    %c0_i32_0 = arith.constant 0 : i32
    %c0_i32_1 = arith.constant 0 : i32
    return %c0_i32, %c0_i32_0 : i32, i32
  }
  func.func @transform_6(%arg0: i32) -> (i32, i32) {
    %c0_i32 = arith.constant 0 : i32
    %c0_i32_0 = arith.constant 0 : i32
    return %arg0, %c0_i32 : i32, i32
  }
}

module attributes {stable_mosaic.version = 11 : i64} {
  func.func @kernel(%arg0: i32, %arg1: memref<578x256xf32, #tpu.memory_space<vmem>>, %arg2: memref<256x64xbf16, #tpu.memory_space<vmem>>, %arg3: memref<1x64xf32, #tpu.memory_space<vmem>>, %arg4: memref<578x64xf32, #tpu.memory_space<vmem>>) attributes {dimension_semantics = [#tpu.dimension_semantics<parallel>], iteration_bounds = array<i64: 1>, scalar_prefetch = 0 : i64, scratch_operands = 0 : i64, tpu.core_type = #tpu.core_type<tc>, window_params = [{transform_indices = @transform_0, window_bounds = array<i64: 578, 256>}, {pipeline_mode = #tpu.pipeline_mode<synchronous>, transform_indices = @transform_1, window_bounds = array<i64: 256, 64>}, {pipeline_mode = #tpu.pipeline_mode<synchronous>, transform_indices = @transform_2, window_bounds = array<i64: 1, 64>}, {transform_indices = @transform_3, window_bounds = array<i64: 578, 64>}]} {
    %c0 = arith.constant 0 : index
    %c0_0 = arith.constant 0 : index
    %0 = vector.load %arg1[%c0, %c0_0] : memref<578x256xf32, #tpu.memory_space<vmem>>, vector<578x256xf32>
    %1 = arith.truncf %0 : vector<578x256xf32> to vector<578x256xbf16>
    %c0_1 = arith.constant 0 : index
    %c0_2 = arith.constant 0 : index
    %2 = vector.load %arg2[%c0_1, %c0_2] : memref<256x64xbf16, #tpu.memory_space<vmem>>, vector<256x64xbf16>
    %cst = arith.constant dense<0.000000e+00> : vector<578x64xf32>
    %3 = tpu.matmul %1, %2, %cst {dimension_numbers = #tpu.dot_dimension_numbers<[1], [0], [0], [1], [0, 0, 1, 1], [], []>} : vector<578x256xbf16>, vector<256x64xbf16>, vector<578x64xf32> -> vector<578x64xf32>
    %c0_3 = arith.constant 0 : index
    %c0_4 = arith.constant 0 : index
    %4 = vector.load %arg3[%c0_3, %c0_4] : memref<1x64xf32, #tpu.memory_space<vmem>>, vector<1x64xf32>
    %5 = vector.broadcast %4 : vector<1x64xf32> to vector<578x64xf32>
    %6 = arith.addf %3, %5 : vector<578x64xf32>
    %c0_5 = arith.constant 0 : index
    %c0_6 = arith.constant 0 : index
    %7 = vector.load %arg4[%c0_5, %c0_6] : memref<578x64xf32, #tpu.memory_space<vmem>>, vector<578x64xf32>
    tpu.vector_store %arg4[%c0_5, %c0_6], %6 {strides = array<i32>} : memref<578x64xf32, #tpu.memory_space<vmem>>, vector<578x64xf32>,
    return
  }
  func.func @transform_0(%arg0: i32) -> (i32, i32) {
    %c0_i32 = arith.constant 0 : i32
    %c0_i32_0 = arith.constant 0 : i32
    return %arg0, %c0_i32 : i32, i32
  }
  func.func @transform_1(%arg0: i32) -> (i32, i32) {
    %c0_i32 = arith.constant 0 : i32
    %c0_i32_0 = arith.constant 0 : i32
    %c0_i32_1 = arith.constant 0 : i32
    return %c0_i32, %c0_i32_0 : i32, i32
  }
  func.func @transform_2(%arg0: i32) -> (i32, i32) {
    %c0_i32 = arith.constant 0 : i32
    %c0_i32_0 = arith.constant 0 : i32
    %c0_i32_1 = arith.constant 0 : i32
    return %c0_i32, %c0_i32_0 : i32, i32
  }
  func.func @transform_3(%arg0: i32) -> (i32, i32) {
    %c0_i32 = arith.constant 0 : i32
    %c0_i32_0 = arith.constant 0 : i32
    return %arg0, %c0_i32 : i32, i32
  }
}

module attributes {stable_mosaic.version = 11 : i64} {
  func.func @kernel(%arg0: i32, %arg1: memref<256x64xf32, #tpu.memory_space<vmem>>, %arg2: memref<64x12xbf16, #tpu.memory_space<vmem>>, %arg3: memref<1x12xf32, #tpu.memory_space<vmem>>, %arg4: memref<256x12xf32, #tpu.memory_space<vmem>>) attributes {dimension_semantics = [#tpu.dimension_semantics<parallel>], iteration_bounds = array<i64: 8>, scalar_prefetch = 0 : i64, scratch_operands = 0 : i64, tpu.core_type = #tpu.core_type<tc>, window_params = [{transform_indices = @transform_0, window_bounds = array<i64: 256, 64>}, {pipeline_mode = #tpu.pipeline_mode<synchronous>, transform_indices = @transform_1, window_bounds = array<i64: 64, 12>}, {pipeline_mode = #tpu.pipeline_mode<synchronous>, transform_indices = @transform_2, window_bounds = array<i64: 1, 12>}, {transform_indices = @transform_3, window_bounds = array<i64: 256, 12>}]} {
    %c0 = arith.constant 0 : index
    %c0_0 = arith.constant 0 : index
    %0 = vector.load %arg1[%c0, %c0_0] : memref<256x64xf32, #tpu.memory_space<vmem>>, vector<256x64xf32>
    %1 = arith.truncf %0 : vector<256x64xf32> to vector<256x64xbf16>
    %c0_1 = arith.constant 0 : index
    %c0_2 = arith.constant 0 : index
    %2 = vector.load %arg2[%c0_1, %c0_2] : memref<64x12xbf16, #tpu.memory_space<vmem>>, vector<64x12xbf16>
    %cst = arith.constant dense<0.000000e+00> : vector<256x12xf32>
    %3 = tpu.matmul %1, %2, %cst {dimension_numbers = #tpu.dot_dimension_numbers<[1], [0], [0], [1], [0, 0, 1, 1], [], []>} : vector<256x64xbf16>, vector<64x12xbf16>, vector<256x12xf32> -> vector<256x12xf32>
    %c0_3 = arith.constant 0 : index
    %c0_4 = arith.constant 0 : index
    %4 = vector.load %arg3[%c0_3, %c0_4] : memref<1x12xf32, #tpu.memory_space<vmem>>, vector<1x12xf32>
    %5 = vector.broadcast %4 : vector<1x12xf32> to vector<256x12xf32>
    %6 = arith.addf %3, %5 : vector<256x12xf32>
    %c0_5 = arith.constant 0 : index
    %c0_6 = arith.constant 0 : index
    %7 = vector.load %arg4[%c0_5, %c0_6] : memref<256x12xf32, #tpu.memory_space<vmem>>, vector<256x12xf32>
    tpu.vector_store %arg4[%c0_5, %c0_6], %6 {strides = array<i32>} : memref<256x12xf32, #tpu.memory_space<vmem>>, vector<256x12xf32>,
    return
  }
  func.func @transform_0(%arg0: i32) -> (i32, i32) {
    %c0_i32 = arith.constant 0 : i32
    %c0_i32_0 = arith.constant 0 : i32
    return %arg0, %c0_i32 : i32, i32
  }
  func.func @transform_1(%arg0: i32) -> (i32, i32) {
    %c0_i32 = arith.constant 0 : i32
    %c0_i32_0 = arith.constant 0 : i32
    %c0_i32_1 = arith.constant 0 : i32
    return %c0_i32, %c0_i32_0 : i32, i32
  }
  func.func @transform_2(%arg0: i32) -> (i32, i32) {
    %c0_i32 = arith.constant 0 : i32
    %c0_i32_0 = arith.constant 0 : i32
    %c0_i32_1 = arith.constant 0 : i32
    return %c0_i32, %c0_i32_0 : i32, i32
  }
  func.func @transform_3(%arg0: i32) -> (i32, i32) {
    %c0_i32 = arith.constant 0 : i32
    %c0_i32_0 = arith.constant 0 : i32
    return %arg0, %c0_i32 : i32, i32
  }
}

</mosaic_0001>

<llo_original>
// kernel: celeba_img_decoder_forward.11
$region0: #{celeba_img_decoder_forward.11}
  #allocation0 [shape = 'u32[]', space=smem, size = 0x4, offset = 0x4, fixed_abs, tag = 'smem constant byte address 0x4 - core index']
  #allocation1 [shape = 'u32[144,128]{1,0:T(1,128)}', space=vmem, size = 0x12000, scoped, tag = 'internal scratch']
  %s0 = inlined_call_operand.vmem [shape: f32[2,80], index: 0, kind: input, shape index: {}]
  %s1 = inlined_call_operand.hbm [shape: bf16[80,80], index: 1, kind: input, shape index: {}]
  %s2 = inlined_call_operand.hbm [shape: f32[1,80], index: 2, kind: input, shape index: {}]
  %s3 = inlined_call_operand.hbm [shape: f32[1,80], index: 3, kind: input, shape index: {}]
  %s4 = inlined_call_operand.hbm [shape: f32[1,80], index: 4, kind: input, shape index: {}]
  %s5 = inlined_call_operand.hbm [shape: f32[1,80], index: 5, kind: input, shape index: {}]
  %s6 = inlined_call_operand.vmem [shape: f32[2,80], index: 6, kind: output, shape index: {}]
  %s7 = sld [smem:[#allocation0]]
  $region54: #{celeba_img_decoder_forward.11} parent=0
    _
  %s9 = ssub.s32 1, %s7
  %s10 = scalar_select 0, %s9, %s7
  $region1: #{celeba_img_decoder_forward.11} parent=0
    #allocation2 [shape = 'u8[20480]{0}', space=vmem, size = 0x5000, scoped, tag = 'input window, operand 1, single buffered']
    #allocation3 [shape = 's32[1]{0}', space=sflag, size = 0x4, scoped, tag = 'scoped memory for celeba_img_decoder_forward.11']
    #allocation4 [shape = 'u8[512]{0}', space=vmem, size = 0x400, scoped, tag = 'input window, operand 2, single buffered']
    #allocation5 [shape = 's32[1]{0}', space=sflag, size = 0x4, scoped, tag = 'scoped memory for celeba_img_decoder_forward.11']
    #allocation6 [shape = 'u8[512]{0}', space=vmem, size = 0x400, scoped, tag = 'input window, operand 3, single buffered']
    #allocation7 [shape = 'u8[512]{0}', space=vmem, size = 0x400, scoped, tag = 'input window, operand 4, single buffered']
    #allocation8 [shape = 's32[1]{0}', space=sflag, size = 0x4, scoped, tag = 'scoped memory for celeba_img_decoder_forward.11']
    #allocation9 [shape = 'u8[512]{0}', space=vmem, size = 0x400, scoped, tag = 'input window, operand 5, single buffered']
    %11 = vsyncpa [#allocation3], 0
    %12 = vsyncpa [#allocation5], 0
    %13 = vsyncpa [#allocation8], 0
    // Predicated region
    $region2: #{celeba_img_decoder_forward.11} parent=1 // pred_check
      _
    $region3: #{celeba_img_decoder_forward.11} parent=1 // pred_check_branch
      %15 = sbr.rel (0) target = $region5
    $region4: #{celeba_img_decoder_forward.11} parent=1 // pred_region
      _
    $region5: #{celeba_img_decoder_forward.11} parent=1 // pred_fallthru
      _
    // Predicated region
    $region6: #{celeba_img_decoder_forward.11} parent=1 // pred_check
      _
    $region7: #{celeba_img_decoder_forward.11} parent=1 // pred_check_branch
      %17 = sbr.rel (0) target = $region9
    $region8: #{celeba_img_decoder_forward.11} parent=1 // pred_region
      %s19 = ssub.s32 640, 640
      %20 = vsyncadd [#allocation3], %s19
      %s21 = sshll.u32 [#allocation2], 4
      %s22 = int_to_ptr.vmem [resolvable:$true] %s21
      %27 = dma.hbm_to_vmem [thread:$0]  %s1, 640, %s22, [#allocation3], 64, 64, 4
    $region9: #{celeba_img_decoder_forward.11} parent=1 // pred_fallthru
      _
    // Predicated region
    $region10: #{celeba_img_decoder_forward.11} parent=1 // pred_check
      _
    $region11: #{celeba_img_decoder_forward.11} parent=1 // pred_check_branch
      %29 = sbr.rel (0) target = $region13
    $region12: #{celeba_img_decoder_forward.11} parent=1 // pred_region
      %s31 = ssub.s32 16, 16
      %32 = vsyncadd [#allocation5], %s31
      %s34 = sshll.u32 [#allocation4], 4
      %s35 = int_to_ptr.vmem [resolvable:$true] %s34
      %37 = dma.hbm_to_vmem [thread:$0]  %s2, 16, %s35, [#allocation5]
    $region13: #{celeba_img_decoder_forward.11} parent=1 // pred_fallthru
      _
    // Predicated region
    $region14: #{celeba_img_decoder_forward.11} parent=1 // pred_check
      _
    $region15: #{celeba_img_decoder_forward.11} parent=1 // pred_check_branch
      %39 = sbr.rel (0) target = $region17
    $region16: #{celeba_img_decoder_forward.11} parent=1 // pred_region
      %s41 = ssub.s32 16, 16
      %42 = vsyncadd [#allocation5], %s41
      %s44 = sshll.u32 [#allocation6], 4
      %s45 = int_to_ptr.vmem [resolvable:$true] %s44
      %47 = dma.hbm_to_vmem [thread:$0]  %s3, 16, %s45, [#allocation5]
    $region17: #{celeba_img_decoder_forward.11} parent=1 // pred_fallthru
      _
    // Predicated region
    $region18: #{celeba_img_decoder_forward.11} parent=1 // pred_check
      _
    $region19: #{celeba_img_decoder_forward.11} parent=1 // pred_check_branch
      %49 = sbr.rel (0) target = $region21
    $region20: #{celeba_img_decoder_forward.11} parent=1 // pred_region
      %s51 = ssub.s32 16, 16
      %52 = vsyncadd [#allocation8], %s51
      %s54 = sshll.u32 [#allocation7], 4
      %s55 = int_to_ptr.vmem [resolvable:$true] %s54
      %57 = dma.hbm_to_vmem [thread:$0]  %s4, 16, %s55, [#allocation8]
    $region21: #{celeba_img_decoder_forward.11} parent=1 // pred_fallthru
      _
    // Predicated region
    $region22: #{celeba_img_decoder_forward.11} parent=1 // pred_check
      _
    $region23: #{celeba_img_decoder_forward.11} parent=1 // pred_check_branch
      %59 = sbr.rel (0) target = $region25
    $region24: #{celeba_img_decoder_forward.11} parent=1 // pred_region
      %s61 = ssub.s32 16, 16
      %62 = vsyncadd [#allocation8], %s61
      %s64 = sshll.u32 [#allocation9], 4
      %s65 = int_to_ptr.vmem [resolvable:$true] %s64
      %67 = dma.hbm_to_vmem [thread:$0]  %s5, 16, %s65, [#allocation8]
    $region25: #{celeba_img_decoder_forward.11} parent=1 // pred_fallthru
      _
    // Predicated region
    $region26: #{celeba_img_decoder_forward.11} parent=1 // pred_check
      _
    $region27: #{celeba_img_decoder_forward.11} parent=1 // pred_check_branch
      %69 = sbr.rel (0) target = $region29
    $region28: #{celeba_img_decoder_forward.11} parent=1 // pred_region
      %70 = dma.done [#allocation3], 640
    $region29: #{celeba_img_decoder_forward.11} parent=1 // pred_fallthru
      _
    // Predicated region
    $region30: #{celeba_img_decoder_forward.11} parent=1 // pred_check
      _
    $region31: #{celeba_img_decoder_forward.11} parent=1 // pred_check_branch
      %72 = sbr.rel (0) target = $region33
    $region32: #{celeba_img_decoder_forward.11} parent=1 // pred_region
      %73 = dma.done [#allocation5], 16
    $region33: #{celeba_img_decoder_forward.11} parent=1 // pred_fallthru
      _
    // Predicated region
    $region34: #{celeba_img_decoder_forward.11} parent=1 // pred_check
      _
    $region35: #{celeba_img_decoder_forward.11} parent=1 // pred_check_branch
      %75 = sbr.rel (0) target = $region37
    $region36: #{celeba_img_decoder_forward.11} parent=1 // pred_region
      %76 = dma.done [#allocation5], 16
    $region37: #{celeba_img_decoder_forward.11} parent=1 // pred_fallthru
      _
    // Predicated region
    $region38: #{celeba_img_decoder_forward.11} parent=1 // pred_check
      _
    $region39: #{celeba_img_decoder_forward.11} parent=1 // pred_check_branch
      %78 = sbr.rel (0) target = $region41
    $region40: #{celeba_img_decoder_forward.11} parent=1 // pred_region
      %79 = dma.done [#allocation8], 16
    $region41: #{celeba_img_decoder_forward.11} parent=1 // pred_fallthru
      _
    // Predicated region
    $region42: #{celeba_img_decoder_forward.11} parent=1 // pred_check
      _
    $region43: #{celeba_img_decoder_forward.11} parent=1 // pred_check_branch
      %81 = sbr.rel (0) target = $region45
    $region44: #{celeba_img_decoder_forward.11} parent=1 // pred_region
      %82 = dma.done [#allocation8], 16
    $region45: #{celeba_img_decoder_forward.11} parent=1 // pred_fallthru
      _
    %v84 = vld [vmem:[%s0] sm:$0x3]
    %v85 = vld [vmem:[#allocation4] sm:$0x1]
    %v87 = vlaneseq
    %v88 = vshrl.u32 %v87, 7
    %v89 = vsub.s32 0, %v88
    %v90 = vrot.slane %v85, %v89
    %v92 = vmul.f32 %v84, %v90
    %v93 = vld [vmem:[#allocation6] sm:$0x1]
    %v95 = vlaneseq
    %v96 = vshrl.u32 %v95, 7
    %v97 = vsub.s32 0, %v96
    %v98 = vrot.slane %v93, %v97
    %v100 = vadd.f32 %v92, %v98
    %v101 = vmax.f32 %v100, 0.0
    %v102 = vpack.c.bf16 %v101, %v101
    %v103 = vld [vmem:[#allocation2] sm:$0xf]
    %v104 = vld [vmem:[#allocation2 + $0x4] sm:$0xf]
    %v105 = vld [vmem:[#allocation2 + $0x8] sm:$0xf]
    %v106 = vld [vmem:[#allocation2 + $0xc] sm:$0xf]
    %v107 = vld [vmem:[#allocation2 + $0x10] sm:$0xf]
    %v108 = vld [vmem:[#allocation2 + $0x14] sm:$0xf]
    %v109 = vld [vmem:[#allocation2 + $0x18] sm:$0xf]
    %v110 = vld [vmem:[#allocation2 + $0x1c] sm:$0xf]
    %v111 = vld [vmem:[#allocation2 + $0x20] sm:$0xf]
    %v112 = vld [vmem:[#allocation2 + $0x24] sm:$0xf]
    %v123 = vunpack.c.l.b16 %v103
    %v124 = vunpack.c.l.b16 %v104
    %v125 = vunpack.c.l.b16 %v105
    %v126 = vunpack.c.l.b16 %v106
    %v127 = vunpack.c.l.b16 %v107
    %v128 = vunpack.c.l.b16 %v108
    %v129 = vunpack.c.l.b16 %v109
    %v130 = vunpack.c.l.b16 %v110
    %v131 = vunpack.c.l.b16 %v111
    %v132 = vunpack.c.l.b16 %v112
    %v133 = vpack.c.b16 %v124, %v123
    %v134 = vpack.c.b16 %v126, %v125
    %v135 = vpack.c.b16 %v128, %v127
    %v136 = vpack.c.b16 %v130, %v129
    %v137 = vpack.c.b16 %v132, %v131
    %vm143 = vcmask 654336
    %v145 = vsel %vm143, %v102, 0
    %147 = vmatprep.subr.bf16.mxu0 0
    %148 = vmatpush1.bf16.msra.mxu0 %v133
    %149 = vmatprep.subr.bf16.mxu0 0
    %150 = vmatpush1.bf16.msra.mxu0 %v134
    %151 = vmatprep.subr.bf16.mxu0 0
    %152 = vmatpush1.bf16.msra.mxu0 %v135
    %153 = vmatprep.subr.bf16.mxu0 0
    %154 = vmatpush1.bf16.msra.mxu0 %v136
    %155 = vmatprep.subr.bf16.mxu0 0
    %156 = vmatpush1.bf16.msra.mxu0 %v137
    %157 = vmatprep.subr.bf16.mxu0 0
    %158 = vmatpush1.bf16.msra.mxu0 0
    %159 = vmatprep.subr.bf16.mxu0 0
    %160 = vmatpush1.bf16.msra.mxu0 0
    %161 = vmatprep.subr.bf16.mxu0 0
    %162 = vmatpush1.bf16.msra.mxu0 0
    %163 = vmatprep.subr.bf16.mxu0 0
    %164 = vmatpush1.bf16.msra.mxu0 0
    %165 = vmatprep.subr.bf16.mxu0 0
    %166 = vmatpush1.bf16.msra.mxu0 0
    %167 = vmatprep.subr.bf16.mxu0 0
    %168 = vmatpush1.bf16.msra.mxu0 0
    %169 = vmatprep.subr.bf16.mxu0 0
    %170 = vmatpush1.bf16.msra.mxu0 0
    %171 = vmatprep.subr.bf16.mxu0 0
    %172 = vmatpush1.bf16.msra.mxu0 0
    %173 = vmatprep.subr.bf16.mxu0 0
    %174 = vmatpush1.bf16.msra.mxu0 0
    %175 = vmatprep.subr.bf16.mxu0 0
    %176 = vmatpush1.bf16.msra.mxu0 0
    %177 = vmatprep.subr.bf16.mxu0 0
    %178 = vmatpush1.bf16.msra.mxu0 0
    %179 = vmatprep.mubr.bf16.mxu0 0
    %180 = vmatmul.mubr.bf16.gmra.mrb[0].mxu0 %v145
    %v181 = vpop.f32.mrb[0].mxu0
    %v182 = vadd.f32 0.0, %v181
    %v183 = vpop.f32.mrb[0].mxu0
    %v184 = vpop.f32.mrb[0].mxu0
    %v185 = vpop.f32.mrb[0].mxu0
    %186 = vdwg.mxu0
    %v187 = vld [vmem:[#allocation7] sm:$0x1]
    %v189 = vlaneseq
    %v190 = vshrl.u32 %v189, 7
    %v191 = vsub.s32 0, %v190
    %v192 = vrot.slane %v187, %v191
    %v194 = vmul.f32 %v182, %v192
    %v195 = vld [vmem:[#allocation9] sm:$0x1]
    %v197 = vlaneseq
    %v198 = vshrl.u32 %v197, 7
    %v199 = vsub.s32 0, %v198
    %v200 = vrot.slane %v195, %v199
    %v202 = vadd.f32 %v194, %v200
    %v203 = vmax.f32 %v202, 0.0
    %vm204 = vcmask 648192
    %205 = vst.msk [vmem:[%s6] sm:$0x3] %vm204, %v203
    // Predicated region
    $region46: #{celeba_img_decoder_forward.11} parent=1 // pred_check
      _
    $region47: #{celeba_img_decoder_forward.11} parent=1 // pred_check_branch
      %207 = sbr.rel (0) target = $region49
    $region48: #{celeba_img_decoder_forward.11} parent=1 // pred_region
      _
    $region49: #{celeba_img_decoder_forward.11} parent=1 // pred_fallthru
      _
    // Predicated region
    $region50: #{celeba_img_decoder_forward.11} parent=1 // pred_check
      _
    $region51: #{celeba_img_decoder_forward.11} parent=1 // pred_check_branch
      %209 = sbr.rel (0) target = $region53
    $region52: #{celeba_img_decoder_forward.11} parent=1 // pred_region
      _
    $region53: #{celeba_img_decoder_forward.11} parent=1 // pred_fallthru
      _
    %210 = vsyncpa [#allocation3], 1
    %211 = vsyncpa [#allocation5], 1
    %212 = vsyncpa [#allocation8], 1

// kernel: celeba_img_decoder_forward.10
$region0: #{celeba_img_decoder_forward.10}
  #allocation0 [shape = 'u32[]', space=smem, size = 0x4, offset = 0x4, fixed_abs, tag = 'smem constant byte address 0x4 - core index']
  #allocation1 [shape = 'u32[144,128]{1,0:T(1,128)}', space=vmem, size = 0x12000, scoped, tag = 'internal scratch']
  %s0 = inlined_call_operand.hbm [shape: f32[2,16], index: 0, kind: input, shape index: {}]
  %s1 = inlined_call_operand.hbm [shape: bf16[16,80], index: 1, kind: input, shape index: {}]
  %s2 = inlined_call_operand.hbm [shape: f32[1,80], index: 2, kind: input, shape index: {}]
  %s3 = inlined_call_operand.vmem [shape: f32[2,80], index: 3, kind: output, shape index: {}]
  %s4 = sld [smem:[#allocation0]]
  $region34: #{celeba_img_decoder_forward.10} parent=0
    _
  %s6 = ssub.s32 1, %s4
  %s7 = scalar_select 0, %s6, %s4
  $region1: #{celeba_img_decoder_forward.10} parent=0
    #allocation2 [shape = 'u8[1024]{0}', space=vmem, size = 0x400, scoped, tag = 'input window, operand 0, single buffered']
    #allocation3 [shape = 's32[1]{0}', space=sflag, size = 0x4, scoped, tag = 'scoped memory for celeba_img_decoder_forward.10']
    #allocation4 [shape = 'u8[4096]{0}', space=vmem, size = 0x1000, scoped, tag = 'input window, operand 1, single buffered']
    #allocation5 [shape = 's32[1]{0}', space=sflag, size = 0x4, scoped, tag = 'scoped memory for celeba_img_decoder_forward.10']
    #allocation6 [shape = 'u8[512]{0}', space=vmem, size = 0x400, scoped, tag = 'input window, operand 2, single buffered']
    %8 = vsyncpa [#allocation3], 0
    %9 = vsyncpa [#allocation5], 0
    // Predicated region
    $region2: #{celeba_img_decoder_forward.10} parent=1 // pred_check
      _
    $region3: #{celeba_img_decoder_forward.10} parent=1 // pred_check_branch
      %11 = sbr.rel (0) target = $region5
    $region4: #{celeba_img_decoder_forward.10} parent=1 // pred_region
      %s13 = ssub.s32 32, 32
      %14 = vsyncadd [#allocation3], %s13
      %s16 = sshll.u32 [#allocation2], 4
      %s17 = int_to_ptr.vmem [resolvable:$true] %s16
      %19 = dma.hbm_to_vmem [thread:$0]  %s0, 32, %s17, [#allocation3]
    $region5: #{celeba_img_decoder_forward.10} parent=1 // pred_fallthru
      _
    // Predicated region
    $region6: #{celeba_img_decoder_forward.10} parent=1 // pred_check
      _
    $region7: #{celeba_img_decoder_forward.10} parent=1 // pred_check_branch
      %21 = sbr.rel (0) target = $region9
    $region8: #{celeba_img_decoder_forward.10} parent=1 // pred_region
      %s23 = ssub.s32 128, 128
      %24 = vsyncadd [#allocation5], %s23
      %s25 = sshll.u32 [#allocation4], 4
      %s26 = int_to_ptr.vmem [resolvable:$true] %s25
      %31 = dma.hbm_to_vmem [thread:$0]  %s1, 128, %s26, [#allocation5], 64, 64, 4
    $region9: #{celeba_img_decoder_forward.10} parent=1 // pred_fallthru
      _
    // Predicated region
    $region10: #{celeba_img_decoder_forward.10} parent=1 // pred_check
      _
    $region11: #{celeba_img_decoder_forward.10} parent=1 // pred_check_branch
      %33 = sbr.rel (0) target = $region13
    $region12: #{celeba_img_decoder_forward.10} parent=1 // pred_region
      %s35 = ssub.s32 16, 16
      %36 = vsyncadd [#allocation5], %s35
      %s38 = sshll.u32 [#allocation6], 4
      %s39 = int_to_ptr.vmem [resolvable:$true] %s38
      %41 = dma.hbm_to_vmem [thread:$0]  %s2, 16, %s39, [#allocation5]
    $region13: #{celeba_img_decoder_forward.10} parent=1 // pred_fallthru
      _
    // Predicated region
    $region14: #{celeba_img_decoder_forward.10} parent=1 // pred_check
      _
    $region15: #{celeba_img_decoder_forward.10} parent=1 // pred_check_branch
      %43 = sbr.rel (0) target = $region17
    $region16: #{celeba_img_decoder_forward.10} parent=1 // pred_region
      %44 = dma.done [#allocation3], 32
    $region17: #{celeba_img_decoder_forward.10} parent=1 // pred_fallthru
      _
    // Predicated region
    $region18: #{celeba_img_decoder_forward.10} parent=1 // pred_check
      _
    $region19: #{celeba_img_decoder_forward.10} parent=1 // pred_check_branch
      %46 = sbr.rel (0) target = $region21
    $region20: #{celeba_img_decoder_forward.10} parent=1 // pred_region
      %47 = dma.done [#allocation5], 128
    $region21: #{celeba_img_decoder_forward.10} parent=1 // pred_fallthru
      _
    // Predicated region
    $region22: #{celeba_img_decoder_forward.10} parent=1 // pred_check
      _
    $region23: #{celeba_img_decoder_forward.10} parent=1 // pred_check_branch
      %49 = sbr.rel (0) target = $region25
    $region24: #{celeba_img_decoder_forward.10} parent=1 // pred_region
      %50 = dma.done [#allocation5], 16
    $region25: #{celeba_img_decoder_forward.10} parent=1 // pred_fallthru
      _
    %v52 = vld [vmem:[#allocation2] sm:$0x3]
    %v53 = vpack.c.bf16 %v52, %v52
    %v54 = vld [vmem:[#allocation4] sm:$0xf]
    %v55 = vld [vmem:[#allocation4 + $0x4] sm:$0xf]
    %v56 = vld [vmem:[#allocation6] sm:$0x1]
    %v58 = vlaneseq
    %v59 = vshrl.u32 %v58, 7
    %v60 = vsub.s32 0, %v59
    %v61 = vrot.slane %v56, %v60
    %v65 = vunpack.c.l.b16 %v54
    %v66 = vunpack.c.l.b16 %v55
    %v67 = vpack.c.b16 %v66, %v65
    %vm69 = vcmask 130048
    %v71 = vsel %vm69, %v53, 0
    %73 = vmatprep.subr.bf16.mxu0 0
    %74 = vmatpush1.bf16.msra.mxu0 %v67
    %75 = vmatprep.subr.bf16.mxu0 0
    %76 = vmatpush1.bf16.msra.mxu0 0
    %77 = vmatprep.subr.bf16.mxu0 0
    %78 = vmatpush1.bf16.msra.mxu0 0
    %79 = vmatprep.subr.bf16.mxu0 0
    %80 = vmatpush1.bf16.msra.mxu0 0
    %81 = vmatprep.subr.bf16.mxu0 0
    %82 = vmatpush1.bf16.msra.mxu0 0
    %83 = vmatprep.subr.bf16.mxu0 0
    %84 = vmatpush1.bf16.msra.mxu0 0
    %85 = vmatprep.subr.bf16.mxu0 0
    %86 = vmatpush1.bf16.msra.mxu0 0
    %87 = vmatprep.subr.bf16.mxu0 0
    %88 = vmatpush1.bf16.msra.mxu0 0
    %89 = vmatprep.subr.bf16.mxu0 0
    %90 = vmatpush1.bf16.msra.mxu0 0
    %91 = vmatprep.subr.bf16.mxu0 0
    %92 = vmatpush1.bf16.msra.mxu0 0
    %93 = vmatprep.subr.bf16.mxu0 0
    %94 = vmatpush1.bf16.msra.mxu0 0
    %95 = vmatprep.subr.bf16.mxu0 0
    %96 = vmatpush1.bf16.msra.mxu0 0
    %97 = vmatprep.subr.bf16.mxu0 0
    %98 = vmatpush1.bf16.msra.mxu0 0
    %99 = vmatprep.subr.bf16.mxu0 0
    %100 = vmatpush1.bf16.msra.mxu0 0
    %101 = vmatprep.subr.bf16.mxu0 0
    %102 = vmatpush1.bf16.msra.mxu0 0
    %103 = vmatprep.subr.bf16.mxu0 0
    %104 = vmatpush1.bf16.msra.mxu0 0
    %105 = vmatprep.mubr.bf16.mxu0 0
    %106 = vmatmul.mubr.bf16.gmra.mrb[0].mxu0 %v71
    %v107 = vpop.f32.mrb[0].mxu0
    %v108 = vadd.f32 %v61, %v107
    %v109 = vpop.f32.mrb[0].mxu0
    %v110 = vpop.f32.mrb[0].mxu0
    %v111 = vpop.f32.mrb[0].mxu0
    %112 = vdwg.mxu0
    %vm113 = vcmask 648192
    %114 = vst.msk [vmem:[%s3] sm:$0x3] %vm113, %v108
    // Predicated region
    $region26: #{celeba_img_decoder_forward.10} parent=1 // pred_check
      _
    $region27: #{celeba_img_decoder_forward.10} parent=1 // pred_check_branch
      %116 = sbr.rel (0) target = $region29
    $region28: #{celeba_img_decoder_forward.10} parent=1 // pred_region
      _
    $region29: #{celeba_img_decoder_forward.10} parent=1 // pred_fallthru
      _
    // Predicated region
    $region30: #{celeba_img_decoder_forward.10} parent=1 // pred_check
      _
    $region31: #{celeba_img_decoder_forward.10} parent=1 // pred_check_branch
      %118 = sbr.rel (0) target = $region33
    $region32: #{celeba_img_decoder_forward.10} parent=1 // pred_region
      _
    $region33: #{celeba_img_decoder_forward.10} parent=1 // pred_fallthru
      _
    %119 = vsyncpa [#allocation3], 1
    %120 = vsyncpa [#allocation5], 1

// kernel: celeba_img_decoder_forward.12
$region0: #{celeba_img_decoder_forward.12}
  #allocation0 [shape = 'u32[]', space=smem, size = 0x4, offset = 0x4, fixed_abs, tag = 'smem constant byte address 0x4 - core index']
  #allocation1 [shape = 'u32[144,128]{1,0:T(1,128)}', space=vmem, size = 0x12000, scoped, tag = 'internal scratch']
  %s0 = inlined_call_operand.vmem [shape: f32[2,160], index: 0, kind: input, shape index: {}]
  %s1 = inlined_call_operand.hbm [shape: bf16[160,1024], index: 1, kind: input, shape index: {}]
  %s2 = inlined_call_operand.hbm [shape: f32[1,1024], index: 2, kind: input, shape index: {}]
  %s3 = inlined_call_operand.vmem [shape: f32[2,1024], index: 3, kind: output, shape index: {}]
  %s4 = sld [smem:[#allocation0]]
  $region30: #{celeba_img_decoder_forward.12} parent=0
    _
  %s6 = ssub.s32 1, %s4
  %s7 = scalar_select 0, %s6, %s4
  $region1: #{celeba_img_decoder_forward.12} parent=0
    #allocation2 [shape = 'u8[327680]{0}', space=vmem, size = 0x50000, scoped, tag = 'input window, operand 1, single buffered']
    #allocation3 [shape = 's32[1]{0}', space=sflag, size = 0x4, scoped, tag = 'scoped memory for celeba_img_decoder_forward.12']
    #allocation4 [shape = 'u8[4096]{0}', space=vmem, size = 0x1000, scoped, tag = 'input window, operand 2, single buffered']
    #allocation5 [shape = 's32[1]{0}', space=sflag, size = 0x4, scoped, tag = 'scoped memory for celeba_img_decoder_forward.12']
    %8 = vsyncpa [#allocation3], 0
    %9 = vsyncpa [#allocation5], 0
    // Predicated region
    $region2: #{celeba_img_decoder_forward.12} parent=1 // pred_check
      _
    $region3: #{celeba_img_decoder_forward.12} parent=1 // pred_check_branch
      %11 = sbr.rel (0) target = $region5
    $region4: #{celeba_img_decoder_forward.12} parent=1 // pred_region
      _
    $region5: #{celeba_img_decoder_forward.12} parent=1 // pred_fallthru
      _
    // Predicated region
    $region6: #{celeba_img_decoder_forward.12} parent=1 // pred_check
      _
    $region7: #{celeba_img_decoder_forward.12} parent=1 // pred_check_branch
      %13 = sbr.rel (0) target = $region9
    $region8: #{celeba_img_decoder_forward.12} parent=1 // pred_region
      %s15 = ssub.s32 10240, 10240
      %16 = vsyncadd [#allocation3], %s15
      %s17 = sshll.u32 [#allocation2], 4
      %s18 = int_to_ptr.vmem [resolvable:$true] %s17
      %23 = dma.hbm_to_vmem [thread:$0]  %s1, 10240, %s18, [#allocation3], 512, 512, 32
    $region9: #{celeba_img_decoder_forward.12} parent=1 // pred_fallthru
      _
    // Predicated region
    $region10: #{celeba_img_decoder_forward.12} parent=1 // pred_check
      _
    $region11: #{celeba_img_decoder_forward.12} parent=1 // pred_check_branch
      %25 = sbr.rel (0) target = $region13
    $region12: #{celeba_img_decoder_forward.12} parent=1 // pred_region
      %s27 = ssub.s32 128, 128
      %28 = vsyncadd [#allocation5], %s27
      %s30 = sshll.u32 [#allocation4], 4
      %s31 = int_to_ptr.vmem [resolvable:$true] %s30
      %33 = dma.hbm_to_vmem [thread:$0]  %s2, 128, %s31, [#allocation5]
    $region13: #{celeba_img_decoder_forward.12} parent=1 // pred_fallthru
      _
    // Predicated region
    $region14: #{celeba_img_decoder_forward.12} parent=1 // pred_check
      _
    $region15: #{celeba_img_decoder_forward.12} parent=1 // pred_check_branch
      %35 = sbr.rel (0) target = $region17
    $region16: #{celeba_img_decoder_forward.12} parent=1 // pred_region
      %36 = dma.done [#allocation3], 10240
    $region17: #{celeba_img_decoder_forward.12} parent=1 // pred_fallthru
      _
    // Predicated region
    $region18: #{celeba_img_decoder_forward.12} parent=1 // pred_check
      _
    $region19: #{celeba_img_decoder_forward.12} parent=1 // pred_check_branch
      %38 = sbr.rel (0) target = $region21
    $region20: #{celeba_img_decoder_forward.12} parent=1 // pred_region
      %39 = dma.done [#allocation5], 128
    $region21: #{celeba_img_decoder_forward.12} parent=1 // pred_fallthru
      _
    %v41 = vld [vmem:[%s0] sm:$0xf]
    %v44 = vunpack.c.l.s4 1983009808
    %v45 = vunpack.c.0.s8 %v44
    %v46 = vlaneseq
    %v47 = vshrl.u32 %v46, 7
    %v48 = vsub.s32 %v45, %v47
    %v49 = vrot.slane %v41, %v48
    %v50 = vcombine.high %v49, %v49
    %v53 = vpack.c.bf16 %v49, %v49
    %v54 = vpack.c.bf16 %v50, %v50
    %v55 = vld [vmem:[#allocation2] sm:$0xff]
    %v56 = vld [vmem:[#allocation2 + $0x8] sm:$0xff]
    %v57 = vld [vmem:[#allocation2 + $0x10] sm:$0xff]
    %v58 = vld [vmem:[#allocation2 + $0x18] sm:$0xff]
    %v59 = vld [vmem:[#allocation2 + $0x20] sm:$0xff]
    %v60 = vld [vmem:[#allocation2 + $0x28] sm:$0xff]
    %v61 = vld [vmem:[#allocation2 + $0x30] sm:$0xff]
    %v62 = vld [vmem:[#allocation2 + $0x38] sm:$0xff]
    %v63 = vld [vmem:[#allocation2 + $0x40] sm:$0xff]
    %v64 = vld [vmem:[#allocation2 + $0x48] sm:$0xff]
    %v65 = vld [vmem:[#allocation2 + $0x50] sm:$0xff]
    %v66 = vld [vmem:[#allocation2 + $0x58] sm:$0xff]
    %v67 = vld [vmem:[#allocation2 + $0x60] sm:$0xff]
    %v68 = vld [vmem:[#allocation2 + $0x68] sm:$0xff]
    %v69 = vld [vmem:[#allocation2 + $0x70] sm:$0xff]
    %v70 = vld [vmem:[#allocation2 + $0x78] sm:$0xff]
    %v71 = vld [vmem:[#allocation2 + $0x80] sm:$0xff]
    %v72 = vld [vmem:[#allocation2 + $0x88] sm:$0xff]
    %v73 = vld [vmem:[#allocation2 + $0x90] sm:$0xff]
    %v74 = vld [vmem:[#allocation2 + $0x98] sm:$0xff]
    %v75 = vld [vmem:[#allocation2 + $0xa0] sm:$0xff]
    %v76 = vld [vmem:[#allocation2 + $0xa8] sm:$0xff]
    %v77 = vld [vmem:[#allocation2 + $0xb0] sm:$0xff]
    %v78 = vld [vmem:[#allocation2 + $0xb8] sm:$0xff]
    %v79 = vld [vmem:[#allocation2 + $0xc0] sm:$0xff]
    %v80 = vld [vmem:[#allocation2 + $0xc8] sm:$0xff]
    %v81 = vld [vmem:[#allocation2 + $0xd0] sm:$0xff]
    %v82 = vld [vmem:[#allocation2 + $0xd8] sm:$0xff]
    %v83 = vld [vmem:[#allocation2 + $0xe0] sm:$0xff]
    %v84 = vld [vmem:[#allocation2 + $0xe8] sm:$0xff]
    %v85 = vld [vmem:[#allocation2 + $0xf0] sm:$0xff]
    %v86 = vld [vmem:[#allocation2 + $0xf8] sm:$0xff]
    %v87 = vld [vmem:[#allocation2 + $0x100] sm:$0xff]
    %v88 = vld [vmem:[#allocation2 + $0x108] sm:$0xff]
    %v89 = vld [vmem:[#allocation2 + $0x110] sm:$0xff]
    %v90 = vld [vmem:[#allocation2 + $0x118] sm:$0xff]
    %v91 = vld [vmem:[#allocation2 + $0x120] sm:$0xff]
    %v92 = vld [vmem:[#allocation2 + $0x128] sm:$0xff]
    %v93 = vld [vmem:[#allocation2 + $0x130] sm:$0xff]
    %v94 = vld [vmem:[#allocation2 + $0x138] sm:$0xff]
    %v95 = vld [vmem:[#allocation2 + $0x140] sm:$0xff]
    %v96 = vld [vmem:[#allocation2 + $0x148] sm:$0xff]
    %v97 = vld [vmem:[#allocation2 + $0x150] sm:$0xff]
    %v98 = vld [vmem:[#allocation2 + $0x158] sm:$0xff]
    %v99 = vld [vmem:[#allocation2 + $0x160] sm:$0xff]
    %v100 = vld [vmem:[#allocation2 + $0x168] sm:$0xff]
    %v101 = vld [vmem:[#allocation2 + $0x170] sm:$0xff]
    %v102 = vld [vmem:[#allocation2 + $0x178] sm:$0xff]
    %v103 = vld [vmem:[#allocation2 + $0x180] sm:$0xff]
    %v104 = vld [vmem:[#allocation2 + $0x188] sm:$0xff]
    %v105 = vld [vmem:[#allocation2 + $0x190] sm:$0xff]
    %v106 = vld [vmem:[#allocation2 + $0x198] sm:$0xff]
    %v107 = vld [vmem:[#allocation2 + $0x1a0] sm:$0xff]
    %v108 = vld [vmem:[#allocation2 + $0x1a8] sm:$0xff]
    %v109 = vld [vmem:[#allocation2 + $0x1b0] sm:$0xff]
    %v110 = vld [vmem:[#allocation2 + $0x1b8] sm:$0xff]
    %v111 = vld [vmem:[#allocation2 + $0x1c0] sm:$0xff]
    %v112 = vld [vmem:[#allocation2 + $0x1c8] sm:$0xff]
    %v113 = vld [vmem:[#allocation2 + $0x1d0] sm:$0xff]
    %v114 = vld [vmem:[#allocation2 + $0x1d8] sm:$0xff]
    %v115 = vld [vmem:[#allocation2 + $0x1e0] sm:$0xff]
    %v116 = vld [vmem:[#allocation2 + $0x1e8] sm:$0xff]
    %v117 = vld [vmem:[#allocation2 + $0x1f0] sm:$0xff]
    %v118 = vld [vmem:[#allocation2 + $0x1f8] sm:$0xff]
    %v119 = vld [vmem:[#allocation2 + $0x200] sm:$0xff]
    %v120 = vld [vmem:[#allocation2 + $0x208] sm:$0xff]
    %v121 = vld [vmem:[#allocation2 + $0x210] sm:$0xff]
    %v122 = vld [vmem:[#allocation2 + $0x218] sm:$0xff]
    %v123 = vld [vmem:[#allocation2 + $0x220] sm:$0xff]
    %v124 = vld [vmem:[#allocation2 + $0x228] sm:$0xff]
    %v125 = vld [vmem:[#allocation2 + $0x230] sm:$0xff]
    %v126 = vld [vmem:[#allocation2 + $0x238] sm:$0xff]
    %v127 = vld [vmem:[#allocation2 + $0x240] sm:$0xff]
    %v128 = vld [vmem:[#allocation2 + $0x248] sm:$0xff]
    %v129 = vld [vmem:[#allocation2 + $0x250] sm:$0xff]
    %v130 = vld [vmem:[#allocation2 + $0x258] sm:$0xff]
    %v131 = vld [vmem:[#allocation2 + $0x260] sm:$0xff]
    %v132 = vld [vmem:[#allocation2 + $0x268] sm:$0xff]
    %v133 = vld [vmem:[#allocation2 + $0x270] sm:$0xff]
    %v134 = vld [vmem:[#allocation2 + $0x278] sm:$0xff]
    %v135 = vld [vmem:[#allocation4] sm:$0xff]
    %v137 = vlaneseq
    %v138 = vshrl.u32 %v137, 7
    %v139 = vsub.s32 0, %v138
    %v140 = vrot.slane %v135, %v139
    %v141 = vlaneseq
    %v142 = vshrl.u32 %v141, 7
    %v143 = vsub.s32 1, %v142
    %v144 = vrot.slane %v135, %v143
    %v145 = vlaneseq
    %v146 = vshrl.u32 %v145, 7
    %v147 = vsub.s32 2, %v146
    %v148 = vrot.slane %v135, %v147
    %v149 = vlaneseq
    %v150 = vshrl.u32 %v149, 7
    %v151 = vsub.s32 3, %v150
    %v152 = vrot.slane %v135, %v151
    %v153 = vlaneseq
    %v154 = vshrl.u32 %v153, 7
    %v155 = vsub.s32 4, %v154
    %v156 = vrot.slane %v135, %v155
    %v157 = vlaneseq
    %v158 = vshrl.u32 %v157, 7
    %v159 = vsub.s32 5, %v158
    %v160 = vrot.slane %v135, %v159
    %v161 = vlaneseq
    %v162 = vshrl.u32 %v161, 7
    %v163 = vsub.s32 6, %v162
    %v164 = vrot.slane %v135, %v163
    %v165 = vlaneseq
    %v166 = vshrl.u32 %v165, 7
    %v167 = vsub.s32 7, %v166
    %v168 = vrot.slane %v135, %v167
    %v257 = vunpack.c.l.b16 %v55
    %v258 = vunpack.c.h.b16 %v55
    %v259 = vunpack.c.l.b16 %v56
    %v260 = vunpack.c.h.b16 %v56
    %v261 = vunpack.c.l.b16 %v57
    %v262 = vunpack.c.h.b16 %v57
    %v263 = vunpack.c.l.b16 %v58
    %v264 = vunpack.c.h.b16 %v58
    %v265 = vunpack.c.l.b16 %v59
    %v266 = vunpack.c.h.b16 %v59
    %v267 = vunpack.c.l.b16 %v60
    %v268 = vunpack.c.h.b16 %v60
    %v269 = vunpack.c.l.b16 %v61
    %v270 = vunpack.c.h.b16 %v61
    %v271 = vunpack.c.l.b16 %v62
    %v272 = vunpack.c.h.b16 %v62
    %v273 = vunpack.c.l.b16 %v63
    %v274 = vunpack.c.h.b16 %v63
    %v275 = vunpack.c.l.b16 %v64
    %v276 = vunpack.c.h.b16 %v64
    %v277 = vunpack.c.l.b16 %v65
    %v278 = vunpack.c.h.b16 %v65
    %v279 = vunpack.c.l.b16 %v66
    %v280 = vunpack.c.h.b16 %v66
    %v281 = vunpack.c.l.b16 %v67
    %v282 = vunpack.c.h.b16 %v67
    %v283 = vunpack.c.l.b16 %v68
    %v284 = vunpack.c.h.b16 %v68
    %v285 = vunpack.c.l.b16 %v69
    %v286 = vunpack.c.h.b16 %v69
    %v287 = vunpack.c.l.b16 %v70
    %v288 = vunpack.c.h.b16 %v70
    %v289 = vunpack.c.l.b16 %v71
    %v290 = vunpack.c.h.b16 %v71
    %v291 = vunpack.c.l.b16 %v72
    %v292 = vunpack.c.h.b16 %v72
    %v293 = vunpack.c.l.b16 %v73
    %v294 = vunpack.c.h.b16 %v73
    %v295 = vunpack.c.l.b16 %v74
    %v296 = vunpack.c.h.b16 %v74
    %v297 = vunpack.c.l.b16 %v75
    %v298 = vunpack.c.h.b16 %v75
    %v299 = vunpack.c.l.b16 %v76
    %v300 = vunpack.c.h.b16 %v76
    %v301 = vunpack.c.l.b16 %v77
    %v302 = vunpack.c.h.b16 %v77
    %v303 = vunpack.c.l.b16 %v78
    %v304 = vunpack.c.h.b16 %v78
    %v305 = vunpack.c.l.b16 %v79
    %v306 = vunpack.c.h.b16 %v79
    %v307 = vunpack.c.l.b16 %v80
    %v308 = vunpack.c.h.b16 %v80
    %v309 = vunpack.c.l.b16 %v81
    %v310 = vunpack.c.h.b16 %v81
    %v311 = vunpack.c.l.b16 %v82
    %v312 = vunpack.c.h.b16 %v82
    %v313 = vunpack.c.l.b16 %v83
    %v314 = vunpack.c.h.b16 %v83
    %v315 = vunpack.c.l.b16 %v84
    %v316 = vunpack.c.h.b16 %v84
    %v317 = vunpack.c.l.b16 %v85
    %v318 = vunpack.c.h.b16 %v85
    %v319 = vunpack.c.l.b16 %v86
    %v320 = vunpack.c.h.b16 %v86
    %v321 = vunpack.c.l.b16 %v87
    %v322 = vunpack.c.h.b16 %v87
    %v323 = vunpack.c.l.b16 %v88
    %v324 = vunpack.c.h.b16 %v88
    %v325 = vunpack.c.l.b16 %v89
    %v326 = vunpack.c.h.b16 %v89
    %v327 = vunpack.c.l.b16 %v90
    %v328 = vunpack.c.h.b16 %v90
    %v329 = vunpack.c.l.b16 %v91
    %v330 = vunpack.c.h.b16 %v91
    %v331 = vunpack.c.l.b16 %v92
    %v332 = vunpack.c.h.b16 %v92
    %v333 = vunpack.c.l.b16 %v93
    %v334 = vunpack.c.h.b16 %v93
    %v335 = vunpack.c.l.b16 %v94
    %v336 = vunpack.c.h.b16 %v94
    %v337 = vunpack.c.l.b16 %v95
    %v338 = vunpack.c.h.b16 %v95
    %v339 = vunpack.c.l.b16 %v96
    %v340 = vunpack.c.h.b16 %v96
    %v341 = vunpack.c.l.b16 %v97
    %v342 = vunpack.c.h.b16 %v97
    %v343 = vunpack.c.l.b16 %v98
    %v344 = vunpack.c.h.b16 %v98
    %v345 = vunpack.c.l.b16 %v99
    %v346 = vunpack.c.h.b16 %v99
    %v347 = vunpack.c.l.b16 %v100
    %v348 = vunpack.c.h.b16 %v100
    %v349 = vunpack.c.l.b16 %v101
    %v350 = vunpack.c.h.b16 %v101
    %v351 = vunpack.c.l.b16 %v102
    %v352 = vunpack.c.h.b16 %v102
    %v353 = vunpack.c.l.b16 %v103
    %v354 = vunpack.c.h.b16 %v103
    %v355 = vunpack.c.l.b16 %v104
    %v356 = vunpack.c.h.b16 %v104
    %v357 = vunpack.c.l.b16 %v105
    %v358 = vunpack.c.h.b16 %v105
    %v359 = vunpack.c.l.b16 %v106
    %v360 = vunpack.c.h.b16 %v106
    %v361 = vunpack.c.l.b16 %v107
    %v362 = vunpack.c.h.b16 %v107
    %v363 = vunpack.c.l.b16 %v108
    %v364 = vunpack.c.h.b16 %v108
    %v365 = vunpack.c.l.b16 %v109
    %v366 = vunpack.c.h.b16 %v109
    %v367 = vunpack.c.l.b16 %v110
    %v368 = vunpack.c.h.b16 %v110
    %v369 = vunpack.c.l.b16 %v111
    %v370 = vunpack.c.h.b16 %v111
    %v371 = vunpack.c.l.b16 %v112
    %v372 = vunpack.c.h.b16 %v112
    %v373 = vunpack.c.l.b16 %v113
    %v374 = vunpack.c.h.b16 %v113
    %v375 = vunpack.c.l.b16 %v114
    %v376 = vunpack.c.h.b16 %v114
    %v377 = vunpack.c.l.b16 %v115
    %v378 = vunpack.c.h.b16 %v115
    %v379 = vunpack.c.l.b16 %v116
    %v380 = vunpack.c.h.b16 %v116
    %v381 = vunpack.c.l.b16 %v117
    %v382 = vunpack.c.h.b16 %v117
    %v383 = vunpack.c.l.b16 %v118
    %v384 = vunpack.c.h.b16 %v118
    %v385 = vunpack.c.l.b16 %v119
    %v386 = vunpack.c.h.b16 %v119
    %v387 = vunpack.c.l.b16 %v120
    %v388 = vunpack.c.h.b16 %v120
    %v389 = vunpack.c.l.b16 %v121
    %v390 = vunpack.c.h.b16 %v121
    %v391 = vunpack.c.l.b16 %v122
    %v392 = vunpack.c.h.b16 %v122
    %v393 = vunpack.c.l.b16 %v123
    %v394 = vunpack.c.h.b16 %v123
    %v395 = vunpack.c.l.b16 %v124
    %v396 = vunpack.c.h.b16 %v124
    %v397 = vunpack.c.l.b16 %v125
    %v398 = vunpack.c.h.b16 %v125
    %v399 = vunpack.c.l.b16 %v126
    %v400 = vunpack.c.h.b16 %v126
    %v401 = vunpack.c.l.b16 %v127
    %v402 = vunpack.c.h.b16 %v127
    %v403 = vunpack.c.l.b16 %v128
    %v404 = vunpack.c.h.b16 %v128
    %v405 = vunpack.c.l.b16 %v129
    %v406 = vunpack.c.h.b16 %v129
    %v407 = vunpack.c.l.b16 %v130
    %v408 = vunpack.c.h.b16 %v130
    %v409 = vunpack.c.l.b16 %v131
    %v410 = vunpack.c.h.b16 %v131
    %v411 = vunpack.c.l.b16 %v132
    %v412 = vunpack.c.h.b16 %v132
    %v413 = vunpack.c.l.b16 %v133
    %v414 = vunpack.c.h.b16 %v133
    %v415 = vunpack.c.l.b16 %v134
    %v416 = vunpack.c.h.b16 %v134
    %v417 = vpack.c.b16 %v265, %v257
    %v418 = vpack.c.b16 %v266, %v258
    %v419 = vpack.c.b16 %v267, %v259
    %v420 = vpack.c.b16 %v268, %v260
    %v421 = vpack.c.b16 %v269, %v261
    %v422 = vpack.c.b16 %v270, %v262
    %v423 = vpack.c.b16 %v271, %v263
    %v424 = vpack.c.b16 %v272, %v264
    %v425 = vpack.c.b16 %v281, %v273
    %v426 = vpack.c.b16 %v282, %v274
    %v427 = vpack.c.b16 %v283, %v275
    %v428 = vpack.c.b16 %v284, %v276
    %v429 = vpack.c.b16 %v285, %v277
    %v430 = vpack.c.b16 %v286, %v278
    %v431 = vpack.c.b16 %v287, %v279
    %v432 = vpack.c.b16 %v288, %v280
    %v433 = vpack.c.b16 %v297, %v289
    %v434 = vpack.c.b16 %v298, %v290
    %v435 = vpack.c.b16 %v299, %v291
    %v436 = vpack.c.b16 %v300, %v292
    %v437 = vpack.c.b16 %v301, %v293
    %v438 = vpack.c.b16 %v302, %v294
    %v439 = vpack.c.b16 %v303, %v295
    %v440 = vpack.c.b16 %v304, %v296
    %v441 = vpack.c.b16 %v313, %v305
    %v442 = vpack.c.b16 %v314, %v306
    %v443 = vpack.c.b16 %v315, %v307
    %v444 = vpack.c.b16 %v316, %v308
    %v445 = vpack.c.b16 %v317, %v309
    %v446 = vpack.c.b16 %v318, %v310
    %v447 = vpack.c.b16 %v319, %v311
    %v448 = vpack.c.b16 %v320, %v312
    %v449 = vpack.c.b16 %v329, %v321
    %v450 = vpack.c.b16 %v330, %v322
    %v451 = vpack.c.b16 %v331, %v323
    %v452 = vpack.c.b16 %v332, %v324
    %v453 = vpack.c.b16 %v333, %v325
    %v454 = vpack.c.b16 %v334, %v326
    %v455 = vpack.c.b16 %v335, %v327
    %v456 = vpack.c.b16 %v336, %v328
    %v457 = vpack.c.b16 %v345, %v337
    %v458 = vpack.c.b16 %v346, %v338
    %v459 = vpack.c.b16 %v347, %v339
    %v460 = vpack.c.b16 %v348, %v340
    %v461 = vpack.c.b16 %v349, %v341
    %v462 = vpack.c.b16 %v350, %v342
    %v463 = vpack.c.b16 %v351, %v343
    %v464 = vpack.c.b16 %v352, %v344
    %v465 = vpack.c.b16 %v361, %v353
    %v466 = vpack.c.b16 %v362, %v354
    %v467 = vpack.c.b16 %v363, %v355
    %v468 = vpack.c.b16 %v364, %v356
    %v469 = vpack.c.b16 %v365, %v357
    %v470 = vpack.c.b16 %v366, %v358
    %v471 = vpack.c.b16 %v367, %v359
    %v472 = vpack.c.b16 %v368, %v360
    %v473 = vpack.c.b16 %v377, %v369
    %v474 = vpack.c.b16 %v378, %v370
    %v475 = vpack.c.b16 %v379, %v371
    %v476 = vpack.c.b16 %v380, %v372
    %v477 = vpack.c.b16 %v381, %v373
    %v478 = vpack.c.b16 %v382, %v374
    %v479 = vpack.c.b16 %v383, %v375
    %v480 = vpack.c.b16 %v384, %v376
    %v481 = vpack.c.b16 %v393, %v385
    %v482 = vpack.c.b16 %v394, %v386
    %v483 = vpack.c.b16 %v395, %v387
    %v484 = vpack.c.b16 %v396, %v388
    %v485 = vpack.c.b16 %v397, %v389
    %v486 = vpack.c.b16 %v398, %v390
    %v487 = vpack.c.b16 %v399, %v391
    %v488 = vpack.c.b16 %v400, %v392
    %v489 = vpack.c.b16 %v409, %v401
    %v490 = vpack.c.b16 %v410, %v402
    %v491 = vpack.c.b16 %v411, %v403
    %v492 = vpack.c.b16 %v412, %v404
    %v493 = vpack.c.b16 %v413, %v405
    %v494 = vpack.c.b16 %v414, %v406
    %v495 = vpack.c.b16 %v415, %v407
    %v496 = vpack.c.b16 %v416, %v408
    %vm577 = vcmask 261120
    %v579 = vsel %vm577, %v54, 0
    %581 = vmatprep.subr.bf16.mxu0 %v418
    %582 = vmatpush1.bf16.msra.mxu0 %v417
    %583 = vmatprep.subr.bf16.mxu0 %v426
    %584 = vmatpush1.bf16.msra.mxu0 %v425
    %585 = vmatprep.subr.bf16.mxu0 %v434
    %586 = vmatpush1.bf16.msra.mxu0 %v433
    %587 = vmatprep.subr.bf16.mxu0 %v442
    %588 = vmatpush1.bf16.msra.mxu0 %v441
    %589 = vmatprep.subr.bf16.mxu0 %v450
    %590 = vmatpush1.bf16.msra.mxu0 %v449
    %591 = vmatprep.subr.bf16.mxu0 %v458
    %592 = vmatpush1.bf16.msra.mxu0 %v457
    %593 = vmatprep.subr.bf16.mxu0 %v466
    %594 = vmatpush1.bf16.msra.mxu0 %v465
    %595 = vmatprep.subr.bf16.mxu0 %v474
    %596 = vmatpush1.bf16.msra.mxu0 %v473
    %597 = vmatprep.subr.bf16.mxu0 %v482
    %598 = vmatpush1.bf16.msra.mxu0 %v481
    %599 = vmatprep.subr.bf16.mxu0 %v490
    %600 = vmatpush1.bf16.msra.mxu0 %v489
    %601 = vmatprep.subr.bf16.mxu0 0
    %602 = vmatpush1.bf16.msra.mxu0 0
    %603 = vmatprep.subr.bf16.mxu0 0
    %604 = vmatpush1.bf16.msra.mxu0 0
    %605 = vmatprep.subr.bf16.mxu0 0
    %606 = vmatpush1.bf16.msra.mxu0 0
    %607 = vmatprep.subr.bf16.mxu0 0
    %608 = vmatpush1.bf16.msra.mxu0 0
    %609 = vmatprep.subr.bf16.mxu0 0
    %610 = vmatpush1.bf16.msra.mxu0 0
    %611 = vmatprep.subr.bf16.mxu0 0
    %612 = vmatpush1.bf16.msra.mxu0 0
    %613 = vmatprep.mubr.bf16.mxu0 %v579
    %614 = vmatmul.mubr.bf16.gmra.mrb[0].mxu0 %v53
    %v615 = vpop.f32.mrb[0].mxu0
    %v616 = vadd.f32 %v140, %v615
    %v617 = vpop.f32.mrb[0].mxu0
    %v618 = vadd.f32 %v144, %v617
    %v619 = vpop.f32.mrb[0].mxu0
    %v620 = vpop.f32.mrb[0].mxu0
    %621 = vdwg.mxu0
    %622 = vmatprep.subr.bf16.mxu0 %v420
    %623 = vmatpush1.bf16.msra.mxu0 %v419
    %624 = vmatprep.subr.bf16.mxu0 %v428
    %625 = vmatpush1.bf16.msra.mxu0 %v427
    %626 = vmatprep.subr.bf16.mxu0 %v436
    %627 = vmatpush1.bf16.msra.mxu0 %v435
    %628 = vmatprep.subr.bf16.mxu0 %v444
    %629 = vmatpush1.bf16.msra.mxu0 %v443
    %630 = vmatprep.subr.bf16.mxu0 %v452
    %631 = vmatpush1.bf16.msra.mxu0 %v451
    %632 = vmatprep.subr.bf16.mxu0 %v460
    %633 = vmatpush1.bf16.msra.mxu0 %v459
    %634 = vmatprep.subr.bf16.mxu0 %v468
    %635 = vmatpush1.bf16.msra.mxu0 %v467
    %636 = vmatprep.subr.bf16.mxu0 %v476
    %637 = vmatpush1.bf16.msra.mxu0 %v475
    %638 = vmatprep.subr.bf16.mxu0 %v484
    %639 = vmatpush1.bf16.msra.mxu0 %v483
    %640 = vmatprep.subr.bf16.mxu0 %v492
    %641 = vmatpush1.bf16.msra.mxu0 %v491
    %642 = vmatprep.subr.bf16.mxu0 0
    %643 = vmatpush1.bf16.msra.mxu0 0
    %644 = vmatprep.subr.bf16.mxu0 0
    %645 = vmatpush1.bf16.msra.mxu0 0
    %646 = vmatprep.subr.bf16.mxu0 0
    %647 = vmatpush1.bf16.msra.mxu0 0
    %648 = vmatprep.subr.bf16.mxu0 0
    %649 = vmatpush1.bf16.msra.mxu0 0
    %650 = vmatprep.subr.bf16.mxu0 0
    %651 = vmatpush1.bf16.msra.mxu0 0
    %652 = vmatprep.subr.bf16.mxu0 0
    %653 = vmatpush1.bf16.msra.mxu0 0
    %654 = vmatprep.mubr.bf16.mxu0 %v579
    %655 = vmatmul.mubr.bf16.gmra.mrb[0].mxu0 %v53
    %v656 = vpop.f32.mrb[0].mxu0
    %v657 = vadd.f32 %v148, %v656
    %v658 = vpop.f32.mrb[0].mxu0
    %v659 = vadd.f32 %v152, %v658
    %v660 = vpop.f32.mrb[0].mxu0
    %v661 = vpop.f32.mrb[0].mxu0
    %662 = vdwg.mxu0
    %663 = vmatprep.subr.bf16.mxu0 %v422
    %664 = vmatpush1.bf16.msra.mxu0 %v421
    %665 = vmatprep.subr.bf16.mxu0 %v430
    %666 = vmatpush1.bf16.msra.mxu0 %v429
    %667 = vmatprep.subr.bf16.mxu0 %v438
    %668 = vmatpush1.bf16.msra.mxu0 %v437
    %669 = vmatprep.subr.bf16.mxu0 %v446
    %670 = vmatpush1.bf16.msra.mxu0 %v445
    %671 = vmatprep.subr.bf16.mxu0 %v454
    %672 = vmatpush1.bf16.msra.mxu0 %v453
    %673 = vmatprep.subr.bf16.mxu0 %v462
    %674 = vmatpush1.bf16.msra.mxu0 %v461
    %675 = vmatprep.subr.bf16.mxu0 %v470
    %676 = vmatpush1.bf16.msra.mxu0 %v469
    %677 = vmatprep.subr.bf16.mxu0 %v478
    %678 = vmatpush1.bf16.msra.mxu0 %v477
    %679 = vmatprep.subr.bf16.mxu0 %v486
    %680 = vmatpush1.bf16.msra.mxu0 %v485
    %681 = vmatprep.subr.bf16.mxu0 %v494
    %682 = vmatpush1.bf16.msra.mxu0 %v493
    %683 = vmatprep.subr.bf16.mxu0 0
    %684 = vmatpush1.bf16.msra.mxu0 0
    %685 = vmatprep.subr.bf16.mxu0 0
    %686 = vmatpush1.bf16.msra.mxu0 0
    %687 = vmatprep.subr.bf16.mxu0 0
    %688 = vmatpush1.bf16.msra.mxu0 0
    %689 = vmatprep.subr.bf16.mxu0 0
    %690 = vmatpush1.bf16.msra.mxu0 0
    %691 = vmatprep.subr.bf16.mxu0 0
    %692 = vmatpush1.bf16.msra.mxu0 0
    %693 = vmatprep.subr.bf16.mxu0 0
    %694 = vmatpush1.bf16.msra.mxu0 0
    %695 = vmatprep.mubr.bf16.mxu0 %v579
    %696 = vmatmul.mubr.bf16.gmra.mrb[0].mxu0 %v53
    %v697 = vpop.f32.mrb[0].mxu0
    %v698 = vadd.f32 %v156, %v697
    %v699 = vpop.f32.mrb[0].mxu0
    %v700 = vadd.f32 %v160, %v699
    %v701 = vpop.f32.mrb[0].mxu0
    %v702 = vpop.f32.mrb[0].mxu0
    %703 = vdwg.mxu0
    %704 = vmatprep.subr.bf16.mxu0 %v424
    %705 = vmatpush1.bf16.msra.mxu0 %v423
    %706 = vmatprep.subr.bf16.mxu0 %v432
    %707 = vmatpush1.bf16.msra.mxu0 %v431
    %708 = vmatprep.subr.bf16.mxu0 %v440
    %709 = vmatpush1.bf16.msra.mxu0 %v439
    %710 = vmatprep.subr.bf16.mxu0 %v448
    %711 = vmatpush1.bf16.msra.mxu0 %v447
    %712 = vmatprep.subr.bf16.mxu0 %v456
    %713 = vmatpush1.bf16.msra.mxu0 %v455
    %714 = vmatprep.subr.bf16.mxu0 %v464
    %715 = vmatpush1.bf16.msra.mxu0 %v463
    %716 = vmatprep.subr.bf16.mxu0 %v472
    %717 = vmatpush1.bf16.msra.mxu0 %v471
    %718 = vmatprep.subr.bf16.mxu0 %v480
    %719 = vmatpush1.bf16.msra.mxu0 %v479
    %720 = vmatprep.subr.bf16.mxu0 %v488
    %721 = vmatpush1.bf16.msra.mxu0 %v487
    %722 = vmatprep.subr.bf16.mxu0 %v496
    %723 = vmatpush1.bf16.msra.mxu0 %v495
    %724 = vmatprep.subr.bf16.mxu0 0
    %725 = vmatpush1.bf16.msra.mxu0 0
    %726 = vmatprep.subr.bf16.mxu0 0
    %727 = vmatpush1.bf16.msra.mxu0 0
    %728 = vmatprep.subr.bf16.mxu0 0
    %729 = vmatpush1.bf16.msra.mxu0 0
    %730 = vmatprep.subr.bf16.mxu0 0
    %731 = vmatpush1.bf16.msra.mxu0 0
    %732 = vmatprep.subr.bf16.mxu0 0
    %733 = vmatpush1.bf16.msra.mxu0 0
    %734 = vmatprep.subr.bf16.mxu0 0
    %735 = vmatpush1.bf16.msra.mxu0 0
    %736 = vmatprep.mubr.bf16.mxu0 %v579
    %737 = vmatmul.mubr.bf16.gmra.mrb[0].mxu0 %v53
    %v738 = vpop.f32.mrb[0].mxu0
    %v739 = vadd.f32 %v164, %v738
    %v740 = vpop.f32.mrb[0].mxu0
    %v741 = vadd.f32 %v168, %v740
    %v742 = vpop.f32.mrb[0].mxu0
    %v743 = vpop.f32.mrb[0].mxu0
    %744 = vdwg.mxu0
    %v753 = vcombine.low %v616, %v618
    %v754 = vcombine.low %v657, %v659
    %v756 = vunpack.c.l.s4 1983009808
    %v757 = vunpack.c.0.s8 %v756
    %v758 = vlaneseq
    %v759 = vshrl.u32 %v758, 7
    %v760 = vsub.s32 %v757, %v759
    %v761 = vrot.slane %v753, %v760
    %v763 = vunpack.c.l.s4 1983009808
    %v764 = vunpack.c.0.s8 %v763
    %v765 = vlaneseq
    %v766 = vshrl.u32 %v765, 7
    %v767 = vsub.s32 %v764, %v766
    %v768 = vrot.slane %v754, %v767
    %v769 = vcombine.low %v761, %v768
    %v770 = vcombine.low %v698, %v700
    %v771 = vcombine.low %v739, %v741
    %v773 = vunpack.c.l.s4 1983009808
    %v774 = vunpack.c.0.s8 %v773
    %v775 = vlaneseq
    %v776 = vshrl.u32 %v775, 7
    %v777 = vsub.s32 %v774, %v776
    %v778 = vrot.slane %v770, %v777
    %v780 = vunpack.c.l.s4 1983009808
    %v781 = vunpack.c.0.s8 %v780
    %v782 = vlaneseq
    %v783 = vshrl.u32 %v782, 7
    %v784 = vsub.s32 %v781, %v783
    %v785 = vrot.slane %v771, %v784
    %v786 = vcombine.low %v778, %v785
    %789 = vst [vmem:[%s3] sm:$0xff] %v769
    %790 = vst [vmem:[%s3 + $0x8] sm:$0xff] %v786
    // Predicated region
    $region22: #{celeba_img_decoder_forward.12} parent=1 // pred_check
      _
    $region23: #{celeba_img_decoder_forward.12} parent=1 // pred_check_branch
      %792 = sbr.rel (0) target = $region25
    $region24: #{celeba_img_decoder_forward.12} parent=1 // pred_region
      _
    $region25: #{celeba_img_decoder_forward.12} parent=1 // pred_fallthru
      _
    // Predicated region
    $region26: #{celeba_img_decoder_forward.12} parent=1 // pred_check
      _
    $region27: #{celeba_img_decoder_forward.12} parent=1 // pred_check_branch
      %794 = sbr.rel (0) target = $region29
    $region28: #{celeba_img_decoder_forward.12} parent=1 // pred_region
      _
    $region29: #{celeba_img_decoder_forward.12} parent=1 // pred_fallthru
      _
    %795 = vsyncpa [#allocation3], 1
    %796 = vsyncpa [#allocation5], 1

// kernel: celeba_img_decoder_forward.13
$region0: #{celeba_img_decoder_forward.13}
  #allocation0 [shape = 'u32[]', space=smem, size = 0x4, offset = 0x4, fixed_abs, tag = 'smem constant byte address 0x4 - core index']
  #allocation1 [shape = 'u32[144,128]{1,0:T(1,128)}', space=vmem, size = 0x12000, scoped, tag = 'internal scratch']
  %s0 = inlined_call_operand.vmem [shape: f32[32,64], index: 0, kind: input, shape index: {}]
  %s1 = inlined_call_operand.hbm [shape: bf16[64,64], index: 1, kind: input, shape index: {}]
  %s2 = inlined_call_operand.hbm [shape: f32[1,64], index: 2, kind: input, shape index: {}]
  %s3 = inlined_call_operand.hbm [shape: f32[1,64], index: 3, kind: input, shape index: {}]
  %s4 = inlined_call_operand.hbm [shape: f32[1,64], index: 4, kind: input, shape index: {}]
  %s5 = inlined_call_operand.hbm [shape: f32[1,64], index: 5, kind: input, shape index: {}]
  %s6 = inlined_call_operand.vmem [shape: f32[32,64], index: 6, kind: output, shape index: {}]
  %s7 = sld [smem:[#allocation0]]
  $region54: #{celeba_img_decoder_forward.13} parent=0
    _
  %s9 = ssub.s32 1, %s7
  %s10 = scalar_select 0, %s9, %s7
  $region1: #{celeba_img_decoder_forward.13} parent=0
    #allocation2 [shape = 'u8[16384]{0}', space=vmem, size = 0x4000, scoped, tag = 'input window, operand 1, single buffered']
    #allocation3 [shape = 's32[1]{0}', space=sflag, size = 0x4, scoped, tag = 'scoped memory for celeba_img_decoder_forward.13']
    #allocation4 [shape = 'u8[512]{0}', space=vmem, size = 0x400, scoped, tag = 'input window, operand 2, single buffered']
    #allocation5 [shape = 's32[1]{0}', space=sflag, size = 0x4, scoped, tag = 'scoped memory for celeba_img_decoder_forward.13']
    #allocation6 [shape = 'u8[512]{0}', space=vmem, size = 0x400, scoped, tag = 'input window, operand 3, single buffered']
    #allocation7 [shape = 'u8[512]{0}', space=vmem, size = 0x400, scoped, tag = 'input window, operand 4, single buffered']
    #allocation8 [shape = 's32[1]{0}', space=sflag, size = 0x4, scoped, tag = 'scoped memory for celeba_img_decoder_forward.13']
    #allocation9 [shape = 'u8[512]{0}', space=vmem, size = 0x400, scoped, tag = 'input window, operand 5, single buffered']
    %11 = vsyncpa [#allocation3], 0
    %12 = vsyncpa [#allocation5], 0
    %13 = vsyncpa [#allocation8], 0
    // Predicated region
    $region2: #{celeba_img_decoder_forward.13} parent=1 // pred_check
      _
    $region3: #{celeba_img_decoder_forward.13} parent=1 // pred_check_branch
      %15 = sbr.rel (0) target = $region5
    $region4: #{celeba_img_decoder_forward.13} parent=1 // pred_region
      _
    $region5: #{celeba_img_decoder_forward.13} parent=1 // pred_fallthru
      _
    // Predicated region
    $region6: #{celeba_img_decoder_forward.13} parent=1 // pred_check
      _
    $region7: #{celeba_img_decoder_forward.13} parent=1 // pred_check_branch
      %17 = sbr.rel (0) target = $region9
    $region8: #{celeba_img_decoder_forward.13} parent=1 // pred_region
      %s19 = ssub.s32 512, 512
      %20 = vsyncadd [#allocation3], %s19
      %s21 = sshll.u32 [#allocation2], 4
      %s22 = int_to_ptr.vmem [resolvable:$true] %s21
      %27 = dma.hbm_to_vmem [thread:$0]  %s1, 512, %s22, [#allocation3], 64, 64, 4
    $region9: #{celeba_img_decoder_forward.13} parent=1 // pred_fallthru
      _
    // Predicated region
    $region10: #{celeba_img_decoder_forward.13} parent=1 // pred_check
      _
    $region11: #{celeba_img_decoder_forward.13} parent=1 // pred_check_branch
      %29 = sbr.rel (0) target = $region13
    $region12: #{celeba_img_decoder_forward.13} parent=1 // pred_region
      %s31 = ssub.s32 16, 16
      %32 = vsyncadd [#allocation5], %s31
      %s34 = sshll.u32 [#allocation4], 4
      %s35 = int_to_ptr.vmem [resolvable:$true] %s34
      %37 = dma.hbm_to_vmem [thread:$0]  %s2, 16, %s35, [#allocation5]
    $region13: #{celeba_img_decoder_forward.13} parent=1 // pred_fallthru
      _
    // Predicated region
    $region14: #{celeba_img_decoder_forward.13} parent=1 // pred_check
      _
    $region15: #{celeba_img_decoder_forward.13} parent=1 // pred_check_branch
      %39 = sbr.rel (0) target = $region17
    $region16: #{celeba_img_decoder_forward.13} parent=1 // pred_region
      %s41 = ssub.s32 16, 16
      %42 = vsyncadd [#allocation5], %s41
      %s44 = sshll.u32 [#allocation6], 4
      %s45 = int_to_ptr.vmem [resolvable:$true] %s44
      %47 = dma.hbm_to_vmem [thread:$0]  %s3, 16, %s45, [#allocation5]
    $region17: #{celeba_img_decoder_forward.13} parent=1 // pred_fallthru
      _
    // Predicated region
    $region18: #{celeba_img_decoder_forward.13} parent=1 // pred_check
      _
    $region19: #{celeba_img_decoder_forward.13} parent=1 // pred_check_branch
      %49 = sbr.rel (0) target = $region21
    $region20: #{celeba_img_decoder_forward.13} parent=1 // pred_region
      %s51 = ssub.s32 16, 16
      %52 = vsyncadd [#allocation8], %s51
      %s54 = sshll.u32 [#allocation7], 4
      %s55 = int_to_ptr.vmem [resolvable:$true] %s54
      %57 = dma.hbm_to_vmem [thread:$0]  %s4, 16, %s55, [#allocation8]
    $region21: #{celeba_img_decoder_forward.13} parent=1 // pred_fallthru
      _
    // Predicated region
    $region22: #{celeba_img_decoder_forward.13} parent=1 // pred_check
      _
    $region23: #{celeba_img_decoder_forward.13} parent=1 // pred_check_branch
      %59 = sbr.rel (0) target = $region25
    $region24: #{celeba_img_decoder_forward.13} parent=1 // pred_region
      %s61 = ssub.s32 16, 16
      %62 = vsyncadd [#allocation8], %s61
      %s64 = sshll.u32 [#allocation9], 4
      %s65 = int_to_ptr.vmem [resolvable:$true] %s64
      %67 = dma.hbm_to_vmem [thread:$0]  %s5, 16, %s65, [#allocation8]
    $region25: #{celeba_img_decoder_forward.13} parent=1 // pred_fallthru
      _
    // Predicated region
    $region26: #{celeba_img_decoder_forward.13} parent=1 // pred_check
      _
    $region27: #{celeba_img_decoder_forward.13} parent=1 // pred_check_branch
      %69 = sbr.rel (0) target = $region29
    $region28: #{celeba_img_decoder_forward.13} parent=1 // pred_region
      %70 = dma.done [#allocation3], 512
    $region29: #{celeba_img_decoder_forward.13} parent=1 // pred_fallthru
      _
    // Predicated region
    $region30: #{celeba_img_decoder_forward.13} parent=1 // pred_check
      _
    $region31: #{celeba_img_decoder_forward.13} parent=1 // pred_check_branch
      %72 = sbr.rel (0) target = $region33
    $region32: #{celeba_img_decoder_forward.13} parent=1 // pred_region
      %73 = dma.done [#allocation5], 16
    $region33: #{celeba_img_decoder_forward.13} parent=1 // pred_fallthru
      _
    // Predicated region
    $region34: #{celeba_img_decoder_forward.13} parent=1 // pred_check
      _
    $region35: #{celeba_img_decoder_forward.13} parent=1 // pred_check_branch
      %75 = sbr.rel (0) target = $region37
    $region36: #{celeba_img_decoder_forward.13} parent=1 // pred_region
      %76 = dma.done [#allocation5], 16
    $region37: #{celeba_img_decoder_forward.13} parent=1 // pred_fallthru
      _
    // Predicated region
    $region38: #{celeba_img_decoder_forward.13} parent=1 // pred_check
      _
    $region39: #{celeba_img_decoder_forward.13} parent=1 // pred_check_branch
      %78 = sbr.rel (0) target = $region41
    $region40: #{celeba_img_decoder_forward.13} parent=1 // pred_region
      %79 = dma.done [#allocation8], 16
    $region41: #{celeba_img_decoder_forward.13} parent=1 // pred_fallthru
      _
    // Predicated region
    $region42: #{celeba_img_decoder_forward.13} parent=1 // pred_check
      _
    $region43: #{celeba_img_decoder_forward.13} parent=1 // pred_check_branch
      %81 = sbr.rel (0) target = $region45
    $region44: #{celeba_img_decoder_forward.13} parent=1 // pred_region
      %82 = dma.done [#allocation8], 16
    $region45: #{celeba_img_decoder_forward.13} parent=1 // pred_fallthru
      _
    %v84 = vld [vmem:[%s0] sm:$0xff]
    %v85 = vld [vmem:[%s0 + $0x8] sm:$0xff]
    %v86 = vld [vmem:[%s0 + $0x10] sm:$0xff]
    %v87 = vld [vmem:[%s0 + $0x18] sm:$0xff]
    %v88 = vld [vmem:[#allocation4] sm:$0x1]
    %v90 = vlaneseq
    %v91 = vshrl.u32 %v90, 7
    %v92 = vsub.s32 0, %v91
    %v93 = vrot.slane %v88, %v92
    %v95 = vmul.f32 %v84, %v93
    %v96 = vmul.f32 %v85, %v93
    %v97 = vmul.f32 %v86, %v93
    %v98 = vmul.f32 %v87, %v93
    %v99 = vld [vmem:[#allocation6] sm:$0x1]
    %v101 = vlaneseq
    %v102 = vshrl.u32 %v101, 7
    %v103 = vsub.s32 0, %v102
    %v104 = vrot.slane %v99, %v103
    %v106 = vadd.f32 %v95, %v104
    %v107 = vadd.f32 %v96, %v104
    %v108 = vadd.f32 %v97, %v104
    %v109 = vadd.f32 %v98, %v104
    %v110 = vmax.f32 %v106, 0.0
    %v111 = vmax.f32 %v107, 0.0
    %v112 = vmax.f32 %v108, 0.0
    %v113 = vmax.f32 %v109, 0.0
    %v114 = vpack.c.bf16 %v111, %v110
    %v115 = vpack.c.bf16 %v113, %v112
    %v116 = vld [vmem:[#allocation2] sm:$0xf]
    %v117 = vld [vmem:[#allocation2 + $0x4] sm:$0xf]
    %v118 = vld [vmem:[#allocation2 + $0x8] sm:$0xf]
    %v119 = vld [vmem:[#allocation2 + $0xc] sm:$0xf]
    %v120 = vld [vmem:[#allocation2 + $0x10] sm:$0xf]
    %v121 = vld [vmem:[#allocation2 + $0x14] sm:$0xf]
    %v122 = vld [vmem:[#allocation2 + $0x18] sm:$0xf]
    %v123 = vld [vmem:[#allocation2 + $0x1c] sm:$0xf]
    %v132 = vunpack.c.l.b16 %v116
    %v133 = vunpack.c.l.b16 %v117
    %v134 = vunpack.c.l.b16 %v118
    %v135 = vunpack.c.l.b16 %v119
    %v136 = vunpack.c.l.b16 %v120
    %v137 = vunpack.c.l.b16 %v121
    %v138 = vunpack.c.l.b16 %v122
    %v139 = vunpack.c.l.b16 %v123
    %v140 = vpack.c.b16 %v133, %v132
    %v141 = vpack.c.b16 %v135, %v134
    %v142 = vpack.c.b16 %v137, %v136
    %v143 = vpack.c.b16 %v139, %v138
    %vm148 = vcmask 523264
    %v150 = vsel %vm148, %v114, 0
    %v153 = vsel %vm148, %v115, 0
    %155 = vmatprep.subr.bf16.mxu0 0
    %156 = vmatpush1.bf16.msra.mxu0 %v140
    %157 = vmatprep.subr.bf16.mxu0 0
    %158 = vmatpush1.bf16.msra.mxu0 %v141
    %159 = vmatprep.subr.bf16.mxu0 0
    %160 = vmatpush1.bf16.msra.mxu0 %v142
    %161 = vmatprep.subr.bf16.mxu0 0
    %162 = vmatpush1.bf16.msra.mxu0 %v143
    %163 = vmatprep.subr.bf16.mxu0 0
    %164 = vmatpush1.bf16.msra.mxu0 0
    %165 = vmatprep.subr.bf16.mxu0 0
    %166 = vmatpush1.bf16.msra.mxu0 0
    %167 = vmatprep.subr.bf16.mxu0 0
    %168 = vmatpush1.bf16.msra.mxu0 0
    %169 = vmatprep.subr.bf16.mxu0 0
    %170 = vmatpush1.bf16.msra.mxu0 0
    %171 = vmatprep.subr.bf16.mxu0 0
    %172 = vmatpush1.bf16.msra.mxu0 0
    %173 = vmatprep.subr.bf16.mxu0 0
    %174 = vmatpush1.bf16.msra.mxu0 0
    %175 = vmatprep.subr.bf16.mxu0 0
    %176 = vmatpush1.bf16.msra.mxu0 0
    %177 = vmatprep.subr.bf16.mxu0 0
    %178 = vmatpush1.bf16.msra.mxu0 0
    %179 = vmatprep.subr.bf16.mxu0 0
    %180 = vmatpush1.bf16.msra.mxu0 0
    %181 = vmatprep.subr.bf16.mxu0 0
    %182 = vmatpush1.bf16.msra.mxu0 0
    %183 = vmatprep.subr.bf16.mxu0 0
    %184 = vmatpush1.bf16.msra.mxu0 0
    %185 = vmatprep.subr.bf16.mxu0 0
    %186 = vmatpush1.bf16.msra.mxu0 0
    %187 = vmatprep.mubr.bf16.mxu0 0
    %188 = vmatmul.mubr.bf16.gmra.mrb[0].mxu0 %v150
    %v189 = vpop.f32.mrb[0].mxu0
    %v190 = vadd.f32 0.0, %v189
    %v191 = vpop.f32.mrb[0].mxu0
    %v192 = vpop.f32.mrb[0].mxu0
    %v193 = vadd.f32 0.0, %v192
    %v194 = vpop.f32.mrb[0].mxu0
    %195 = vmatprep.mubr.bf16.mxu0 0
    %196 = vmatmul.mubr.bf16.gmra.mrb[0].mxu0 %v153
    %v197 = vpop.f32.mrb[0].mxu0
    %v198 = vadd.f32 0.0, %v197
    %v199 = vpop.f32.mrb[0].mxu0
    %v200 = vpop.f32.mrb[0].mxu0
    %v201 = vadd.f32 0.0, %v200
    %v202 = vpop.f32.mrb[0].mxu0
    %203 = vdwg.mxu0
    %v204 = vld [vmem:[#allocation7] sm:$0x1]
    %v206 = vlaneseq
    %v207 = vshrl.u32 %v206, 7
    %v208 = vsub.s32 0, %v207
    %v209 = vrot.slane %v204, %v208
    %v211 = vmul.f32 %v190, %v209
    %v212 = vmul.f32 %v193, %v209
    %v213 = vmul.f32 %v198, %v209
    %v214 = vmul.f32 %v201, %v209
    %v215 = vld [vmem:[#allocation9] sm:$0x1]
    %v217 = vlaneseq
    %v218 = vshrl.u32 %v217, 7
    %v219 = vsub.s32 0, %v218
    %v220 = vrot.slane %v215, %v219
    %v222 = vadd.f32 %v211, %v220
    %v223 = vadd.f32 %v212, %v220
    %v224 = vadd.f32 %v213, %v220
    %v225 = vadd.f32 %v214, %v220
    %v226 = vmax.f32 %v222, 0.0
    %v227 = vmax.f32 %v223, 0.0
    %v228 = vmax.f32 %v224, 0.0
    %v229 = vmax.f32 %v225, 0.0
    %230 = vst.msk [vmem:[%s6] sm:$0xff] %vm148, %v226
    %231 = vst.msk [vmem:[%s6 + $0x8] sm:$0xff] %vm148, %v227
    %232 = vst.msk [vmem:[%s6 + $0x10] sm:$0xff] %vm148, %v228
    %233 = vst.msk [vmem:[%s6 + $0x18] sm:$0xff] %vm148, %v229
    // Predicated region
    $region46: #{celeba_img_decoder_forward.13} parent=1 // pred_check
      _
    $region47: #{celeba_img_decoder_forward.13} parent=1 // pred_check_branch
      %235 = sbr.rel (0) target = $region49
    $region48: #{celeba_img_decoder_forward.13} parent=1 // pred_region
      _
    $region49: #{celeba_img_decoder_forward.13} parent=1 // pred_fallthru
      _
    // Predicated region
    $region50: #{celeba_img_decoder_forward.13} parent=1 // pred_check
      _
    $region51: #{celeba_img_decoder_forward.13} parent=1 // pred_check_branch
      %237 = sbr.rel (0) target = $region53
    $region52: #{celeba_img_decoder_forward.13} parent=1 // pred_region
      _
    $region53: #{celeba_img_decoder_forward.13} parent=1 // pred_fallthru
      _
    %238 = vsyncpa [#allocation3], 1
    %239 = vsyncpa [#allocation5], 1
    %240 = vsyncpa [#allocation8], 1

// kernel: celeba_img_decoder_forward.15
$region0: #{celeba_img_decoder_forward.15}
  #allocation0 [shape = 'u32[]', space=smem, size = 0x4, offset = 0x4, fixed_abs, tag = 'smem constant byte address 0x4 - core index']
  #allocation1 [shape = 'u32[144,128]{1,0:T(1,128)}', space=vmem, size = 0x12000, scoped, tag = 'internal scratch']
  %s0 = inlined_call_operand.vmem [shape: f32[128,48], index: 0, kind: input, shape index: {}]
  %s1 = inlined_call_operand.vmem [shape: bf16[48,48], index: 1, kind: input, shape index: {}]
  %s2 = inlined_call_operand.vmem [shape: f32[1,48], index: 2, kind: input, shape index: {}]
  %s3 = inlined_call_operand.vmem [shape: f32[1,48], index: 3, kind: input, shape index: {}]
  %s4 = inlined_call_operand.vmem [shape: f32[1,48], index: 4, kind: input, shape index: {}]
  %s5 = inlined_call_operand.vmem [shape: f32[1,48], index: 5, kind: input, shape index: {}]
  %s6 = inlined_call_operand.vmem [shape: f32[128,48], index: 6, kind: output, shape index: {}]
  %s7 = sld [smem:[#allocation0]]
  $region34: #{celeba_img_decoder_forward.15} parent=0
    _
  %s9 = ssub.s32 1, %s7
  %s10 = scalar_select 0, %s9, %s7
  // Predicated region
  $region2: #{celeba_img_decoder_forward.15} parent=0 // pred_check
    _
  $region3: #{celeba_img_decoder_forward.15} parent=0 // pred_check_branch
    %12 = sbr.rel (0) target = $region5
  $region4: #{celeba_img_decoder_forward.15} parent=0 // pred_region
    _
  $region5: #{celeba_img_decoder_forward.15} parent=0 // pred_fallthru
    _
  // Predicated region
  $region6: #{celeba_img_decoder_forward.15} parent=0 // pred_check
    _
  $region7: #{celeba_img_decoder_forward.15} parent=0 // pred_check_branch
    %14 = sbr.rel (0) target = $region9
  $region8: #{celeba_img_decoder_forward.15} parent=0 // pred_region
    _
  $region9: #{celeba_img_decoder_forward.15} parent=0 // pred_fallthru
    _
  // Predicated region
  $region10: #{celeba_img_decoder_forward.15} parent=0 // pred_check
    _
  $region11: #{celeba_img_decoder_forward.15} parent=0 // pred_check_branch
    %16 = sbr.rel (0) target = $region13
  $region12: #{celeba_img_decoder_forward.15} parent=0 // pred_region
    _
  $region13: #{celeba_img_decoder_forward.15} parent=0 // pred_fallthru
    _
  // Predicated region
  $region14: #{celeba_img_decoder_forward.15} parent=0 // pred_check
    _
  $region15: #{celeba_img_decoder_forward.15} parent=0 // pred_check_branch
    %18 = sbr.rel (0) target = $region17
  $region16: #{celeba_img_decoder_forward.15} parent=0 // pred_region
    _
  $region17: #{celeba_img_decoder_forward.15} parent=0 // pred_fallthru
    _
  // Predicated region
  $region18: #{celeba_img_decoder_forward.15} parent=0 // pred_check
    _
  $region19: #{celeba_img_decoder_forward.15} parent=0 // pred_check_branch
    %20 = sbr.rel (0) target = $region21
  $region20: #{celeba_img_decoder_forward.15} parent=0 // pred_region
    _
  $region21: #{celeba_img_decoder_forward.15} parent=0 // pred_fallthru
    _
  // Predicated region
  $region22: #{celeba_img_decoder_forward.15} parent=0 // pred_check
    _
  $region23: #{celeba_img_decoder_forward.15} parent=0 // pred_check_branch
    %22 = sbr.rel (0) target = $region25
  $region24: #{celeba_img_decoder_forward.15} parent=0 // pred_region
    _
  $region25: #{celeba_img_decoder_forward.15} parent=0 // pred_fallthru
    _
  %v24 = vld [vmem:[%s0] sm:$0xff]
  %v25 = vld [vmem:[%s0 + $0x8] sm:$0xff]
  %v26 = vld [vmem:[%s0 + $0x10] sm:$0xff]
  %v27 = vld [vmem:[%s0 + $0x18] sm:$0xff]
  %v28 = vld [vmem:[%s0 + $0x20] sm:$0xff]
  %v29 = vld [vmem:[%s0 + $0x28] sm:$0xff]
  %v30 = vld [vmem:[%s0 + $0x30] sm:$0xff]
  %v31 = vld [vmem:[%s0 + $0x38] sm:$0xff]
  %v32 = vld [vmem:[%s0 + $0x40] sm:$0xff]
  %v33 = vld [vmem:[%s0 + $0x48] sm:$0xff]
  %v34 = vld [vmem:[%s0 + $0x50] sm:$0xff]
  %v35 = vld [vmem:[%s0 + $0x58] sm:$0xff]
  %v36 = vld [vmem:[%s0 + $0x60] sm:$0xff]
  %v37 = vld [vmem:[%s0 + $0x68] sm:$0xff]
  %v38 = vld [vmem:[%s0 + $0x70] sm:$0xff]
  %v39 = vld [vmem:[%s0 + $0x78] sm:$0xff]
  %v40 = vld [vmem:[%s2] sm:$0x1]
  %v42 = vlaneseq
  %v43 = vshrl.u32 %v42, 7
  %v44 = vsub.s32 0, %v43
  %v45 = vrot.slane %v40, %v44
  %v47 = vmul.f32 %v24, %v45
  %v48 = vmul.f32 %v25, %v45
  %v49 = vmul.f32 %v26, %v45
  %v50 = vmul.f32 %v27, %v45
  %v51 = vmul.f32 %v28, %v45
  %v52 = vmul.f32 %v29, %v45
  %v53 = vmul.f32 %v30, %v45
  %v54 = vmul.f32 %v31, %v45
  %v55 = vmul.f32 %v32, %v45
  %v56 = vmul.f32 %v33, %v45
  %v57 = vmul.f32 %v34, %v45
  %v58 = vmul.f32 %v35, %v45
  %v59 = vmul.f32 %v36, %v45
  %v60 = vmul.f32 %v37, %v45
  %v61 = vmul.f32 %v38, %v45
  %v62 = vmul.f32 %v39, %v45
  %v63 = vld [vmem:[%s3] sm:$0x1]
  %v65 = vlaneseq
  %v66 = vshrl.u32 %v65, 7
  %v67 = vsub.s32 0, %v66
  %v68 = vrot.slane %v63, %v67
  %v70 = vadd.f32 %v47, %v68
  %v71 = vadd.f32 %v48, %v68
  %v72 = vadd.f32 %v49, %v68
  %v73 = vadd.f32 %v50, %v68
  %v74 = vadd.f32 %v51, %v68
  %v75 = vadd.f32 %v52, %v68
  %v76 = vadd.f32 %v53, %v68
  %v77 = vadd.f32 %v54, %v68
  %v78 = vadd.f32 %v55, %v68
  %v79 = vadd.f32 %v56, %v68
  %v80 = vadd.f32 %v57, %v68
  %v81 = vadd.f32 %v58, %v68
  %v82 = vadd.f32 %v59, %v68
  %v83 = vadd.f32 %v60, %v68
  %v84 = vadd.f32 %v61, %v68
  %v85 = vadd.f32 %v62, %v68
  %v86 = vmax.f32 %v70, 0.0
  %v87 = vmax.f32 %v71, 0.0
  %v88 = vmax.f32 %v72, 0.0
  %v89 = vmax.f32 %v73, 0.0
  %v90 = vmax.f32 %v74, 0.0
  %v91 = vmax.f32 %v75, 0.0
  %v92 = vmax.f32 %v76, 0.0
  %v93 = vmax.f32 %v77, 0.0
  %v94 = vmax.f32 %v78, 0.0
  %v95 = vmax.f32 %v79, 0.0
  %v96 = vmax.f32 %v80, 0.0
  %v97 = vmax.f32 %v81, 0.0
  %v98 = vmax.f32 %v82, 0.0
  %v99 = vmax.f32 %v83, 0.0
  %v100 = vmax.f32 %v84, 0.0
  %v101 = vmax.f32 %v85, 0.0
  %v102 = vpack.c.bf16 %v87, %v86
  %v103 = vpack.c.bf16 %v89, %v88
  %v104 = vpack.c.bf16 %v91, %v90
  %v105 = vpack.c.bf16 %v93, %v92
  %v106 = vpack.c.bf16 %v95, %v94
  %v107 = vpack.c.bf16 %v97, %v96
  %v108 = vpack.c.bf16 %v99, %v98
  %v109 = vpack.c.bf16 %v101, %v100
  %v110 = vld [vmem:[%s1] sm:$0xf]
  %v111 = vld [vmem:[%s1 + $0x4] sm:$0xf]
  %v112 = vld [vmem:[%s1 + $0x8] sm:$0xf]
  %v113 = vld [vmem:[%s1 + $0xc] sm:$0xf]
  %v114 = vld [vmem:[%s1 + $0x10] sm:$0xf]
  %v115 = vld [vmem:[%s1 + $0x14] sm:$0xf]
  %v122 = vunpack.c.l.b16 %v110
  %v123 = vunpack.c.l.b16 %v111
  %v124 = vunpack.c.l.b16 %v112
  %v125 = vunpack.c.l.b16 %v113
  %v126 = vunpack.c.l.b16 %v114
  %v127 = vunpack.c.l.b16 %v115
  %v128 = vpack.c.b16 %v123, %v122
  %v129 = vpack.c.b16 %v125, %v124
  %v130 = vpack.c.b16 %v127, %v126
  %vm134 = vcmask 392192
  %v136 = vsel %vm134, %v102, 0
  %v139 = vsel %vm134, %v103, 0
  %v142 = vsel %vm134, %v104, 0
  %v145 = vsel %vm134, %v105, 0
  %v148 = vsel %vm134, %v106, 0
  %v151 = vsel %vm134, %v107, 0
  %v154 = vsel %vm134, %v108, 0
  %v157 = vsel %vm134, %v109, 0
  %159 = vmatprep.subr.bf16.mxu0 0
  %160 = vmatpush1.bf16.msra.mxu0 %v128
  %161 = vmatprep.subr.bf16.mxu0 0
  %162 = vmatpush1.bf16.msra.mxu0 %v129
  %163 = vmatprep.subr.bf16.mxu0 0
  %164 = vmatpush1.bf16.msra.mxu0 %v130
  %165 = vmatprep.subr.bf16.mxu0 0
  %166 = vmatpush1.bf16.msra.mxu0 0
  %167 = vmatprep.subr.bf16.mxu0 0
  %168 = vmatpush1.bf16.msra.mxu0 0
  %169 = vmatprep.subr.bf16.mxu0 0
  %170 = vmatpush1.bf16.msra.mxu0 0
  %171 = vmatprep.subr.bf16.mxu0 0
  %172 = vmatpush1.bf16.msra.mxu0 0
  %173 = vmatprep.subr.bf16.mxu0 0
  %174 = vmatpush1.bf16.msra.mxu0 0
  %175 = vmatprep.subr.bf16.mxu0 0
  %176 = vmatpush1.bf16.msra.mxu0 0
  %177 = vmatprep.subr.bf16.mxu0 0
  %178 = vmatpush1.bf16.msra.mxu0 0
  %179 = vmatprep.subr.bf16.mxu0 0
  %180 = vmatpush1.bf16.msra.mxu0 0
  %181 = vmatprep.subr.bf16.mxu0 0
  %182 = vmatpush1.bf16.msra.mxu0 0
  %183 = vmatprep.subr.bf16.mxu0 0
  %184 = vmatpush1.bf16.msra.mxu0 0
  %185 = vmatprep.subr.bf16.mxu0 0
  %186 = vmatpush1.bf16.msra.mxu0 0
  %187 = vmatprep.subr.bf16.mxu0 0
  %188 = vmatpush1.bf16.msra.mxu0 0
  %189 = vmatprep.subr.bf16.mxu0 0
  %190 = vmatpush1.bf16.msra.mxu0 0
  %191 = vmatprep.mubr.bf16.mxu0 0
  %192 = vmatmul.mubr.bf16.gmra.mrb[0].mxu0 %v136
  %v193 = vpop.f32.mrb[0].mxu0
  %v194 = vadd.f32 0.0, %v193
  %v195 = vpop.f32.mrb[0].mxu0
  %v196 = vpop.f32.mrb[0].mxu0
  %v197 = vadd.f32 0.0, %v196
  %v198 = vpop.f32.mrb[0].mxu0
  %199 = vmatprep.mubr.bf16.mxu0 0
  %200 = vmatmul.mubr.bf16.gmra.mrb[0].mxu0 %v139
  %v201 = vpop.f32.mrb[0].mxu0
  %v202 = vadd.f32 0.0, %v201
  %v203 = vpop.f32.mrb[0].mxu0
  %v204 = vpop.f32.mrb[0].mxu0
  %v205 = vadd.f32 0.0, %v204
  %v206 = vpop.f32.mrb[0].mxu0
  %207 = vmatprep.mubr.bf16.mxu0 0
  %208 = vmatmul.mubr.bf16.gmra.mrb[0].mxu0 %v142
  %v209 = vpop.f32.mrb[0].mxu0
  %v210 = vadd.f32 0.0, %v209
  %v211 = vpop.f32.mrb[0].mxu0
  %v212 = vpop.f32.mrb[0].mxu0
  %v213 = vadd.f32 0.0, %v212
  %v214 = vpop.f32.mrb[0].mxu0
  %215 = vmatprep.mubr.bf16.mxu0 0
  %216 = vmatmul.mubr.bf16.gmra.mrb[0].mxu0 %v145
  %v217 = vpop.f32.mrb[0].mxu0
  %v218 = vadd.f32 0.0, %v217
  %v219 = vpop.f32.mrb[0].mxu0
  %v220 = vpop.f32.mrb[0].mxu0
  %v221 = vadd.f32 0.0, %v220
  %v222 = vpop.f32.mrb[0].mxu0
  %223 = vmatprep.mubr.bf16.mxu0 0
  %224 = vmatmul.mubr.bf16.gmra.mrb[0].mxu0 %v148
  %v225 = vpop.f32.mrb[0].mxu0
  %v226 = vadd.f32 0.0, %v225
  %v227 = vpop.f32.mrb[0].mxu0
  %v228 = vpop.f32.mrb[0].mxu0
  %v229 = vadd.f32 0.0, %v228
  %v230 = vpop.f32.mrb[0].mxu0
  %231 = vmatprep.mubr.bf16.mxu0 0
  %232 = vmatmul.mubr.bf16.gmra.mrb[0].mxu0 %v151
  %v233 = vpop.f32.mrb[0].mxu0
  %v234 = vadd.f32 0.0, %v233
  %v235 = vpop.f32.mrb[0].mxu0
  %v236 = vpop.f32.mrb[0].mxu0
  %v237 = vadd.f32 0.0, %v236
  %v238 = vpop.f32.mrb[0].mxu0
  %239 = vmatprep.mubr.bf16.mxu0 0
  %240 = vmatmul.mubr.bf16.gmra.mrb[0].mxu0 %v154
  %v241 = vpop.f32.mrb[0].mxu0
  %v242 = vadd.f32 0.0, %v241
  %v243 = vpop.f32.mrb[0].mxu0
  %v244 = vpop.f32.mrb[0].mxu0
  %v245 = vadd.f32 0.0, %v244
  %v246 = vpop.f32.mrb[0].mxu0
  %247 = vmatprep.mubr.bf16.mxu0 0
  %248 = vmatmul.mubr.bf16.gmra.mrb[0].mxu0 %v157
  %v249 = vpop.f32.mrb[0].mxu0
  %v250 = vadd.f32 0.0, %v249
  %v251 = vpop.f32.mrb[0].mxu0
  %v252 = vpop.f32.mrb[0].mxu0
  %v253 = vadd.f32 0.0, %v252
  %v254 = vpop.f32.mrb[0].mxu0
  %255 = vdwg.mxu0
  %v256 = vld [vmem:[%s4] sm:$0x1]
  %v258 = vlaneseq
  %v259 = vshrl.u32 %v258, 7
  %v260 = vsub.s32 0, %v259
  %v261 = vrot.slane %v256, %v260
  %v263 = vmul.f32 %v194, %v261
  %v264 = vmul.f32 %v197, %v261
  %v265 = vmul.f32 %v202, %v261
  %v266 = vmul.f32 %v205, %v261
  %v267 = vmul.f32 %v210, %v261
  %v268 = vmul.f32 %v213, %v261
  %v269 = vmul.f32 %v218, %v261
  %v270 = vmul.f32 %v221, %v261
  %v271 = vmul.f32 %v226, %v261
  %v272 = vmul.f32 %v229, %v261
  %v273 = vmul.f32 %v234, %v261
  %v274 = vmul.f32 %v237, %v261
  %v275 = vmul.f32 %v242, %v261
  %v276 = vmul.f32 %v245, %v261
  %v277 = vmul.f32 %v250, %v261
  %v278 = vmul.f32 %v253, %v261
  %v279 = vld [vmem:[%s5] sm:$0x1]
  %v281 = vlaneseq
  %v282 = vshrl.u32 %v281, 7
  %v283 = vsub.s32 0, %v282
  %v284 = vrot.slane %v279, %v283
  %v286 = vadd.f32 %v263, %v284
  %v287 = vadd.f32 %v264, %v284
  %v288 = vadd.f32 %v265, %v284
  %v289 = vadd.f32 %v266, %v284
  %v290 = vadd.f32 %v267, %v284
  %v291 = vadd.f32 %v268, %v284
  %v292 = vadd.f32 %v269, %v284
  %v293 = vadd.f32 %v270, %v284
  %v294 = vadd.f32 %v271, %v284
  %v295 = vadd.f32 %v272, %v284
  %v296 = vadd.f32 %v273, %v284
  %v297 = vadd.f32 %v274, %v284
  %v298 = vadd.f32 %v275, %v284
  %v299 = vadd.f32 %v276, %v284
  %v300 = vadd.f32 %v277, %v284
  %v301 = vadd.f32 %v278, %v284
  %v302 = vmax.f32 %v286, 0.0
  %v303 = vmax.f32 %v287, 0.0
  %v304 = vmax.f32 %v288, 0.0
  %v305 = vmax.f32 %v289, 0.0
  %v306 = vmax.f32 %v290, 0.0
  %v307 = vmax.f32 %v291, 0.0
  %v308 = vmax.f32 %v292, 0.0
  %v309 = vmax.f32 %v293, 0.0
  %v310 = vmax.f32 %v294, 0.0
  %v311 = vmax.f32 %v295, 0.0
  %v312 = vmax.f32 %v296, 0.0
  %v313 = vmax.f32 %v297, 0.0
  %v314 = vmax.f32 %v298, 0.0
  %v315 = vmax.f32 %v299, 0.0
  %v316 = vmax.f32 %v300, 0.0
  %v317 = vmax.f32 %v301, 0.0
  %318 = vst.msk [vmem:[%s6] sm:$0xff] %vm134, %v302
  %319 = vst.msk [vmem:[%s6 + $0x8] sm:$0xff] %vm134, %v303
  %320 = vst.msk [vmem:[%s6 + $0x10] sm:$0xff] %vm134, %v304
  %321 = vst.msk [vmem:[%s6 + $0x18] sm:$0xff] %vm134, %v305
  %322 = vst.msk [vmem:[%s6 + $0x20] sm:$0xff] %vm134, %v306
  %323 = vst.msk [vmem:[%s6 + $0x28] sm:$0xff] %vm134, %v307
  %324 = vst.msk [vmem:[%s6 + $0x30] sm:$0xff] %vm134, %v308
  %325 = vst.msk [vmem:[%s6 + $0x38] sm:$0xff] %vm134, %v309
  %326 = vst.msk [vmem:[%s6 + $0x40] sm:$0xff] %vm134, %v310
  %327 = vst.msk [vmem:[%s6 + $0x48] sm:$0xff] %vm134, %v311
  %328 = vst.msk [vmem:[%s6 + $0x50] sm:$0xff] %vm134, %v312
  %329 = vst.msk [vmem:[%s6 + $0x58] sm:$0xff] %vm134, %v313
  %330 = vst.msk [vmem:[%s6 + $0x60] sm:$0xff] %vm134, %v314
  %331 = vst.msk [vmem:[%s6 + $0x68] sm:$0xff] %vm134, %v315
  %332 = vst.msk [vmem:[%s6 + $0x70] sm:$0xff] %vm134, %v316
  %333 = vst.msk [vmem:[%s6 + $0x78] sm:$0xff] %vm134, %v317
  // Predicated region
  $region26: #{celeba_img_decoder_forward.15} parent=0 // pred_check
    _
  $region27: #{celeba_img_decoder_forward.15} parent=0 // pred_check_branch
    %335 = sbr.rel (0) target = $region29
  $region28: #{celeba_img_decoder_forward.15} parent=0 // pred_region
    _
  $region29: #{celeba_img_decoder_forward.15} parent=0 // pred_fallthru
    _
  // Predicated region
  $region30: #{celeba_img_decoder_forward.15} parent=0 // pred_check
    _
  $region31: #{celeba_img_decoder_forward.15} parent=0 // pred_check_branch
    %337 = sbr.rel (0) target = $region33
  $region32: #{celeba_img_decoder_forward.15} parent=0 // pred_region
    _
  $region33: #{celeba_img_decoder_forward.15} parent=0 // pred_fallthru
    _

// kernel: celeba_img_decoder_forward.14
$region0: #{celeba_img_decoder_forward.14}
  #allocation0 [shape = 'u32[]', space=smem, size = 0x4, offset = 0x4, fixed_abs, tag = 'smem constant byte address 0x4 - core index']
  #allocation1 [shape = 'u32[144,128]{1,0:T(1,128)}', space=vmem, size = 0x12000, scoped, tag = 'internal scratch']
  %s0 = inlined_call_operand.vmem [shape: f32[50,512], index: 0, kind: input, shape index: {}]
  %s1 = inlined_call_operand.vmem [shape: bf16[512,192], index: 1, kind: input, shape index: {}]
  %s2 = inlined_call_operand.vmem [shape: f32[1,192], index: 2, kind: input, shape index: {}]
  %s3 = inlined_call_operand.vmem [shape: f32[50,192], index: 3, kind: output, shape index: {}]
  %s4 = sld [smem:[#allocation0]]
  $region22: #{celeba_img_decoder_forward.14} parent=0
    _
  %s6 = ssub.s32 1, %s4
  %s7 = scalar_select 0, %s6, %s4
  // Predicated region
  $region2: #{celeba_img_decoder_forward.14} parent=0 // pred_check
    _
  $region3: #{celeba_img_decoder_forward.14} parent=0 // pred_check_branch
    %9 = sbr.rel (0) target = $region5
  $region4: #{celeba_img_decoder_forward.14} parent=0 // pred_region
    _
  $region5: #{celeba_img_decoder_forward.14} parent=0 // pred_fallthru
    _
  // Predicated region
  $region6: #{celeba_img_decoder_forward.14} parent=0 // pred_check
    _
  $region7: #{celeba_img_decoder_forward.14} parent=0 // pred_check_branch
    %11 = sbr.rel (0) target = $region9
  $region8: #{celeba_img_decoder_forward.14} parent=0 // pred_region
    _
  $region9: #{celeba_img_decoder_forward.14} parent=0 // pred_fallthru
    _
  // Predicated region
  $region10: #{celeba_img_decoder_forward.14} parent=0 // pred_check
    _
  $region11: #{celeba_img_decoder_forward.14} parent=0 // pred_check_branch
    %13 = sbr.rel (0) target = $region13
  $region12: #{celeba_img_decoder_forward.14} parent=0 // pred_region
    _
  $region13: #{celeba_img_decoder_forward.14} parent=0 // pred_fallthru
    _
  %v14 = vld [vmem:[%s0] sm:$0xff]
  %v15 = vld [vmem:[%s0 + $0x8] sm:$0xff]
  %v16 = vld [vmem:[%s0 + $0x10] sm:$0xff]
  %v17 = vld [vmem:[%s0 + $0x18] sm:$0xff]
  %v18 = vld [vmem:[%s0 + $0x20] sm:$0xff]
  %v19 = vld [vmem:[%s0 + $0x28] sm:$0xff]
  %v20 = vld [vmem:[%s0 + $0x30] sm:$0xff]
  %v21 = vld [vmem:[%s0 + $0x38] sm:$0xff]
  %v22 = vld [vmem:[%s0 + $0x40] sm:$0xff]
  %v23 = vld [vmem:[%s0 + $0x48] sm:$0xff]
  %v24 = vld [vmem:[%s0 + $0x50] sm:$0xff]
  %v25 = vld [vmem:[%s0 + $0x58] sm:$0xff]
  %v26 = vld [vmem:[%s0 + $0x60] sm:$0xff]
  %v27 = vld [vmem:[%s0 + $0x68] sm:$0xff]
  %v28 = vld [vmem:[%s0 + $0x70] sm:$0xff]
  %v29 = vld [vmem:[%s0 + $0x78] sm:$0xff]
  %v30 = vld [vmem:[%s0 + $0x80] sm:$0xff]
  %v31 = vld [vmem:[%s0 + $0x88] sm:$0xff]
  %v32 = vld [vmem:[%s0 + $0x90] sm:$0xff]
  %v33 = vld [vmem:[%s0 + $0x98] sm:$0xff]
  %v34 = vld [vmem:[%s0 + $0xa0] sm:$0xff]
  %v35 = vld [vmem:[%s0 + $0xa8] sm:$0xff]
  %v36 = vld [vmem:[%s0 + $0xb0] sm:$0xff]
  %v37 = vld [vmem:[%s0 + $0xb8] sm:$0xff]
  %v38 = vld [vmem:[%s0 + $0xc0] sm:$0x3]
  %v39 = vld [vmem:[%s0 + $0xc8] sm:$0x3]
  %v40 = vld [vmem:[%s0 + $0xd0] sm:$0x3]
  %v41 = vld [vmem:[%s0 + $0xd8] sm:$0x3]
  %v42 = vpack.c.bf16 %v18, %v14
  %v43 = vpack.c.bf16 %v19, %v15
  %v44 = vpack.c.bf16 %v20, %v16
  %v45 = vpack.c.bf16 %v21, %v17
  %v46 = vpack.c.bf16 %v26, %v22
  %v47 = vpack.c.bf16 %v27, %v23
  %v48 = vpack.c.bf16 %v28, %v24
  %v49 = vpack.c.bf16 %v29, %v25
  %v50 = vpack.c.bf16 %v34, %v30
  %v51 = vpack.c.bf16 %v35, %v31
  %v52 = vpack.c.bf16 %v36, %v32
  %v53 = vpack.c.bf16 %v37, %v33
  %v54 = vpack.c.bf16 %v38, %v38
  %v55 = vpack.c.bf16 %v39, %v39
  %v56 = vpack.c.bf16 %v40, %v40
  %v57 = vpack.c.bf16 %v41, %v41
  %v58 = vld [vmem:[%s1] sm:$0xff]
  %v59 = vld [vmem:[%s1 + $0x8] sm:$0xff]
  %v60 = vld [vmem:[%s1 + $0x10] sm:$0xff]
  %v61 = vld [vmem:[%s1 + $0x18] sm:$0xff]
  %v62 = vld [vmem:[%s1 + $0x20] sm:$0xff]
  %v63 = vld [vmem:[%s1 + $0x28] sm:$0xff]
  %v64 = vld [vmem:[%s1 + $0x30] sm:$0xff]
  %v65 = vld [vmem:[%s1 + $0x38] sm:$0xff]
  %v66 = vld [vmem:[%s1 + $0x40] sm:$0xff]
  %v67 = vld [vmem:[%s1 + $0x48] sm:$0xff]
  %v68 = vld [vmem:[%s1 + $0x50] sm:$0xff]
  %v69 = vld [vmem:[%s1 + $0x58] sm:$0xff]
  %v70 = vld [vmem:[%s1 + $0x60] sm:$0xff]
  %v71 = vld [vmem:[%s1 + $0x68] sm:$0xff]
  %v72 = vld [vmem:[%s1 + $0x70] sm:$0xff]
  %v73 = vld [vmem:[%s1 + $0x78] sm:$0xff]
  %v74 = vld [vmem:[%s1 + $0x80] sm:$0xff]
  %v75 = vld [vmem:[%s1 + $0x88] sm:$0xff]
  %v76 = vld [vmem:[%s1 + $0x90] sm:$0xff]
  %v77 = vld [vmem:[%s1 + $0x98] sm:$0xff]
  %v78 = vld [vmem:[%s1 + $0xa0] sm:$0xff]
  %v79 = vld [vmem:[%s1 + $0xa8] sm:$0xff]
  %v80 = vld [vmem:[%s1 + $0xb0] sm:$0xff]
  %v81 = vld [vmem:[%s1 + $0xb8] sm:$0xff]
  %v82 = vld [vmem:[%s1 + $0xc0] sm:$0xff]
  %v83 = vld [vmem:[%s1 + $0xc8] sm:$0xff]
  %v84 = vld [vmem:[%s1 + $0xd0] sm:$0xff]
  %v85 = vld [vmem:[%s1 + $0xd8] sm:$0xff]
  %v86 = vld [vmem:[%s1 + $0xe0] sm:$0xff]
  %v87 = vld [vmem:[%s1 + $0xe8] sm:$0xff]
  %v88 = vld [vmem:[%s1 + $0xf0] sm:$0xff]
  %v89 = vld [vmem:[%s1 + $0xf8] sm:$0xff]
  %v90 = vld [vmem:[%s1 + $0x100] sm:$0xff]
  %v91 = vld [vmem:[%s1 + $0x108] sm:$0xff]
  %v92 = vld [vmem:[%s1 + $0x110] sm:$0xff]
  %v93 = vld [vmem:[%s1 + $0x118] sm:$0xff]
  %v94 = vld [vmem:[%s1 + $0x120] sm:$0xff]
  %v95 = vld [vmem:[%s1 + $0x128] sm:$0xff]
  %v96 = vld [vmem:[%s1 + $0x130] sm:$0xff]
  %v97 = vld [vmem:[%s1 + $0x138] sm:$0xff]
  %v98 = vld [vmem:[%s1 + $0x140] sm:$0xff]
  %v99 = vld [vmem:[%s1 + $0x148] sm:$0xff]
  %v100 = vld [vmem:[%s1 + $0x150] sm:$0xff]
  %v101 = vld [vmem:[%s1 + $0x158] sm:$0xff]
  %v102 = vld [vmem:[%s1 + $0x160] sm:$0xff]
  %v103 = vld [vmem:[%s1 + $0x168] sm:$0xff]
  %v104 = vld [vmem:[%s1 + $0x170] sm:$0xff]
  %v105 = vld [vmem:[%s1 + $0x178] sm:$0xff]
  %v106 = vld [vmem:[%s1 + $0x180] sm:$0xff]
  %v107 = vld [vmem:[%s1 + $0x188] sm:$0xff]
  %v108 = vld [vmem:[%s1 + $0x190] sm:$0xff]
  %v109 = vld [vmem:[%s1 + $0x198] sm:$0xff]
  %v110 = vld [vmem:[%s1 + $0x1a0] sm:$0xff]
  %v111 = vld [vmem:[%s1 + $0x1a8] sm:$0xff]
  %v112 = vld [vmem:[%s1 + $0x1b0] sm:$0xff]
  %v113 = vld [vmem:[%s1 + $0x1b8] sm:$0xff]
  %v114 = vld [vmem:[%s1 + $0x1c0] sm:$0xff]
  %v115 = vld [vmem:[%s1 + $0x1c8] sm:$0xff]
  %v116 = vld [vmem:[%s1 + $0x1d0] sm:$0xff]
  %v117 = vld [vmem:[%s1 + $0x1d8] sm:$0xff]
  %v118 = vld [vmem:[%s1 + $0x1e0] sm:$0xff]
  %v119 = vld [vmem:[%s1 + $0x1e8] sm:$0xff]
  %v120 = vld [vmem:[%s1 + $0x1f0] sm:$0xff]
  %v121 = vld [vmem:[%s1 + $0x1f8] sm:$0xff]
  %v122 = vld [vmem:[%s2] sm:$0x3]
  %v124 = vlaneseq
  %v125 = vshrl.u32 %v124, 7
  %v126 = vsub.s32 0, %v125
  %v127 = vrot.slane %v122, %v126
  %v128 = vlaneseq
  %v129 = vshrl.u32 %v128, 7
  %v130 = vsub.s32 1, %v129
  %v131 = vrot.slane %v122, %v130
  %v198 = vunpack.c.l.b16 %v58
  %v199 = vunpack.c.h.b16 %v58
  %v200 = vunpack.c.l.b16 %v59
  %v201 = vunpack.c.h.b16 %v59
  %v202 = vunpack.c.l.b16 %v60
  %v203 = vunpack.c.h.b16 %v60
  %v204 = vunpack.c.l.b16 %v61
  %v205 = vunpack.c.h.b16 %v61
  %v206 = vunpack.c.l.b16 %v62
  %v207 = vunpack.c.h.b16 %v62
  %v208 = vunpack.c.l.b16 %v63
  %v209 = vunpack.c.h.b16 %v63
  %v210 = vunpack.c.l.b16 %v64
  %v211 = vunpack.c.h.b16 %v64
  %v212 = vunpack.c.l.b16 %v65
  %v213 = vunpack.c.h.b16 %v65
  %v214 = vunpack.c.l.b16 %v66
  %v215 = vunpack.c.h.b16 %v66
  %v216 = vunpack.c.l.b16 %v67
  %v217 = vunpack.c.h.b16 %v67
  %v218 = vunpack.c.l.b16 %v68
  %v219 = vunpack.c.h.b16 %v68
  %v220 = vunpack.c.l.b16 %v69
  %v221 = vunpack.c.h.b16 %v69
  %v222 = vunpack.c.l.b16 %v70
  %v223 = vunpack.c.h.b16 %v70
  %v224 = vunpack.c.l.b16 %v71
  %v225 = vunpack.c.h.b16 %v71
  %v226 = vunpack.c.l.b16 %v72
  %v227 = vunpack.c.h.b16 %v72
  %v228 = vunpack.c.l.b16 %v73
  %v229 = vunpack.c.h.b16 %v73
  %v230 = vunpack.c.l.b16 %v74
  %v231 = vunpack.c.h.b16 %v74
  %v232 = vunpack.c.l.b16 %v75
  %v233 = vunpack.c.h.b16 %v75
  %v234 = vunpack.c.l.b16 %v76
  %v235 = vunpack.c.h.b16 %v76
  %v236 = vunpack.c.l.b16 %v77
  %v237 = vunpack.c.h.b16 %v77
  %v238 = vunpack.c.l.b16 %v78
  %v239 = vunpack.c.h.b16 %v78
  %v240 = vunpack.c.l.b16 %v79
  %v241 = vunpack.c.h.b16 %v79
  %v242 = vunpack.c.l.b16 %v80
  %v243 = vunpack.c.h.b16 %v80
  %v244 = vunpack.c.l.b16 %v81
  %v245 = vunpack.c.h.b16 %v81
  %v246 = vunpack.c.l.b16 %v82
  %v247 = vunpack.c.h.b16 %v82
  %v248 = vunpack.c.l.b16 %v83
  %v249 = vunpack.c.h.b16 %v83
  %v250 = vunpack.c.l.b16 %v84
  %v251 = vunpack.c.h.b16 %v84
  %v252 = vunpack.c.l.b16 %v85
  %v253 = vunpack.c.h.b16 %v85
  %v254 = vunpack.c.l.b16 %v86
  %v255 = vunpack.c.h.b16 %v86
  %v256 = vunpack.c.l.b16 %v87
  %v257 = vunpack.c.h.b16 %v87
  %v258 = vunpack.c.l.b16 %v88
  %v259 = vunpack.c.h.b16 %v88
  %v260 = vunpack.c.l.b16 %v89
  %v261 = vunpack.c.h.b16 %v89
  %v262 = vunpack.c.l.b16 %v90
  %v263 = vunpack.c.h.b16 %v90
  %v264 = vunpack.c.l.b16 %v91
  %v265 = vunpack.c.h.b16 %v91
  %v266 = vunpack.c.l.b16 %v92
  %v267 = vunpack.c.h.b16 %v92
  %v268 = vunpack.c.l.b16 %v93
  %v269 = vunpack.c.h.b16 %v93
  %v270 = vunpack.c.l.b16 %v94
  %v271 = vunpack.c.h.b16 %v94
  %v272 = vunpack.c.l.b16 %v95
  %v273 = vunpack.c.h.b16 %v95
  %v274 = vunpack.c.l.b16 %v96
  %v275 = vunpack.c.h.b16 %v96
  %v276 = vunpack.c.l.b16 %v97
  %v277 = vunpack.c.h.b16 %v97
  %v278 = vunpack.c.l.b16 %v98
  %v279 = vunpack.c.h.b16 %v98
  %v280 = vunpack.c.l.b16 %v99
  %v281 = vunpack.c.h.b16 %v99
  %v282 = vunpack.c.l.b16 %v100
  %v283 = vunpack.c.h.b16 %v100
  %v284 = vunpack.c.l.b16 %v101
  %v285 = vunpack.c.h.b16 %v101
  %v286 = vunpack.c.l.b16 %v102
  %v287 = vunpack.c.h.b16 %v102
  %v288 = vunpack.c.l.b16 %v103
  %v289 = vunpack.c.h.b16 %v103
  %v290 = vunpack.c.l.b16 %v104
  %v291 = vunpack.c.h.b16 %v104
  %v292 = vunpack.c.l.b16 %v105
  %v293 = vunpack.c.h.b16 %v105
  %v294 = vunpack.c.l.b16 %v106
  %v295 = vunpack.c.h.b16 %v106
  %v296 = vunpack.c.l.b16 %v107
  %v297 = vunpack.c.h.b16 %v107
  %v298 = vunpack.c.l.b16 %v108
  %v299 = vunpack.c.h.b16 %v108
  %v300 = vunpack.c.l.b16 %v109
  %v301 = vunpack.c.h.b16 %v109
  %v302 = vunpack.c.l.b16 %v110
  %v303 = vunpack.c.h.b16 %v110
  %v304 = vunpack.c.l.b16 %v111
  %v305 = vunpack.c.h.b16 %v111
  %v306 = vunpack.c.l.b16 %v112
  %v307 = vunpack.c.h.b16 %v112
  %v308 = vunpack.c.l.b16 %v113
  %v309 = vunpack.c.h.b16 %v113
  %v310 = vunpack.c.l.b16 %v114
  %v311 = vunpack.c.h.b16 %v114
  %v312 = vunpack.c.l.b16 %v115
  %v313 = vunpack.c.h.b16 %v115
  %v314 = vunpack.c.l.b16 %v116
  %v315 = vunpack.c.h.b16 %v116
  %v316 = vunpack.c.l.b16 %v117
  %v317 = vunpack.c.h.b16 %v117
  %v318 = vunpack.c.l.b16 %v118
  %v319 = vunpack.c.h.b16 %v118
  %v320 = vunpack.c.l.b16 %v119
  %v321 = vunpack.c.h.b16 %v119
  %v322 = vunpack.c.l.b16 %v120
  %v323 = vunpack.c.h.b16 %v120
  %v324 = vunpack.c.l.b16 %v121
  %v325 = vunpack.c.h.b16 %v121
  %v326 = vpack.c.b16 %v200, %v198
  %v327 = vpack.c.b16 %v201, %v199
  %v328 = vpack.c.b16 %v204, %v202
  %v329 = vpack.c.b16 %v205, %v203
  %v330 = vpack.c.b16 %v208, %v206
  %v331 = vpack.c.b16 %v209, %v207
  %v332 = vpack.c.b16 %v212, %v210
  %v333 = vpack.c.b16 %v213, %v211
  %v334 = vpack.c.b16 %v216, %v214
  %v335 = vpack.c.b16 %v217, %v215
  %v336 = vpack.c.b16 %v220, %v218
  %v337 = vpack.c.b16 %v221, %v219
  %v338 = vpack.c.b16 %v224, %v222
  %v339 = vpack.c.b16 %v225, %v223
  %v340 = vpack.c.b16 %v228, %v226
  %v341 = vpack.c.b16 %v229, %v227
  %v342 = vpack.c.b16 %v232, %v230
  %v343 = vpack.c.b16 %v233, %v231
  %v344 = vpack.c.b16 %v236, %v234
  %v345 = vpack.c.b16 %v237, %v235
  %v346 = vpack.c.b16 %v240, %v238
  %v347 = vpack.c.b16 %v241, %v239
  %v348 = vpack.c.b16 %v244, %v242
  %v349 = vpack.c.b16 %v245, %v243
  %v350 = vpack.c.b16 %v248, %v246
  %v351 = vpack.c.b16 %v249, %v247
  %v352 = vpack.c.b16 %v252, %v250
  %v353 = vpack.c.b16 %v253, %v251
  %v354 = vpack.c.b16 %v256, %v254
  %v355 = vpack.c.b16 %v257, %v255
  %v356 = vpack.c.b16 %v260, %v258
  %v357 = vpack.c.b16 %v261, %v259
  %v358 = vpack.c.b16 %v264, %v262
  %v359 = vpack.c.b16 %v265, %v263
  %v360 = vpack.c.b16 %v268, %v266
  %v361 = vpack.c.b16 %v269, %v267
  %v362 = vpack.c.b16 %v272, %v270
  %v363 = vpack.c.b16 %v273, %v271
  %v364 = vpack.c.b16 %v276, %v274
  %v365 = vpack.c.b16 %v277, %v275
  %v366 = vpack.c.b16 %v280, %v278
  %v367 = vpack.c.b16 %v281, %v279
  %v368 = vpack.c.b16 %v284, %v282
  %v369 = vpack.c.b16 %v285, %v283
  %v370 = vpack.c.b16 %v288, %v286
  %v371 = vpack.c.b16 %v289, %v287
  %v372 = vpack.c.b16 %v292, %v290
  %v373 = vpack.c.b16 %v293, %v291
  %v374 = vpack.c.b16 %v296, %v294
  %v375 = vpack.c.b16 %v297, %v295
  %v376 = vpack.c.b16 %v300, %v298
  %v377 = vpack.c.b16 %v301, %v299
  %v378 = vpack.c.b16 %v304, %v302
  %v379 = vpack.c.b16 %v305, %v303
  %v380 = vpack.c.b16 %v308, %v306
  %v381 = vpack.c.b16 %v309, %v307
  %v382 = vpack.c.b16 %v312, %v310
  %v383 = vpack.c.b16 %v313, %v311
  %v384 = vpack.c.b16 %v316, %v314
  %v385 = vpack.c.b16 %v317, %v315
  %v386 = vpack.c.b16 %v320, %v318
  %v387 = vpack.c.b16 %v321, %v319
  %v388 = vpack.c.b16 %v324, %v322
  %v389 = vpack.c.b16 %v325, %v323
  %454 = vmatprep.subr.bf16.mxu0 %v327
  %455 = vmatpush1.bf16.msra.mxu0 %v326
  %456 = vmatprep.subr.bf16.mxu0 %v329
  %457 = vmatpush1.bf16.msra.mxu0 %v328
  %458 = vmatprep.subr.bf16.mxu0 %v331
  %459 = vmatpush1.bf16.msra.mxu0 %v330
  %460 = vmatprep.subr.bf16.mxu0 %v333
  %461 = vmatpush1.bf16.msra.mxu0 %v332
  %462 = vmatprep.subr.bf16.mxu0 %v335
  %463 = vmatpush1.bf16.msra.mxu0 %v334
  %464 = vmatprep.subr.bf16.mxu0 %v337
  %465 = vmatpush1.bf16.msra.mxu0 %v336
  %466 = vmatprep.subr.bf16.mxu0 %v339
  %467 = vmatpush1.bf16.msra.mxu0 %v338
  %468 = vmatprep.subr.bf16.mxu0 %v341
  %469 = vmatpush1.bf16.msra.mxu0 %v340
  %470 = vmatprep.subr.bf16.mxu0 %v343
  %471 = vmatpush1.bf16.msra.mxu0 %v342
  %472 = vmatprep.subr.bf16.mxu0 %v345
  %473 = vmatpush1.bf16.msra.mxu0 %v344
  %474 = vmatprep.subr.bf16.mxu0 %v347
  %475 = vmatpush1.bf16.msra.mxu0 %v346
  %476 = vmatprep.subr.bf16.mxu0 %v349
  %477 = vmatpush1.bf16.msra.mxu0 %v348
  %478 = vmatprep.subr.bf16.mxu0 %v351
  %479 = vmatpush1.bf16.msra.mxu0 %v350
  %480 = vmatprep.subr.bf16.mxu0 %v353
  %481 = vmatpush1.bf16.msra.mxu0 %v352
  %482 = vmatprep.subr.bf16.mxu0 %v355
  %483 = vmatpush1.bf16.msra.mxu0 %v354
  %484 = vmatprep.subr.bf16.mxu0 %v357
  %485 = vmatpush1.bf16.msra.mxu0 %v356
  %486 = vmatprep.mubr.bf16.mxu0 %v43
  %487 = vmatmul.mubr.bf16.gmra.mrb[0].mxu0 %v42
  %v488 = vpop.f32.mrb[0].mxu0
  %v489 = vadd.f32 %v127, %v488
  %v490 = vpop.f32.mrb[0].mxu0
  %v491 = vadd.f32 %v131, %v490
  %v492 = vpop.f32.mrb[0].mxu0
  %v493 = vadd.f32 %v127, %v492
  %v494 = vpop.f32.mrb[0].mxu0
  %v495 = vadd.f32 %v131, %v494
  %496 = vmatprep.mubr.bf16.mxu0 %v47
  %497 = vmatmul.mubr.bf16.gmra.mrb[0].mxu0 %v46
  %v498 = vpop.f32.mrb[0].mxu0
  %v499 = vadd.f32 %v127, %v498
  %v500 = vpop.f32.mrb[0].mxu0
  %v501 = vadd.f32 %v131, %v500
  %v502 = vpop.f32.mrb[0].mxu0
  %v503 = vadd.f32 %v127, %v502
  %v504 = vpop.f32.mrb[0].mxu0
  %v505 = vadd.f32 %v131, %v504
  %506 = vmatprep.mubr.bf16.mxu0 %v51
  %507 = vmatmul.mubr.bf16.gmra.mrb[0].mxu0 %v50
  %v508 = vpop.f32.mrb[0].mxu0
  %v509 = vadd.f32 %v127, %v508
  %v510 = vpop.f32.mrb[0].mxu0
  %v511 = vadd.f32 %v131, %v510
  %v512 = vpop.f32.mrb[0].mxu0
  %v513 = vadd.f32 %v127, %v512
  %v514 = vpop.f32.mrb[0].mxu0
  %v515 = vadd.f32 %v131, %v514
  %516 = vmatprep.mubr.bf16.mxu0 %v55
  %517 = vmatmul.mubr.bf16.gmra.mrb[0].mxu0 %v54
  %v518 = vpop.f32.mrb[0].mxu0
  %v519 = vadd.f32 %v127, %v518
  %v520 = vpop.f32.mrb[0].mxu0
  %v521 = vadd.f32 %v131, %v520
  %v522 = vpop.f32.mrb[0].mxu0
  %v523 = vpop.f32.mrb[0].mxu0
  %524 = vdwg.mxu0
  %525 = vmatprep.subr.bf16.mxu0 %v359
  %526 = vmatpush1.bf16.msra.mxu0 %v358
  %527 = vmatprep.subr.bf16.mxu0 %v361
  %528 = vmatpush1.bf16.msra.mxu0 %v360
  %529 = vmatprep.subr.bf16.mxu0 %v363
  %530 = vmatpush1.bf16.msra.mxu0 %v362
  %531 = vmatprep.subr.bf16.mxu0 %v365
  %532 = vmatpush1.bf16.msra.mxu0 %v364
  %533 = vmatprep.subr.bf16.mxu0 %v367
  %534 = vmatpush1.bf16.msra.mxu0 %v366
  %535 = vmatprep.subr.bf16.mxu0 %v369
  %536 = vmatpush1.bf16.msra.mxu0 %v368
  %537 = vmatprep.subr.bf16.mxu0 %v371
  %538 = vmatpush1.bf16.msra.mxu0 %v370
  %539 = vmatprep.subr.bf16.mxu0 %v373
  %540 = vmatpush1.bf16.msra.mxu0 %v372
  %541 = vmatprep.subr.bf16.mxu0 %v375
  %542 = vmatpush1.bf16.msra.mxu0 %v374
  %543 = vmatprep.subr.bf16.mxu0 %v377
  %544 = vmatpush1.bf16.msra.mxu0 %v376
  %545 = vmatprep.subr.bf16.mxu0 %v379
  %546 = vmatpush1.bf16.msra.mxu0 %v378
  %547 = vmatprep.subr.bf16.mxu0 %v381
  %548 = vmatpush1.bf16.msra.mxu0 %v380
  %549 = vmatprep.subr.bf16.mxu0 %v383
  %550 = vmatpush1.bf16.msra.mxu0 %v382
  %551 = vmatprep.subr.bf16.mxu0 %v385
  %552 = vmatpush1.bf16.msra.mxu0 %v384
  %553 = vmatprep.subr.bf16.mxu0 %v387
  %554 = vmatpush1.bf16.msra.mxu0 %v386
  %555 = vmatprep.subr.bf16.mxu0 %v389
  %556 = vmatpush1.bf16.msra.mxu0 %v388
  %557 = vmatprep.mubr.bf16.mxu0 %v45
  %558 = vmatmul.mubr.bf16.gmra.mrb[0].mxu0 %v44
  %v559 = vpop.f32.mrb[0].mxu0
  %v560 = vadd.f32 %v489, %v559
  %v561 = vpop.f32.mrb[0].mxu0
  %v562 = vadd.f32 %v491, %v561
  %v563 = vpop.f32.mrb[0].mxu0
  %v564 = vadd.f32 %v493, %v563
  %v565 = vpop.f32.mrb[0].mxu0
  %v566 = vadd.f32 %v495, %v565
  %567 = vmatprep.mubr.bf16.mxu0 %v49
  %568 = vmatmul.mubr.bf16.gmra.mrb[0].mxu0 %v48
  %v569 = vpop.f32.mrb[0].mxu0
  %v570 = vadd.f32 %v499, %v569
  %v571 = vpop.f32.mrb[0].mxu0
  %v572 = vadd.f32 %v501, %v571
  %v573 = vpop.f32.mrb[0].mxu0
  %v574 = vadd.f32 %v503, %v573
  %v575 = vpop.f32.mrb[0].mxu0
  %v576 = vadd.f32 %v505, %v575
  %577 = vmatprep.mubr.bf16.mxu0 %v53
  %578 = vmatmul.mubr.bf16.gmra.mrb[0].mxu0 %v52
  %v579 = vpop.f32.mrb[0].mxu0
  %v580 = vadd.f32 %v509, %v579
  %v581 = vpop.f32.mrb[0].mxu0
  %v582 = vadd.f32 %v511, %v581
  %v583 = vpop.f32.mrb[0].mxu0
  %v584 = vadd.f32 %v513, %v583
  %v585 = vpop.f32.mrb[0].mxu0
  %v586 = vadd.f32 %v515, %v585
  %587 = vmatprep.mubr.bf16.mxu0 %v57
  %588 = vmatmul.mubr.bf16.gmra.mrb[0].mxu0 %v56
  %v589 = vpop.f32.mrb[0].mxu0
  %v590 = vadd.f32 %v519, %v589
  %v591 = vpop.f32.mrb[0].mxu0
  %v592 = vadd.f32 %v521, %v591
  %v593 = vpop.f32.mrb[0].mxu0
  %v594 = vpop.f32.mrb[0].mxu0
  %595 = vdwg.mxu0
  %596 = vst [vmem:[%s3] sm:$0xff] %v560
  %vm597 = vcmask 523264
  %598 = vst.msk [vmem:[%s3 + $0x8] sm:$0xff] %vm597, %v562
  %599 = vst [vmem:[%s3 + $0x10] sm:$0xff] %v564
  %600 = vst.msk [vmem:[%s3 + $0x18] sm:$0xff] %vm597, %v566
  %601 = vst [vmem:[%s3 + $0x20] sm:$0xff] %v570
  %602 = vst.msk [vmem:[%s3 + $0x28] sm:$0xff] %vm597, %v572
  %603 = vst [vmem:[%s3 + $0x30] sm:$0xff] %v574
  %604 = vst.msk [vmem:[%s3 + $0x38] sm:$0xff] %vm597, %v576
  %605 = vst [vmem:[%s3 + $0x40] sm:$0xff] %v580
  %606 = vst.msk [vmem:[%s3 + $0x48] sm:$0xff] %vm597, %v582
  %607 = vst [vmem:[%s3 + $0x50] sm:$0xff] %v584
  %608 = vst.msk [vmem:[%s3 + $0x58] sm:$0xff] %vm597, %v586
  %609 = vst [vmem:[%s3 + $0x60] sm:$0x3] %v590
  %vm610 = vcmask 517120
  %611 = vst.msk [vmem:[%s3 + $0x68] sm:$0x3] %vm610, %v592
  // Predicated region
  $region14: #{celeba_img_decoder_forward.14} parent=0 // pred_check
    _
  $region15: #{celeba_img_decoder_forward.14} parent=0 // pred_check_branch
    %613 = sbr.rel (0) target = $region17
  $region16: #{celeba_img_decoder_forward.14} parent=0 // pred_region
    _
  $region17: #{celeba_img_decoder_forward.14} parent=0 // pred_fallthru
    _
  // Predicated region
  $region18: #{celeba_img_decoder_forward.14} parent=0 // pred_check
    _
  $region19: #{celeba_img_decoder_forward.14} parent=0 // pred_check_branch
    %615 = sbr.rel (0) target = $region21
  $region20: #{celeba_img_decoder_forward.14} parent=0 // pred_region
    _
  $region21: #{celeba_img_decoder_forward.14} parent=0 // pred_fallthru
    _

// kernel: celeba_img_decoder_forward.16
$region0: #{celeba_img_decoder_forward.16}
  #allocation0 [shape = 'u32[]', space=smem, size = 0x4, offset = 0x4, fixed_abs, tag = 'smem constant byte address 0x4 - core index']
  #allocation1 [shape = 'u32[144,128]{1,0:T(1,128)}', space=vmem, size = 0x12000, scoped, tag = 'internal scratch']
  %s0 = inlined_call_operand.vmem [shape: f32[162,384], index: 0, kind: input, shape index: {}]
  %s1 = inlined_call_operand.vmem [shape: bf16[384,128], index: 1, kind: input, shape index: {}]
  %s2 = inlined_call_operand.vmem [shape: f32[1,128], index: 2, kind: input, shape index: {}]
  %s3 = inlined_call_operand.vmem [shape: f32[162,128], index: 3, kind: output, shape index: {}]
  %s4 = sld [smem:[#allocation0]]
  $region22: #{celeba_img_decoder_forward.16} parent=0
    _
  %s6 = ssub.s32 1, %s4
  %s7 = scalar_select 0, %s6, %s4
  // Predicated region
  $region2: #{celeba_img_decoder_forward.16} parent=0 // pred_check
    _
  $region3: #{celeba_img_decoder_forward.16} parent=0 // pred_check_branch
    %9 = sbr.rel (0) target = $region5
  $region4: #{celeba_img_decoder_forward.16} parent=0 // pred_region
    _
  $region5: #{celeba_img_decoder_forward.16} parent=0 // pred_fallthru
    _
  // Predicated region
  $region6: #{celeba_img_decoder_forward.16} parent=0 // pred_check
    _
  $region7: #{celeba_img_decoder_forward.16} parent=0 // pred_check_branch
    %11 = sbr.rel (0) target = $region9
  $region8: #{celeba_img_decoder_forward.16} parent=0 // pred_region
    _
  $region9: #{celeba_img_decoder_forward.16} parent=0 // pred_fallthru
    _
  // Predicated region
  $region10: #{celeba_img_decoder_forward.16} parent=0 // pred_check
    _
  $region11: #{celeba_img_decoder_forward.16} parent=0 // pred_check_branch
    %13 = sbr.rel (0) target = $region13
  $region12: #{celeba_img_decoder_forward.16} parent=0 // pred_region
    _
  $region13: #{celeba_img_decoder_forward.16} parent=0 // pred_fallthru
    _
  %v15 = vld [vmem:[%s0] sm:$0xff]
  %v16 = vld [vmem:[%s0 + $0x8] sm:$0xff]
  %v17 = vld [vmem:[%s0 + $0x10] sm:$0xff]
  %v18 = vld [vmem:[%s0 + $0x18] sm:$0xff]
  %v19 = vld [vmem:[%s0 + $0x20] sm:$0xff]
  %v20 = vld [vmem:[%s0 + $0x28] sm:$0xff]
  %v21 = vld [vmem:[%s0 + $0x30] sm:$0xff]
  %v22 = vld [vmem:[%s0 + $0x38] sm:$0xff]
  %v23 = vld [vmem:[%s0 + $0x40] sm:$0xff]
  %v24 = vld [vmem:[%s0 + $0x48] sm:$0xff]
  %v25 = vld [vmem:[%s0 + $0x50] sm:$0xff]
  %v26 = vld [vmem:[%s0 + $0x58] sm:$0xff]
  %v27 = vld [vmem:[%s0 + $0x60] sm:$0xff]
  %v28 = vld [vmem:[%s0 + $0x68] sm:$0xff]
  %v29 = vld [vmem:[%s0 + $0x70] sm:$0xff]
  %v30 = vld [vmem:[%s0 + $0x78] sm:$0xff]
  %v31 = vld [vmem:[%s0 + $0x80] sm:$0xff]
  %v32 = vld [vmem:[%s0 + $0x88] sm:$0xff]
  %v33 = vld [vmem:[%s0 + $0x90] sm:$0xff]
  %v34 = vld [vmem:[%s0 + $0x98] sm:$0xff]
  %v35 = vld [vmem:[%s0 + $0xa0] sm:$0xff]
  %v36 = vld [vmem:[%s0 + $0xa8] sm:$0xff]
  %v37 = vld [vmem:[%s0 + $0xb0] sm:$0xff]
  %v38 = vld [vmem:[%s0 + $0xb8] sm:$0xff]
  %v39 = vld [vmem:[%s0 + $0xc0] sm:$0xff]
  %v40 = vld [vmem:[%s0 + $0xc8] sm:$0xff]
  %v41 = vld [vmem:[%s0 + $0xd0] sm:$0xff]
  %v42 = vld [vmem:[%s0 + $0xd8] sm:$0xff]
  %v43 = vld [vmem:[%s0 + $0xe0] sm:$0xff]
  %v44 = vld [vmem:[%s0 + $0xe8] sm:$0xff]
  %v45 = vld [vmem:[%s0 + $0xf0] sm:$0xff]
  %v46 = vld [vmem:[%s0 + $0xf8] sm:$0xff]
  %v47 = vld [vmem:[%s0 + $0x100] sm:$0xff]
  %v48 = vld [vmem:[%s0 + $0x108] sm:$0xff]
  %v49 = vld [vmem:[%s0 + $0x110] sm:$0xff]
  %v50 = vld [vmem:[%s0 + $0x118] sm:$0xff]
  %v51 = vld [vmem:[%s0 + $0x120] sm:$0xff]
  %v52 = vld [vmem:[%s0 + $0x128] sm:$0xff]
  %v53 = vld [vmem:[%s0 + $0x130] sm:$0xff]
  %v54 = vld [vmem:[%s0 + $0x138] sm:$0xff]
  %v55 = vld [vmem:[%s0 + $0x140] sm:$0xff]
  %v56 = vld [vmem:[%s0 + $0x148] sm:$0xff]
  %v57 = vld [vmem:[%s0 + $0x150] sm:$0xff]
  %v58 = vld [vmem:[%s0 + $0x158] sm:$0xff]
  %v59 = vld [vmem:[%s0 + $0x160] sm:$0xff]
  %v60 = vld [vmem:[%s0 + $0x168] sm:$0xff]
  %v61 = vld [vmem:[%s0 + $0x170] sm:$0xff]
  %v62 = vld [vmem:[%s0 + $0x178] sm:$0xff]
  %v63 = vld [vmem:[%s0 + $0x180] sm:$0xff]
  %v64 = vld [vmem:[%s0 + $0x188] sm:$0xff]
  %v65 = vld [vmem:[%s0 + $0x190] sm:$0xff]
  %v66 = vld [vmem:[%s0 + $0x198] sm:$0xff]
  %v67 = vld [vmem:[%s0 + $0x1a0] sm:$0xff]
  %v68 = vld [vmem:[%s0 + $0x1a8] sm:$0xff]
  %v69 = vld [vmem:[%s0 + $0x1b0] sm:$0xff]
  %v70 = vld [vmem:[%s0 + $0x1b8] sm:$0xff]
  %v71 = vld [vmem:[%s0 + $0x1c0] sm:$0xff]
  %v72 = vld [vmem:[%s0 + $0x1c8] sm:$0xff]
  %v73 = vld [vmem:[%s0 + $0x1d0] sm:$0xff]
  %v74 = vld [vmem:[%s0 + $0x1d8] sm:$0xff]
  %v75 = vld [vmem:[%s0 + $0x1e0] sm:$0x3]
  %v76 = vld [vmem:[%s0 + $0x1e8] sm:$0x3]
  %v77 = vld [vmem:[%s0 + $0x1f0] sm:$0x3]
  %v78 = vpack.c.bf16 %v18, %v15
  %v79 = vpack.c.bf16 %v19, %v16
  %v80 = vpack.c.bf16 %v20, %v17
  %v81 = vpack.c.bf16 %v24, %v21
  %v82 = vpack.c.bf16 %v25, %v22
  %v83 = vpack.c.bf16 %v26, %v23
  %v84 = vpack.c.bf16 %v30, %v27
  %v85 = vpack.c.bf16 %v31, %v28
  %v86 = vpack.c.bf16 %v32, %v29
  %v87 = vpack.c.bf16 %v36, %v33
  %v88 = vpack.c.bf16 %v37, %v34
  %v89 = vpack.c.bf16 %v38, %v35
  %v90 = vpack.c.bf16 %v42, %v39
  %v91 = vpack.c.bf16 %v43, %v40
  %v92 = vpack.c.bf16 %v44, %v41
  %v93 = vpack.c.bf16 %v48, %v45
  %v94 = vpack.c.bf16 %v49, %v46
  %v95 = vpack.c.bf16 %v50, %v47
  %v96 = vpack.c.bf16 %v54, %v51
  %v97 = vpack.c.bf16 %v55, %v52
  %v98 = vpack.c.bf16 %v56, %v53
  %v99 = vpack.c.bf16 %v60, %v57
  %v100 = vpack.c.bf16 %v61, %v58
  %v101 = vpack.c.bf16 %v62, %v59
  %v102 = vpack.c.bf16 %v66, %v63
  %v103 = vpack.c.bf16 %v67, %v64
  %v104 = vpack.c.bf16 %v68, %v65
  %v105 = vpack.c.bf16 %v72, %v69
  %v106 = vpack.c.bf16 %v73, %v70
  %v107 = vpack.c.bf16 %v74, %v71
  %v108 = vpack.c.bf16 %v75, %v75
  %v109 = vpack.c.bf16 %v76, %v76
  %v110 = vpack.c.bf16 %v77, %v77
  %v111 = vld [vmem:[%s1] sm:$0xf]
  %v112 = vld [vmem:[%s1 + $0x4] sm:$0xf]
  %v113 = vld [vmem:[%s1 + $0x8] sm:$0xf]
  %v114 = vld [vmem:[%s1 + $0xc] sm:$0xf]
  %v115 = vld [vmem:[%s1 + $0x10] sm:$0xf]
  %v116 = vld [vmem:[%s1 + $0x14] sm:$0xf]
  %v117 = vld [vmem:[%s1 + $0x18] sm:$0xf]
  %v118 = vld [vmem:[%s1 + $0x1c] sm:$0xf]
  %v119 = vld [vmem:[%s1 + $0x20] sm:$0xf]
  %v120 = vld [vmem:[%s1 + $0x24] sm:$0xf]
  %v121 = vld [vmem:[%s1 + $0x28] sm:$0xf]
  %v122 = vld [vmem:[%s1 + $0x2c] sm:$0xf]
  %v123 = vld [vmem:[%s1 + $0x30] sm:$0xf]
  %v124 = vld [vmem:[%s1 + $0x34] sm:$0xf]
  %v125 = vld [vmem:[%s1 + $0x38] sm:$0xf]
  %v126 = vld [vmem:[%s1 + $0x3c] sm:$0xf]
  %v127 = vld [vmem:[%s1 + $0x40] sm:$0xf]
  %v128 = vld [vmem:[%s1 + $0x44] sm:$0xf]
  %v129 = vld [vmem:[%s1 + $0x48] sm:$0xf]
  %v130 = vld [vmem:[%s1 + $0x4c] sm:$0xf]
  %v131 = vld [vmem:[%s1 + $0x50] sm:$0xf]
  %v132 = vld [vmem:[%s1 + $0x54] sm:$0xf]
  %v133 = vld [vmem:[%s1 + $0x58] sm:$0xf]
  %v134 = vld [vmem:[%s1 + $0x5c] sm:$0xf]
  %v135 = vld [vmem:[%s1 + $0x60] sm:$0xf]
  %v136 = vld [vmem:[%s1 + $0x64] sm:$0xf]
  %v137 = vld [vmem:[%s1 + $0x68] sm:$0xf]
  %v138 = vld [vmem:[%s1 + $0x6c] sm:$0xf]
  %v139 = vld [vmem:[%s1 + $0x70] sm:$0xf]
  %v140 = vld [vmem:[%s1 + $0x74] sm:$0xf]
  %v141 = vld [vmem:[%s1 + $0x78] sm:$0xf]
  %v142 = vld [vmem:[%s1 + $0x7c] sm:$0xf]
  %v143 = vld [vmem:[%s1 + $0x80] sm:$0xf]
  %v144 = vld [vmem:[%s1 + $0x84] sm:$0xf]
  %v145 = vld [vmem:[%s1 + $0x88] sm:$0xf]
  %v146 = vld [vmem:[%s1 + $0x8c] sm:$0xf]
  %v147 = vld [vmem:[%s1 + $0x90] sm:$0xf]
  %v148 = vld [vmem:[%s1 + $0x94] sm:$0xf]
  %v149 = vld [vmem:[%s1 + $0x98] sm:$0xf]
  %v150 = vld [vmem:[%s1 + $0x9c] sm:$0xf]
  %v151 = vld [vmem:[%s1 + $0xa0] sm:$0xf]
  %v152 = vld [vmem:[%s1 + $0xa4] sm:$0xf]
  %v153 = vld [vmem:[%s1 + $0xa8] sm:$0xf]
  %v154 = vld [vmem:[%s1 + $0xac] sm:$0xf]
  %v155 = vld [vmem:[%s1 + $0xb0] sm:$0xf]
  %v156 = vld [vmem:[%s1 + $0xb4] sm:$0xf]
  %v157 = vld [vmem:[%s1 + $0xb8] sm:$0xf]
  %v158 = vld [vmem:[%s1 + $0xbc] sm:$0xf]
  %v159 = vld [vmem:[%s2] sm:$0x1]
  %v161 = vlaneseq
  %v162 = vshrl.u32 %v161, 7
  %v163 = vsub.s32 0, %v162
  %v164 = vrot.slane %v159, %v163
  %v214 = vunpack.c.l.b16 %v111
  %v215 = vunpack.c.l.b16 %v112
  %v216 = vunpack.c.l.b16 %v113
  %v217 = vunpack.c.l.b16 %v114
  %v218 = vunpack.c.l.b16 %v115
  %v219 = vunpack.c.l.b16 %v116
  %v220 = vunpack.c.l.b16 %v117
  %v221 = vunpack.c.l.b16 %v118
  %v222 = vunpack.c.l.b16 %v119
  %v223 = vunpack.c.l.b16 %v120
  %v224 = vunpack.c.l.b16 %v121
  %v225 = vunpack.c.l.b16 %v122
  %v226 = vunpack.c.l.b16 %v123
  %v227 = vunpack.c.l.b16 %v124
  %v228 = vunpack.c.l.b16 %v125
  %v229 = vunpack.c.l.b16 %v126
  %v230 = vunpack.c.l.b16 %v127
  %v231 = vunpack.c.l.b16 %v128
  %v232 = vunpack.c.l.b16 %v129
  %v233 = vunpack.c.l.b16 %v130
  %v234 = vunpack.c.l.b16 %v131
  %v235 = vunpack.c.l.b16 %v132
  %v236 = vunpack.c.l.b16 %v133
  %v237 = vunpack.c.l.b16 %v134
  %v238 = vunpack.c.l.b16 %v135
  %v239 = vunpack.c.l.b16 %v136
  %v240 = vunpack.c.l.b16 %v137
  %v241 = vunpack.c.l.b16 %v138
  %v242 = vunpack.c.l.b16 %v139
  %v243 = vunpack.c.l.b16 %v140
  %v244 = vunpack.c.l.b16 %v141
  %v245 = vunpack.c.l.b16 %v142
  %v246 = vunpack.c.l.b16 %v143
  %v247 = vunpack.c.l.b16 %v144
  %v248 = vunpack.c.l.b16 %v145
  %v249 = vunpack.c.l.b16 %v146
  %v250 = vunpack.c.l.b16 %v147
  %v251 = vunpack.c.l.b16 %v148
  %v252 = vunpack.c.l.b16 %v149
  %v253 = vunpack.c.l.b16 %v150
  %v254 = vunpack.c.l.b16 %v151
  %v255 = vunpack.c.l.b16 %v152
  %v256 = vunpack.c.l.b16 %v153
  %v257 = vunpack.c.l.b16 %v154
  %v258 = vunpack.c.l.b16 %v155
  %v259 = vunpack.c.l.b16 %v156
  %v260 = vunpack.c.l.b16 %v157
  %v261 = vunpack.c.l.b16 %v158
  %v262 = vpack.c.b16 %v215, %v214
  %v263 = vpack.c.b16 %v217, %v216
  %v264 = vpack.c.b16 %v219, %v218
  %v265 = vpack.c.b16 %v221, %v220
  %v266 = vpack.c.b16 %v223, %v222
  %v267 = vpack.c.b16 %v225, %v224
  %v268 = vpack.c.b16 %v227, %v226
  %v269 = vpack.c.b16 %v229, %v228
  %v270 = vpack.c.b16 %v231, %v230
  %v271 = vpack.c.b16 %v233, %v232
  %v272 = vpack.c.b16 %v235, %v234
  %v273 = vpack.c.b16 %v237, %v236
  %v274 = vpack.c.b16 %v239, %v238
  %v275 = vpack.c.b16 %v241, %v240
  %v276 = vpack.c.b16 %v243, %v242
  %v277 = vpack.c.b16 %v245, %v244
  %v278 = vpack.c.b16 %v247, %v246
  %v279 = vpack.c.b16 %v249, %v248
  %v280 = vpack.c.b16 %v251, %v250
  %v281 = vpack.c.b16 %v253, %v252
  %v282 = vpack.c.b16 %v255, %v254
  %v283 = vpack.c.b16 %v257, %v256
  %v284 = vpack.c.b16 %v259, %v258
  %v285 = vpack.c.b16 %v261, %v260
  %310 = vmatprep.subr.bf16.mxu0 0
  %311 = vmatpush1.bf16.msra.mxu0 %v262
  %312 = vmatprep.subr.bf16.mxu0 0
  %313 = vmatpush1.bf16.msra.mxu0 %v263
  %314 = vmatprep.subr.bf16.mxu0 0
  %315 = vmatpush1.bf16.msra.mxu0 %v264
  %316 = vmatprep.subr.bf16.mxu0 0
  %317 = vmatpush1.bf16.msra.mxu0 %v265
  %318 = vmatprep.subr.bf16.mxu0 0
  %319 = vmatpush1.bf16.msra.mxu0 %v266
  %320 = vmatprep.subr.bf16.mxu0 0
  %321 = vmatpush1.bf16.msra.mxu0 %v267
  %322 = vmatprep.subr.bf16.mxu0 0
  %323 = vmatpush1.bf16.msra.mxu0 %v268
  %324 = vmatprep.subr.bf16.mxu0 0
  %325 = vmatpush1.bf16.msra.mxu0 %v269
  %326 = vmatprep.subr.bf16.mxu0 0
  %327 = vmatpush1.bf16.msra.mxu0 %v270
  %328 = vmatprep.subr.bf16.mxu0 0
  %329 = vmatpush1.bf16.msra.mxu0 %v271
  %330 = vmatprep.subr.bf16.mxu0 0
  %331 = vmatpush1.bf16.msra.mxu0 %v272
  %332 = vmatprep.subr.bf16.mxu0 0
  %333 = vmatpush1.bf16.msra.mxu0 %v273
  %334 = vmatprep.subr.bf16.mxu0 0
  %335 = vmatpush1.bf16.msra.mxu0 %v274
  %336 = vmatprep.subr.bf16.mxu0 0
  %337 = vmatpush1.bf16.msra.mxu0 %v275
  %338 = vmatprep.subr.bf16.mxu0 0
  %339 = vmatpush1.bf16.msra.mxu0 %v276
  %340 = vmatprep.subr.bf16.mxu0 0
  %341 = vmatpush1.bf16.msra.mxu0 %v277
  %342 = vmatprep.mubr.bf16.mxu0 %v79
  %343 = vmatmul.mubr.bf16.gmra.mrb[0].mxu0 %v78
  %v344 = vpop.f32.mrb[0].mxu0
  %v345 = vadd.f32 %v164, %v344
  %v346 = vpop.f32.mrb[0].mxu0
  %v347 = vpop.f32.mrb[0].mxu0
  %v348 = vadd.f32 %v164, %v347
  %v349 = vpop.f32.mrb[0].mxu0
  %350 = vmatprep.mubr.bf16.mxu0 %v82
  %351 = vmatmul.mubr.bf16.gmra.mrb[0].mxu0 %v81
  %v352 = vpop.f32.mrb[0].mxu0
  %v353 = vadd.f32 %v164, %v352
  %v354 = vpop.f32.mrb[0].mxu0
  %v355 = vpop.f32.mrb[0].mxu0
  %v356 = vadd.f32 %v164, %v355
  %v357 = vpop.f32.mrb[0].mxu0
  %358 = vmatprep.mubr.bf16.mxu0 %v85
  %359 = vmatmul.mubr.bf16.gmra.mrb[0].mxu0 %v84
  %v360 = vpop.f32.mrb[0].mxu0
  %v361 = vadd.f32 %v164, %v360
  %v362 = vpop.f32.mrb[0].mxu0
  %v363 = vpop.f32.mrb[0].mxu0
  %v364 = vadd.f32 %v164, %v363
  %v365 = vpop.f32.mrb[0].mxu0
  %366 = vmatprep.mubr.bf16.mxu0 %v88
  %367 = vmatmul.mubr.bf16.gmra.mrb[0].mxu0 %v87
  %v368 = vpop.f32.mrb[0].mxu0
  %v369 = vadd.f32 %v164, %v368
  %v370 = vpop.f32.mrb[0].mxu0
  %v371 = vpop.f32.mrb[0].mxu0
  %v372 = vadd.f32 %v164, %v371
  %v373 = vpop.f32.mrb[0].mxu0
  %374 = vmatprep.mubr.bf16.mxu0 %v91
  %375 = vmatmul.mubr.bf16.gmra.mrb[0].mxu0 %v90
  %v376 = vpop.f32.mrb[0].mxu0
  %v377 = vadd.f32 %v164, %v376
  %v378 = vpop.f32.mrb[0].mxu0
  %v379 = vpop.f32.mrb[0].mxu0
  %v380 = vadd.f32 %v164, %v379
  %v381 = vpop.f32.mrb[0].mxu0
  %382 = vmatprep.mubr.bf16.mxu0 %v94
  %383 = vmatmul.mubr.bf16.gmra.mrb[0].mxu0 %v93
  %v384 = vpop.f32.mrb[0].mxu0
  %v385 = vadd.f32 %v164, %v384
  %v386 = vpop.f32.mrb[0].mxu0
  %v387 = vpop.f32.mrb[0].mxu0
  %v388 = vadd.f32 %v164, %v387
  %v389 = vpop.f32.mrb[0].mxu0
  %390 = vmatprep.mubr.bf16.mxu0 %v97
  %391 = vmatmul.mubr.bf16.gmra.mrb[0].mxu0 %v96
  %v392 = vpop.f32.mrb[0].mxu0
  %v393 = vadd.f32 %v164, %v392
  %v394 = vpop.f32.mrb[0].mxu0
  %v395 = vpop.f32.mrb[0].mxu0
  %v396 = vadd.f32 %v164, %v395
  %v397 = vpop.f32.mrb[0].mxu0
  %398 = vmatprep.mubr.bf16.mxu0 %v100
  %399 = vmatmul.mubr.bf16.gmra.mrb[0].mxu0 %v99
  %v400 = vpop.f32.mrb[0].mxu0
  %v401 = vadd.f32 %v164, %v400
  %v402 = vpop.f32.mrb[0].mxu0
  %v403 = vpop.f32.mrb[0].mxu0
  %v404 = vadd.f32 %v164, %v403
  %v405 = vpop.f32.mrb[0].mxu0
  %406 = vmatprep.mubr.bf16.mxu0 %v103
  %407 = vmatmul.mubr.bf16.gmra.mrb[0].mxu0 %v102
  %v408 = vpop.f32.mrb[0].mxu0
  %v409 = vadd.f32 %v164, %v408
  %v410 = vpop.f32.mrb[0].mxu0
  %v411 = vpop.f32.mrb[0].mxu0
  %v412 = vadd.f32 %v164, %v411
  %v413 = vpop.f32.mrb[0].mxu0
  %414 = vmatprep.mubr.bf16.mxu0 %v106
  %415 = vmatmul.mubr.bf16.gmra.mrb[0].mxu0 %v105
  %v416 = vpop.f32.mrb[0].mxu0
  %v417 = vadd.f32 %v164, %v416
  %v418 = vpop.f32.mrb[0].mxu0
  %v419 = vpop.f32.mrb[0].mxu0
  %v420 = vadd.f32 %v164, %v419
  %v421 = vpop.f32.mrb[0].mxu0
  %422 = vmatprep.mubr.bf16.mxu0 %v109
  %423 = vmatmul.mubr.bf16.gmra.mrb[0].mxu0 %v108
  %v424 = vpop.f32.mrb[0].mxu0
  %v425 = vadd.f32 %v164, %v424
  %v426 = vpop.f32.mrb[0].mxu0
  %v427 = vpop.f32.mrb[0].mxu0
  %v428 = vpop.f32.mrb[0].mxu0
  %429 = vdwg.mxu0
  %430 = vmatprep.subr.bf16.mxu0 0
  %431 = vmatpush1.bf16.msra.mxu0 %v278
  %432 = vmatprep.subr.bf16.mxu0 0
  %433 = vmatpush1.bf16.msra.mxu0 %v279
  %434 = vmatprep.subr.bf16.mxu0 0
  %435 = vmatpush1.bf16.msra.mxu0 %v280
  %436 = vmatprep.subr.bf16.mxu0 0
  %437 = vmatpush1.bf16.msra.mxu0 %v281
  %438 = vmatprep.subr.bf16.mxu0 0
  %439 = vmatpush1.bf16.msra.mxu0 %v282
  %440 = vmatprep.subr.bf16.mxu0 0
  %441 = vmatpush1.bf16.msra.mxu0 %v283
  %442 = vmatprep.subr.bf16.mxu0 0
  %443 = vmatpush1.bf16.msra.mxu0 %v284
  %444 = vmatprep.subr.bf16.mxu0 0
  %445 = vmatpush1.bf16.msra.mxu0 %v285
  %446 = vmatprep.subr.bf16.mxu0 0
  %447 = vmatpush1.bf16.msra.mxu0 0
  %448 = vmatprep.subr.bf16.mxu0 0
  %449 = vmatpush1.bf16.msra.mxu0 0
  %450 = vmatprep.subr.bf16.mxu0 0
  %451 = vmatpush1.bf16.msra.mxu0 0
  %452 = vmatprep.subr.bf16.mxu0 0
  %453 = vmatpush1.bf16.msra.mxu0 0
  %454 = vmatprep.subr.bf16.mxu0 0
  %455 = vmatpush1.bf16.msra.mxu0 0
  %456 = vmatprep.subr.bf16.mxu0 0
  %457 = vmatpush1.bf16.msra.mxu0 0
  %458 = vmatprep.subr.bf16.mxu0 0
  %459 = vmatpush1.bf16.msra.mxu0 0
  %460 = vmatprep.subr.bf16.mxu0 0
  %461 = vmatpush1.bf16.msra.mxu0 0
  %462 = vmatprep.mubr.bf16.mxu0 0
  %463 = vmatmul.mubr.bf16.gmra.mrb[0].mxu0 %v80
  %v464 = vpop.f32.mrb[0].mxu0
  %v465 = vadd.f32 %v345, %v464
  %v466 = vpop.f32.mrb[0].mxu0
  %v467 = vpop.f32.mrb[0].mxu0
  %v468 = vadd.f32 %v348, %v467
  %v469 = vpop.f32.mrb[0].mxu0
  %470 = vmatprep.mubr.bf16.mxu0 0
  %471 = vmatmul.mubr.bf16.gmra.mrb[0].mxu0 %v83
  %v472 = vpop.f32.mrb[0].mxu0
  %v473 = vadd.f32 %v353, %v472
  %v474 = vpop.f32.mrb[0].mxu0
  %v475 = vpop.f32.mrb[0].mxu0
  %v476 = vadd.f32 %v356, %v475
  %v477 = vpop.f32.mrb[0].mxu0
  %478 = vmatprep.mubr.bf16.mxu0 0
  %479 = vmatmul.mubr.bf16.gmra.mrb[0].mxu0 %v86
  %v480 = vpop.f32.mrb[0].mxu0
  %v481 = vadd.f32 %v361, %v480
  %v482 = vpop.f32.mrb[0].mxu0
  %v483 = vpop.f32.mrb[0].mxu0
  %v484 = vadd.f32 %v364, %v483
  %v485 = vpop.f32.mrb[0].mxu0
  %486 = vmatprep.mubr.bf16.mxu0 0
  %487 = vmatmul.mubr.bf16.gmra.mrb[0].mxu0 %v89
  %v488 = vpop.f32.mrb[0].mxu0
  %v489 = vadd.f32 %v369, %v488
  %v490 = vpop.f32.mrb[0].mxu0
  %v491 = vpop.f32.mrb[0].mxu0
  %v492 = vadd.f32 %v372, %v491
  %v493 = vpop.f32.mrb[0].mxu0
  %494 = vmatprep.mubr.bf16.mxu0 0
  %495 = vmatmul.mubr.bf16.gmra.mrb[0].mxu0 %v92
  %v496 = vpop.f32.mrb[0].mxu0
  %v497 = vadd.f32 %v377, %v496
  %v498 = vpop.f32.mrb[0].mxu0
  %v499 = vpop.f32.mrb[0].mxu0
  %v500 = vadd.f32 %v380, %v499
  %v501 = vpop.f32.mrb[0].mxu0
  %502 = vmatprep.mubr.bf16.mxu0 0
  %503 = vmatmul.mubr.bf16.gmra.mrb[0].mxu0 %v95
  %v504 = vpop.f32.mrb[0].mxu0
  %v505 = vadd.f32 %v385, %v504
  %v506 = vpop.f32.mrb[0].mxu0
  %v507 = vpop.f32.mrb[0].mxu0
  %v508 = vadd.f32 %v388, %v507
  %v509 = vpop.f32.mrb[0].mxu0
  %510 = vmatprep.mubr.bf16.mxu0 0
  %511 = vmatmul.mubr.bf16.gmra.mrb[0].mxu0 %v98
  %v512 = vpop.f32.mrb[0].mxu0
  %v513 = vadd.f32 %v393, %v512
  %v514 = vpop.f32.mrb[0].mxu0
  %v515 = vpop.f32.mrb[0].mxu0
  %v516 = vadd.f32 %v396, %v515
  %v517 = vpop.f32.mrb[0].mxu0
  %518 = vmatprep.mubr.bf16.mxu0 0
  %519 = vmatmul.mubr.bf16.gmra.mrb[0].mxu0 %v101
  %v520 = vpop.f32.mrb[0].mxu0
  %v521 = vadd.f32 %v401, %v520
  %v522 = vpop.f32.mrb[0].mxu0
  %v523 = vpop.f32.mrb[0].mxu0
  %v524 = vadd.f32 %v404, %v523
  %v525 = vpop.f32.mrb[0].mxu0
  %526 = vmatprep.mubr.bf16.mxu0 0
  %527 = vmatmul.mubr.bf16.gmra.mrb[0].mxu0 %v104
  %v528 = vpop.f32.mrb[0].mxu0
  %v529 = vadd.f32 %v409, %v528
  %v530 = vpop.f32.mrb[0].mxu0
  %v531 = vpop.f32.mrb[0].mxu0
  %v532 = vadd.f32 %v412, %v531
  %v533 = vpop.f32.mrb[0].mxu0
  %534 = vmatprep.mubr.bf16.mxu0 0
  %535 = vmatmul.mubr.bf16.gmra.mrb[0].mxu0 %v107
  %v536 = vpop.f32.mrb[0].mxu0
  %v537 = vadd.f32 %v417, %v536
  %v538 = vpop.f32.mrb[0].mxu0
  %v539 = vpop.f32.mrb[0].mxu0
  %v540 = vadd.f32 %v420, %v539
  %v541 = vpop.f32.mrb[0].mxu0
  %542 = vmatprep.mubr.bf16.mxu0 0
  %543 = vmatmul.mubr.bf16.gmra.mrb[0].mxu0 %v110
  %v544 = vpop.f32.mrb[0].mxu0
  %v545 = vadd.f32 %v425, %v544
  %v546 = vpop.f32.mrb[0].mxu0
  %v547 = vpop.f32.mrb[0].mxu0
  %v548 = vpop.f32.mrb[0].mxu0
  %549 = vdwg.mxu0
  %550 = vst [vmem:[%s3] sm:$0xff] %v465
  %551 = vst [vmem:[%s3 + $0x8] sm:$0xff] %v468
  %552 = vst [vmem:[%s3 + $0x10] sm:$0xff] %v473
  %553 = vst [vmem:[%s3 + $0x18] sm:$0xff] %v476
  %554 = vst [vmem:[%s3 + $0x20] sm:$0xff] %v481
  %555 = vst [vmem:[%s3 + $0x28] sm:$0xff] %v484
  %556 = vst [vmem:[%s3 + $0x30] sm:$0xff] %v489
  %557 = vst [vmem:[%s3 + $0x38] sm:$0xff] %v492
  %558 = vst [vmem:[%s3 + $0x40] sm:$0xff] %v497
  %559 = vst [vmem:[%s3 + $0x48] sm:$0xff] %v500
  %560 = vst [vmem:[%s3 + $0x50] sm:$0xff] %v505
  %561 = vst [vmem:[%s3 + $0x58] sm:$0xff] %v508
  %562 = vst [vmem:[%s3 + $0x60] sm:$0xff] %v513
  %563 = vst [vmem:[%s3 + $0x68] sm:$0xff] %v516
  %564 = vst [vmem:[%s3 + $0x70] sm:$0xff] %v521
  %565 = vst [vmem:[%s3 + $0x78] sm:$0xff] %v524
  %566 = vst [vmem:[%s3 + $0x80] sm:$0xff] %v529
  %567 = vst [vmem:[%s3 + $0x88] sm:$0xff] %v532
  %568 = vst [vmem:[%s3 + $0x90] sm:$0xff] %v537
  %569 = vst [vmem:[%s3 + $0x98] sm:$0xff] %v540
  %570 = vst [vmem:[%s3 + $0xa0] sm:$0x3] %v545
  // Predicated region
  $region14: #{celeba_img_decoder_forward.16} parent=0 // pred_check
    _
  $region15: #{celeba_img_decoder_forward.16} parent=0 // pred_check_branch
    %572 = sbr.rel (0) target = $region17
  $region16: #{celeba_img_decoder_forward.16} parent=0 // pred_region
    _
  $region17: #{celeba_img_decoder_forward.16} parent=0 // pred_fallthru
    _
  // Predicated region
  $region18: #{celeba_img_decoder_forward.16} parent=0 // pred_check
    _
  $region19: #{celeba_img_decoder_forward.16} parent=0 // pred_check_branch
    %574 = sbr.rel (0) target = $region21
  $region20: #{celeba_img_decoder_forward.16} parent=0 // pred_region
    _
  $region21: #{celeba_img_decoder_forward.16} parent=0 // pred_fallthru
    _

// kernel: celeba_img_decoder_forward.17
$region0: #{celeba_img_decoder_forward.17}
  #allocation0 [shape = 'u32[]', space=smem, size = 0x4, offset = 0x4, fixed_abs, tag = 'smem constant byte address 0x4 - core index']
  #allocation1 [shape = 'u32[144,128]{1,0:T(1,128)}', space=vmem, size = 0x12000, scoped, tag = 'internal scratch']
  %s0 = inlined_call_operand.vmem [shape: f32[512,32], index: 0, kind: input, shape index: {}]
  %s1 = inlined_call_operand.vmem [shape: bf16[32,32], index: 1, kind: input, shape index: {}]
  %s2 = inlined_call_operand.vmem [shape: f32[1,32], index: 2, kind: input, shape index: {}]
  %s3 = inlined_call_operand.vmem [shape: f32[1,32], index: 3, kind: input, shape index: {}]
  %s4 = inlined_call_operand.vmem [shape: f32[1,32], index: 4, kind: input, shape index: {}]
  %s5 = inlined_call_operand.vmem [shape: f32[1,32], index: 5, kind: input, shape index: {}]
  %s6 = inlined_call_operand.vmem [shape: f32[512,32], index: 6, kind: output, shape index: {}]
  %s7 = sld [smem:[#allocation0]]
  $region57: #{celeba_img_decoder_forward.17} parent=0
    _
  %s9 = ssub.s32 1, %s7
  %s10 = scalar_select 0, %s9, %s7
  loop: start=0, step=1, limit=4
  $region2: #{celeba_img_decoder_forward.17} parent=0 // loop_pre_header
    _
  $region3: #{celeba_img_decoder_forward.17} parent=0 // loop_header
    %s12 = sphi 0, %s16
    %p13 = scmp.ge.s32.totalorder %s12, 4
    %s22 = sphi 0, %s24
    %s25 = sphi 0, %s22
    %s26 = sphi 0, %s25
    %s42 = sphi 0, %s26
    %s46 = sphi 0, %s46
    %s48 = sphi 0, %s46
    %s49 = sphi 0, %s48
    %s63 = sphi 0, %s49
    %s67 = sphi 0, %s67
    %s69 = sphi 0, %s67
    %s70 = sphi 0, %s69
    %s84 = sphi 0, %s70
    %s88 = sphi 0, %s88
    %s90 = sphi 0, %s88
    %s91 = sphi 0, %s90
    %s105 = sphi 0, %s91
    %s109 = sphi 0, %s109
    %s111 = sphi 0, %s109
    %s112 = sphi 0, %s111
    %s126 = sphi 0, %s112
    %s130 = sphi 0, %s130
    %s132 = sphi 0, %s130
    %s133 = sphi 0, %s132
    %s147 = sphi 0, %s133
    %s153 = sphi 0, %s155
    %s156 = sphi 0, %s153
    %s157 = sphi 0, %s156
    %s173 = sphi 0, %s157
  $region4: #{celeba_img_decoder_forward.17} parent=0 // loop_header_branch
    %15 = sbr.rel (%p13) target = $region8
  $region5: #{celeba_img_decoder_forward.17} parent=0 // loop_body
    %s17 = ssub.s32 %s12, 1
    %s18 = ssub.s32 %s12, 2
    %s19 = sadd.s32 %s12, 1
    %s20 = ssub.s32 %s12, %s19
    %p21 = scmp.eq.s32.totalorder %s20, 0
    %s23 = sadd.s32 %s22, 1
    %s24 = scalar_select %p21, %s22, %s23
    %p27 = pneg %p21
    %p28 = scmp.eq.s32.totalorder %s12, 1
    %p29 = por %p27, %p28
    %p30 = scmp.ne.s32.totalorder %s22, %s25
    %p31 = scmp.eq.s32.totalorder %s12, 0
    %p32 = por %p30, %p31
    %p33 = scmp.ne.s32.totalorder %s22, %s25
    %p34 = scmp.eq.s32.totalorder %s17, 1
    %p35 = por %p33, %p34
    %p36 = scmp.ne.s32.totalorder %s25, %s26
    %p37 = scmp.eq.s32.totalorder %s17, 0
    %p38 = por %p36, %p37
    %p39 = scmp.ne.s32.totalorder %s25, %s26
    %p40 = scmp.eq.s32.totalorder %s18, 1
    %p41 = por %p39, %p40
    %p43 = scmp.ne.s32.totalorder %s26, %s42
    %p44 = scmp.eq.s32.totalorder %s18, 0
    %p45 = por %p43, %p44
    %s47 = sadd.s32 %s46, 1
    %p50 = scmp.eq.s32.totalorder %s12, 1
    %p51 = scmp.ne.s32.totalorder %s46, %s48
    %p52 = scmp.eq.s32.totalorder %s12, 0
    %p53 = por %p51, %p52
    %p54 = scmp.ne.s32.totalorder %s46, %s48
    %p55 = scmp.eq.s32.totalorder %s17, 1
    %p56 = por %p54, %p55
    %p57 = scmp.ne.s32.totalorder %s48, %s49
    %p58 = scmp.eq.s32.totalorder %s17, 0
    %p59 = por %p57, %p58
    %p60 = scmp.ne.s32.totalorder %s48, %s49
    %p61 = scmp.eq.s32.totalorder %s18, 1
    %p62 = por %p60, %p61
    %p64 = scmp.ne.s32.totalorder %s49, %s63
    %p65 = scmp.eq.s32.totalorder %s18, 0
    %p66 = por %p64, %p65
    %s68 = sadd.s32 %s67, 1
    %p71 = scmp.eq.s32.totalorder %s12, 1
    %p72 = scmp.ne.s32.totalorder %s67, %s69
    %p73 = scmp.eq.s32.totalorder %s12, 0
    %p74 = por %p72, %p73
    %p75 = scmp.ne.s32.totalorder %s67, %s69
    %p76 = scmp.eq.s32.totalorder %s17, 1
    %p77 = por %p75, %p76
    %p78 = scmp.ne.s32.totalorder %s69, %s70
    %p79 = scmp.eq.s32.totalorder %s17, 0
    %p80 = por %p78, %p79
    %p81 = scmp.ne.s32.totalorder %s69, %s70
    %p82 = scmp.eq.s32.totalorder %s18, 1
    %p83 = por %p81, %p82
    %p85 = scmp.ne.s32.totalorder %s70, %s84
    %p86 = scmp.eq.s32.totalorder %s18, 0
    %p87 = por %p85, %p86
    %s89 = sadd.s32 %s88, 1
    %p92 = scmp.eq.s32.totalorder %s12, 1
    %p93 = scmp.ne.s32.totalorder %s88, %s90
    %p94 = scmp.eq.s32.totalorder %s12, 0
    %p95 = por %p93, %p94
    %p96 = scmp.ne.s32.totalorder %s88, %s90
    %p97 = scmp.eq.s32.totalorder %s17, 1
    %p98 = por %p96, %p97
    %p99 = scmp.ne.s32.totalorder %s90, %s91
    %p100 = scmp.eq.s32.totalorder %s17, 0
    %p101 = por %p99, %p100
    %p102 = scmp.ne.s32.totalorder %s90, %s91
    %p103 = scmp.eq.s32.totalorder %s18, 1
    %p104 = por %p102, %p103
    %p106 = scmp.ne.s32.totalorder %s91, %s105
    %p107 = scmp.eq.s32.totalorder %s18, 0
    %p108 = por %p106, %p107
    %s110 = sadd.s32 %s109, 1
    %p113 = scmp.eq.s32.totalorder %s12, 1
    %p114 = scmp.ne.s32.totalorder %s109, %s111
    %p115 = scmp.eq.s32.totalorder %s12, 0
    %p116 = por %p114, %p115
    %p117 = scmp.ne.s32.totalorder %s109, %s111
    %p118 = scmp.eq.s32.totalorder %s17, 1
    %p119 = por %p117, %p118
    %p120 = scmp.ne.s32.totalorder %s111, %s112
    %p121 = scmp.eq.s32.totalorder %s17, 0
    %p122 = por %p120, %p121
    %p123 = scmp.ne.s32.totalorder %s111, %s112
    %p124 = scmp.eq.s32.totalorder %s18, 1
    %p125 = por %p123, %p124
    %p127 = scmp.ne.s32.totalorder %s112, %s126
    %p128 = scmp.eq.s32.totalorder %s18, 0
    %p129 = por %p127, %p128
    %s131 = sadd.s32 %s130, 1
    %p134 = scmp.eq.s32.totalorder %s12, 1
    %p135 = scmp.ne.s32.totalorder %s130, %s132
    %p136 = scmp.eq.s32.totalorder %s12, 0
    %p137 = por %p135, %p136
    %p138 = scmp.ne.s32.totalorder %s130, %s132
    %p139 = scmp.eq.s32.totalorder %s17, 1
    %p140 = por %p138, %p139
    %p141 = scmp.ne.s32.totalorder %s132, %s133
    %p142 = scmp.eq.s32.totalorder %s17, 0
    %p143 = por %p141, %p142
    %p144 = scmp.ne.s32.totalorder %s132, %s133
    %p145 = scmp.eq.s32.totalorder %s18, 1
    %p146 = por %p144, %p145
    %p148 = scmp.ne.s32.totalorder %s133, %s147
    %p149 = scmp.eq.s32.totalorder %s18, 0
    %p150 = por %p148, %p149
    %s151 = ssub.s32 %s12, %s19
    %p152 = scmp.eq.s32.totalorder %s151, 0
    %s154 = sadd.s32 %s153, 1
    %s155 = scalar_select %p152, %s153, %s154
    %p158 = pneg %p152
    %p159 = scmp.eq.s32.totalorder %s12, 1
    %p160 = por %p158, %p159
    %p161 = scmp.ne.s32.totalorder %s153, %s156
    %p162 = scmp.eq.s32.totalorder %s12, 0
    %p163 = por %p161, %p162
    %p164 = scmp.ne.s32.totalorder %s153, %s156
    %p165 = scmp.eq.s32.totalorder %s17, 1
    %p166 = por %p164, %p165
    %p167 = scmp.ne.s32.totalorder %s156, %s157
    %p168 = scmp.eq.s32.totalorder %s17, 0
    %p169 = por %p167, %p168
    %p170 = scmp.ne.s32.totalorder %s156, %s157
    %p171 = scmp.eq.s32.totalorder %s18, 1
    %p172 = por %p170, %p171
    %p174 = scmp.ne.s32.totalorder %s157, %s173
    %p175 = scmp.eq.s32.totalorder %s18, 0
    %p176 = por %p174, %p175
    %p177 = scmp.le.s32.totalorder 1, %s12
    %p178 = scmp.lt.s32.totalorder %s12, 3
    %p179 = pnand %p177, %p178
    %p180 = pneg %p179
    // Predicated region
    $region9: #{celeba_img_decoder_forward.17} parent=5 // pred_check
      _
    $region10: #{celeba_img_decoder_forward.17} parent=5 // pred_check_branch
      %182 = sbr.rel (%p179) target = $region12
    $region11: #{celeba_img_decoder_forward.17} parent=5 // pred_region
      %s183 = ssub.s32 %s12, 1
      // Predicated region
      $region13: #{celeba_img_decoder_forward.17} parent=11 // pred_check
        %p184 = pneg %p59
      $region14: #{celeba_img_decoder_forward.17} parent=11 // pred_check_branch
        %186 = sbr.rel (%p184) target = $region16
      $region15: #{celeba_img_decoder_forward.17} parent=11 // pred_region
        _
      $region16: #{celeba_img_decoder_forward.17} parent=11 // pred_fallthru
        _
      // Predicated region
      $region17: #{celeba_img_decoder_forward.17} parent=11 // pred_check
        %p187 = pneg %p80
      $region18: #{celeba_img_decoder_forward.17} parent=11 // pred_check_branch
        %189 = sbr.rel (%p187) target = $region20
      $region19: #{celeba_img_decoder_forward.17} parent=11 // pred_region
        _
      $region20: #{celeba_img_decoder_forward.17} parent=11 // pred_fallthru
        _
      // Predicated region
      $region21: #{celeba_img_decoder_forward.17} parent=11 // pred_check
        %p190 = pneg %p101
      $region22: #{celeba_img_decoder_forward.17} parent=11 // pred_check_branch
        %192 = sbr.rel (%p190) target = $region24
      $region23: #{celeba_img_decoder_forward.17} parent=11 // pred_region
        _
      $region24: #{celeba_img_decoder_forward.17} parent=11 // pred_fallthru
        _
      // Predicated region
      $region25: #{celeba_img_decoder_forward.17} parent=11 // pred_check
        %p193 = pneg %p122
      $region26: #{celeba_img_decoder_forward.17} parent=11 // pred_check_branch
        %195 = sbr.rel (%p193) target = $region28
      $region27: #{celeba_img_decoder_forward.17} parent=11 // pred_region
        _
      $region28: #{celeba_img_decoder_forward.17} parent=11 // pred_fallthru
        _
      // Predicated region
      $region29: #{celeba_img_decoder_forward.17} parent=11 // pred_check
        %p196 = pneg %p143
      $region30: #{celeba_img_decoder_forward.17} parent=11 // pred_check_branch
        %198 = sbr.rel (%p196) target = $region32
      $region31: #{celeba_img_decoder_forward.17} parent=11 // pred_region
        _
      $region32: #{celeba_img_decoder_forward.17} parent=11 // pred_fallthru
        _
    $region12: #{celeba_img_decoder_forward.17} parent=5 // pred_fallthru
      _
    %p199 = scmp.lt.s32.totalorder %s12, 2
    // Predicated region
    $region33: #{celeba_img_decoder_forward.17} parent=5 // pred_check
      %p200 = pneg %p199
    $region34: #{celeba_img_decoder_forward.17} parent=5 // pred_check_branch
      %202 = sbr.rel (%p200) target = $region36
    $region35: #{celeba_img_decoder_forward.17} parent=5 // pred_region
      // Predicated region
      $region37: #{celeba_img_decoder_forward.17} parent=35 // pred_check
        %p203 = pneg %p32
      $region38: #{celeba_img_decoder_forward.17} parent=35 // pred_check_branch
        %205 = sbr.rel (%p203) target = $region40
      $region39: #{celeba_img_decoder_forward.17} parent=35 // pred_region
        %s206 = smul.u32 32, %s12
        %p207 = scmp.lt.s32.totalorder %s206, 63
        %s208 = scalar_select %p207, %s206, 63
        %s209 = smul.addr %s208, 8
        %s210 = scalar_lea.vmem %s0, %s209
        %s211 = smul.u32 32, %s12
      $region40: #{celeba_img_decoder_forward.17} parent=35 // pred_fallthru
        _
    $region36: #{celeba_img_decoder_forward.17} parent=5 // pred_fallthru
      _
    %p212 = scmp.le.s32.totalorder 1, %s12
    %p213 = scmp.lt.s32.totalorder %s12, 3
    %p214 = pnand %p212, %p213
    %p215 = pneg %p214
    // Predicated region
    $region41: #{celeba_img_decoder_forward.17} parent=5 // pred_check
      _
    $region42: #{celeba_img_decoder_forward.17} parent=5 // pred_check_branch
      %217 = sbr.rel (%p214) target = $region44
    $region43: #{celeba_img_decoder_forward.17} parent=5 // pred_region
      %s218 = ssub.s32 %s12, 1
      %s219 = smul.u32 32, %s17
      %p220 = scmp.lt.s32.totalorder %s219, 63
      %s221 = scalar_select %p220, %s219, 63
      %s222 = smul.addr %s221, 8
      %s223 = scalar_lea.vmem %s0, %s222
      %p224 = pneg %p38
      %p225 = pneg %p35
      %p226 = pneg %p59
      %p227 = pneg %p56
      %p228 = pneg %p80
      %p229 = pneg %p77
      %p230 = pneg %p101
      %p231 = pneg %p98
      %p232 = pneg %p122
      %p233 = pneg %p119
      %p234 = pneg %p143
      %p235 = pneg %p140
      %p236 = pneg %p169
      %p237 = pneg %p166
      %s238 = smul.u32 32, %s17
      %p239 = scmp.lt.s32.totalorder %s238, 63
      %s240 = scalar_select %p239, %s238, 63
      %s241 = smul.addr %s240, 8
      %s242 = scalar_lea.vmem %s6, %s241
      %s243 = smul.u32 32, %s17
      %p244 = scmp.lt.s32.totalorder %s243, 63
      %s245 = scalar_select %p244, %s243, 63
      %s246 = smul.addr %s245, 8
      %s247 = scalar_lea.vmem %s0, %s246
      %s248 = smul.u32 32, %s17
      %s249 = smul.u32 32, %s17
      %p250 = scmp.lt.s32.totalorder %s249, 63
      %s251 = scalar_select %p250, %s249, 63
      %s252 = smul.addr %s251, 8
      %s253 = scalar_lea.vmem %s6, %s252
      %s254 = smul.u32 32, %s17
      %v256 = vld [vmem:[%s247] sm:$0xff]
      %v257 = vld [vmem:[%s247 + $0x8] sm:$0xff]
      %v258 = vld [vmem:[%s247 + $0x10] sm:$0xff]
      %v259 = vld [vmem:[%s247 + $0x18] sm:$0xff]
      %v260 = vld [vmem:[%s247 + $0x20] sm:$0xff]
      %v261 = vld [vmem:[%s247 + $0x28] sm:$0xff]
      %v262 = vld [vmem:[%s247 + $0x30] sm:$0xff]
      %v263 = vld [vmem:[%s247 + $0x38] sm:$0xff]
      %v264 = vld [vmem:[%s247 + $0x40] sm:$0xff]
      %v265 = vld [vmem:[%s247 + $0x48] sm:$0xff]
      %v266 = vld [vmem:[%s247 + $0x50] sm:$0xff]
      %v267 = vld [vmem:[%s247 + $0x58] sm:$0xff]
      %v268 = vld [vmem:[%s247 + $0x60] sm:$0xff]
      %v269 = vld [vmem:[%s247 + $0x68] sm:$0xff]
      %v270 = vld [vmem:[%s247 + $0x70] sm:$0xff]
      %v271 = vld [vmem:[%s247 + $0x78] sm:$0xff]
      %v272 = vld [vmem:[%s247 + $0x80] sm:$0xff]
      %v273 = vld [vmem:[%s247 + $0x88] sm:$0xff]
      %v274 = vld [vmem:[%s247 + $0x90] sm:$0xff]
      %v275 = vld [vmem:[%s247 + $0x98] sm:$0xff]
      %v276 = vld [vmem:[%s247 + $0xa0] sm:$0xff]
      %v277 = vld [vmem:[%s247 + $0xa8] sm:$0xff]
      %v278 = vld [vmem:[%s247 + $0xb0] sm:$0xff]
      %v279 = vld [vmem:[%s247 + $0xb8] sm:$0xff]
      %v280 = vld [vmem:[%s247 + $0xc0] sm:$0xff]
      %v281 = vld [vmem:[%s247 + $0xc8] sm:$0xff]
      %v282 = vld [vmem:[%s247 + $0xd0] sm:$0xff]
      %v283 = vld [vmem:[%s247 + $0xd8] sm:$0xff]
      %v284 = vld [vmem:[%s247 + $0xe0] sm:$0xff]
      %v285 = vld [vmem:[%s247 + $0xe8] sm:$0xff]
      %v286 = vld [vmem:[%s247 + $0xf0] sm:$0xff]
      %v287 = vld [vmem:[%s247 + $0xf8] sm:$0xff]
      %v288 = vld [vmem:[%s2] sm:$0x1]
      %v290 = vlaneseq
      %v291 = vshrl.u32 %v290, 7
      %v292 = vsub.s32 0, %v291
      %v293 = vrot.slane %v288, %v292
      %v295 = vmul.f32 %v256, %v293
      %v296 = vmul.f32 %v257, %v293
      %v297 = vmul.f32 %v258, %v293
      %v298 = vmul.f32 %v259, %v293
      %v299 = vmul.f32 %v260, %v293
      %v300 = vmul.f32 %v261, %v293
      %v301 = vmul.f32 %v262, %v293
      %v302 = vmul.f32 %v263, %v293
      %v303 = vmul.f32 %v264, %v293
      %v304 = vmul.f32 %v265, %v293
      %v305 = vmul.f32 %v266, %v293
      %v306 = vmul.f32 %v267, %v293
      %v307 = vmul.f32 %v268, %v293
      %v308 = vmul.f32 %v269, %v293
      %v309 = vmul.f32 %v270, %v293
      %v310 = vmul.f32 %v271, %v293
      %v311 = vmul.f32 %v272, %v293
      %v312 = vmul.f32 %v273, %v293
      %v313 = vmul.f32 %v274, %v293
      %v314 = vmul.f32 %v275, %v293
      %v315 = vmul.f32 %v276, %v293
      %v316 = vmul.f32 %v277, %v293
      %v317 = vmul.f32 %v278, %v293
      %v318 = vmul.f32 %v279, %v293
      %v319 = vmul.f32 %v280, %v293
      %v320 = vmul.f32 %v281, %v293
      %v321 = vmul.f32 %v282, %v293
      %v322 = vmul.f32 %v283, %v293
      %v323 = vmul.f32 %v284, %v293
      %v324 = vmul.f32 %v285, %v293
      %v325 = vmul.f32 %v286, %v293
      %v326 = vmul.f32 %v287, %v293
      %v327 = vld [vmem:[%s3] sm:$0x1]
      %v329 = vlaneseq
      %v330 = vshrl.u32 %v329, 7
      %v331 = vsub.s32 0, %v330
      %v332 = vrot.slane %v327, %v331
      %v334 = vadd.f32 %v295, %v332
      %v335 = vadd.f32 %v296, %v332
      %v336 = vadd.f32 %v297, %v332
      %v337 = vadd.f32 %v298, %v332
      %v338 = vadd.f32 %v299, %v332
      %v339 = vadd.f32 %v300, %v332
      %v340 = vadd.f32 %v301, %v332
      %v341 = vadd.f32 %v302, %v332
      %v342 = vadd.f32 %v303, %v332
      %v343 = vadd.f32 %v304, %v332
      %v344 = vadd.f32 %v305, %v332
      %v345 = vadd.f32 %v306, %v332
      %v346 = vadd.f32 %v307, %v332
      %v347 = vadd.f32 %v308, %v332
      %v348 = vadd.f32 %v309, %v332
      %v349 = vadd.f32 %v310, %v332
      %v350 = vadd.f32 %v311, %v332
      %v351 = vadd.f32 %v312, %v332
      %v352 = vadd.f32 %v313, %v332
      %v353 = vadd.f32 %v314, %v332
      %v354 = vadd.f32 %v315, %v332
      %v355 = vadd.f32 %v316, %v332
      %v356 = vadd.f32 %v317, %v332
      %v357 = vadd.f32 %v318, %v332
      %v358 = vadd.f32 %v319, %v332
      %v359 = vadd.f32 %v320, %v332
      %v360 = vadd.f32 %v321, %v332
      %v361 = vadd.f32 %v322, %v332
      %v362 = vadd.f32 %v323, %v332
      %v363 = vadd.f32 %v324, %v332
      %v364 = vadd.f32 %v325, %v332
      %v365 = vadd.f32 %v326, %v332
      %v366 = vmax.f32 %v334, 0.0
      %v367 = vmax.f32 %v335, 0.0
      %v368 = vmax.f32 %v336, 0.0
      %v369 = vmax.f32 %v337, 0.0
      %v370 = vmax.f32 %v338, 0.0
      %v371 = vmax.f32 %v339, 0.0
      %v372 = vmax.f32 %v340, 0.0
      %v373 = vmax.f32 %v341, 0.0
      %v374 = vmax.f32 %v342, 0.0
      %v375 = vmax.f32 %v343, 0.0
      %v376 = vmax.f32 %v344, 0.0
      %v377 = vmax.f32 %v345, 0.0
      %v378 = vmax.f32 %v346, 0.0
      %v379 = vmax.f32 %v347, 0.0
      %v380 = vmax.f32 %v348, 0.0
      %v381 = vmax.f32 %v349, 0.0
      %v382 = vmax.f32 %v350, 0.0
      %v383 = vmax.f32 %v351, 0.0
      %v384 = vmax.f32 %v352, 0.0
      %v385 = vmax.f32 %v353, 0.0
      %v386 = vmax.f32 %v354, 0.0
      %v387 = vmax.f32 %v355, 0.0
      %v388 = vmax.f32 %v356, 0.0
      %v389 = vmax.f32 %v357, 0.0
      %v390 = vmax.f32 %v358, 0.0
      %v391 = vmax.f32 %v359, 0.0
      %v392 = vmax.f32 %v360, 0.0
      %v393 = vmax.f32 %v361, 0.0
      %v394 = vmax.f32 %v362, 0.0
      %v395 = vmax.f32 %v363, 0.0
      %v396 = vmax.f32 %v364, 0.0
      %v397 = vmax.f32 %v365, 0.0
      %v398 = vpack.c.bf16 %v367, %v366
      %v399 = vpack.c.bf16 %v369, %v368
      %v400 = vpack.c.bf16 %v371, %v370
      %v401 = vpack.c.bf16 %v373, %v372
      %v402 = vpack.c.bf16 %v375, %v374
      %v403 = vpack.c.bf16 %v377, %v376
      %v404 = vpack.c.bf16 %v379, %v378
      %v405 = vpack.c.bf16 %v381, %v380
      %v406 = vpack.c.bf16 %v383, %v382
      %v407 = vpack.c.bf16 %v385, %v384
      %v408 = vpack.c.bf16 %v387, %v386
      %v409 = vpack.c.bf16 %v389, %v388
      %v410 = vpack.c.bf16 %v391, %v390
      %v411 = vpack.c.bf16 %v393, %v392
      %v412 = vpack.c.bf16 %v395, %v394
      %v413 = vpack.c.bf16 %v397, %v396
      %v414 = vld [vmem:[%s1] sm:$0xf]
      %v415 = vld [vmem:[%s1 + $0x4] sm:$0xf]
      %v416 = vld [vmem:[%s1 + $0x8] sm:$0xf]
      %v417 = vld [vmem:[%s1 + $0xc] sm:$0xf]
      %v422 = vunpack.c.l.b16 %v414
      %v423 = vunpack.c.l.b16 %v415
      %v424 = vunpack.c.l.b16 %v416
      %v425 = vunpack.c.l.b16 %v417
      %v426 = vpack.c.b16 %v423, %v422
      %v427 = vpack.c.b16 %v425, %v424
      %vm430 = vcmask 261120
      %v432 = vsel %vm430, %v398, 0
      %v435 = vsel %vm430, %v399, 0
      %v438 = vsel %vm430, %v400, 0
      %v441 = vsel %vm430, %v401, 0
      %v444 = vsel %vm430, %v402, 0
      %v447 = vsel %vm430, %v403, 0
      %v450 = vsel %vm430, %v404, 0
      %v453 = vsel %vm430, %v405, 0
      %v456 = vsel %vm430, %v406, 0
      %v459 = vsel %vm430, %v407, 0
      %v462 = vsel %vm430, %v408, 0
      %v465 = vsel %vm430, %v409, 0
      %v468 = vsel %vm430, %v410, 0
      %v471 = vsel %vm430, %v411, 0
      %v474 = vsel %vm430, %v412, 0
      %v477 = vsel %vm430, %v413, 0
      %479 = vmatprep.subr.bf16.mxu0 0
      %480 = vmatpush1.bf16.msra.mxu0 %v426
      %481 = vmatprep.subr.bf16.mxu0 0
      %482 = vmatpush1.bf16.msra.mxu0 %v427
      %483 = vmatprep.subr.bf16.mxu0 0
      %484 = vmatpush1.bf16.msra.mxu0 0
      %485 = vmatprep.subr.bf16.mxu0 0
      %486 = vmatpush1.bf16.msra.mxu0 0
      %487 = vmatprep.subr.bf16.mxu0 0
      %488 = vmatpush1.bf16.msra.mxu0 0
      %489 = vmatprep.subr.bf16.mxu0 0
      %490 = vmatpush1.bf16.msra.mxu0 0
      %491 = vmatprep.subr.bf16.mxu0 0
      %492 = vmatpush1.bf16.msra.mxu0 0
      %493 = vmatprep.subr.bf16.mxu0 0
      %494 = vmatpush1.bf16.msra.mxu0 0
      %495 = vmatprep.subr.bf16.mxu0 0
      %496 = vmatpush1.bf16.msra.mxu0 0
      %497 = vmatprep.subr.bf16.mxu0 0
      %498 = vmatpush1.bf16.msra.mxu0 0
      %499 = vmatprep.subr.bf16.mxu0 0
      %500 = vmatpush1.bf16.msra.mxu0 0
      %501 = vmatprep.subr.bf16.mxu0 0
      %502 = vmatpush1.bf16.msra.mxu0 0
      %503 = vmatprep.subr.bf16.mxu0 0
      %504 = vmatpush1.bf16.msra.mxu0 0
      %505 = vmatprep.subr.bf16.mxu0 0
      %506 = vmatpush1.bf16.msra.mxu0 0
      %507 = vmatprep.subr.bf16.mxu0 0
      %508 = vmatpush1.bf16.msra.mxu0 0
      %509 = vmatprep.subr.bf16.mxu0 0
      %510 = vmatpush1.bf16.msra.mxu0 0
      %511 = vmatprep.mubr.bf16.mxu0 0
      %512 = vmatmul.mubr.bf16.gmra.mrb[0].mxu0 %v432
      %v513 = vpop.f32.mrb[0].mxu0
      %v514 = vadd.f32 0.0, %v513
      %v515 = vpop.f32.mrb[0].mxu0
      %v516 = vpop.f32.mrb[0].mxu0
      %v517 = vadd.f32 0.0, %v516
      %v518 = vpop.f32.mrb[0].mxu0
      %519 = vmatprep.mubr.bf16.mxu0 0
      %520 = vmatmul.mubr.bf16.gmra.mrb[0].mxu0 %v435
      %v521 = vpop.f32.mrb[0].mxu0
      %v522 = vadd.f32 0.0, %v521
      %v523 = vpop.f32.mrb[0].mxu0
      %v524 = vpop.f32.mrb[0].mxu0
      %v525 = vadd.f32 0.0, %v524
      %v526 = vpop.f32.mrb[0].mxu0
      %527 = vmatprep.mubr.bf16.mxu0 0
      %528 = vmatmul.mubr.bf16.gmra.mrb[0].mxu0 %v438
      %v529 = vpop.f32.mrb[0].mxu0
      %v530 = vadd.f32 0.0, %v529
      %v531 = vpop.f32.mrb[0].mxu0
      %v532 = vpop.f32.mrb[0].mxu0
      %v533 = vadd.f32 0.0, %v532
      %v534 = vpop.f32.mrb[0].mxu0
      %535 = vmatprep.mubr.bf16.mxu0 0
      %536 = vmatmul.mubr.bf16.gmra.mrb[0].mxu0 %v441
      %v537 = vpop.f32.mrb[0].mxu0
      %v538 = vadd.f32 0.0, %v537
      %v539 = vpop.f32.mrb[0].mxu0
      %v540 = vpop.f32.mrb[0].mxu0
      %v541 = vadd.f32 0.0, %v540
      %v542 = vpop.f32.mrb[0].mxu0
      %543 = vmatprep.mubr.bf16.mxu0 0
      %544 = vmatmul.mubr.bf16.gmra.mrb[0].mxu0 %v444
      %v545 = vpop.f32.mrb[0].mxu0
      %v546 = vadd.f32 0.0, %v545
      %v547 = vpop.f32.mrb[0].mxu0
      %v548 = vpop.f32.mrb[0].mxu0
      %v549 = vadd.f32 0.0, %v548
      %v550 = vpop.f32.mrb[0].mxu0
      %551 = vmatprep.mubr.bf16.mxu0 0
      %552 = vmatmul.mubr.bf16.gmra.mrb[0].mxu0 %v447
      %v553 = vpop.f32.mrb[0].mxu0
      %v554 = vadd.f32 0.0, %v553
      %v555 = vpop.f32.mrb[0].mxu0
      %v556 = vpop.f32.mrb[0].mxu0
      %v557 = vadd.f32 0.0, %v556
      %v558 = vpop.f32.mrb[0].mxu0
      %559 = vmatprep.mubr.bf16.mxu0 0
      %560 = vmatmul.mubr.bf16.gmra.mrb[0].mxu0 %v450
      %v561 = vpop.f32.mrb[0].mxu0
      %v562 = vadd.f32 0.0, %v561
      %v563 = vpop.f32.mrb[0].mxu0
      %v564 = vpop.f32.mrb[0].mxu0
      %v565 = vadd.f32 0.0, %v564
      %v566 = vpop.f32.mrb[0].mxu0
      %567 = vmatprep.mubr.bf16.mxu0 0
      %568 = vmatmul.mubr.bf16.gmra.mrb[0].mxu0 %v453
      %v569 = vpop.f32.mrb[0].mxu0
      %v570 = vadd.f32 0.0, %v569
      %v571 = vpop.f32.mrb[0].mxu0
      %v572 = vpop.f32.mrb[0].mxu0
      %v573 = vadd.f32 0.0, %v572
      %v574 = vpop.f32.mrb[0].mxu0
      %575 = vmatprep.mubr.bf16.mxu0 0
      %576 = vmatmul.mubr.bf16.gmra.mrb[0].mxu0 %v456
      %v577 = vpop.f32.mrb[0].mxu0
      %v578 = vadd.f32 0.0, %v577
      %v579 = vpop.f32.mrb[0].mxu0
      %v580 = vpop.f32.mrb[0].mxu0
      %v581 = vadd.f32 0.0, %v580
      %v582 = vpop.f32.mrb[0].mxu0
      %583 = vmatprep.mubr.bf16.mxu0 0
      %584 = vmatmul.mubr.bf16.gmra.mrb[0].mxu0 %v459
      %v585 = vpop.f32.mrb[0].mxu0
      %v586 = vadd.f32 0.0, %v585
      %v587 = vpop.f32.mrb[0].mxu0
      %v588 = vpop.f32.mrb[0].mxu0
      %v589 = vadd.f32 0.0, %v588
      %v590 = vpop.f32.mrb[0].mxu0
      %591 = vmatprep.mubr.bf16.mxu0 0
      %592 = vmatmul.mubr.bf16.gmra.mrb[0].mxu0 %v462
      %v593 = vpop.f32.mrb[0].mxu0
      %v594 = vadd.f32 0.0, %v593
      %v595 = vpop.f32.mrb[0].mxu0
      %v596 = vpop.f32.mrb[0].mxu0
      %v597 = vadd.f32 0.0, %v596
      %v598 = vpop.f32.mrb[0].mxu0
      %599 = vmatprep.mubr.bf16.mxu0 0
      %600 = vmatmul.mubr.bf16.gmra.mrb[0].mxu0 %v465
      %v601 = vpop.f32.mrb[0].mxu0
      %v602 = vadd.f32 0.0, %v601
      %v603 = vpop.f32.mrb[0].mxu0
      %v604 = vpop.f32.mrb[0].mxu0
      %v605 = vadd.f32 0.0, %v604
      %v606 = vpop.f32.mrb[0].mxu0
      %607 = vmatprep.mubr.bf16.mxu0 0
      %608 = vmatmul.mubr.bf16.gmra.mrb[0].mxu0 %v468
      %v609 = vpop.f32.mrb[0].mxu0
      %v610 = vadd.f32 0.0, %v609
      %v611 = vpop.f32.mrb[0].mxu0
      %v612 = vpop.f32.mrb[0].mxu0
      %v613 = vadd.f32 0.0, %v612
      %v614 = vpop.f32.mrb[0].mxu0
      %615 = vmatprep.mubr.bf16.mxu0 0
      %616 = vmatmul.mubr.bf16.gmra.mrb[0].mxu0 %v471
      %v617 = vpop.f32.mrb[0].mxu0
      %v618 = vadd.f32 0.0, %v617
      %v619 = vpop.f32.mrb[0].mxu0
      %v620 = vpop.f32.mrb[0].mxu0
      %v621 = vadd.f32 0.0, %v620
      %v622 = vpop.f32.mrb[0].mxu0
      %623 = vmatprep.mubr.bf16.mxu0 0
      %624 = vmatmul.mubr.bf16.gmra.mrb[0].mxu0 %v474
      %v625 = vpop.f32.mrb[0].mxu0
      %v626 = vadd.f32 0.0, %v625
      %v627 = vpop.f32.mrb[0].mxu0
      %v628 = vpop.f32.mrb[0].mxu0
      %v629 = vadd.f32 0.0, %v628
      %v630 = vpop.f32.mrb[0].mxu0
      %631 = vmatprep.mubr.bf16.mxu0 0
      %632 = vmatmul.mubr.bf16.gmra.mrb[0].mxu0 %v477
      %v633 = vpop.f32.mrb[0].mxu0
      %v634 = vadd.f32 0.0, %v633
      %v635 = vpop.f32.mrb[0].mxu0
      %v636 = vpop.f32.mrb[0].mxu0
      %v637 = vadd.f32 0.0, %v636
      %v638 = vpop.f32.mrb[0].mxu0
      %639 = vdwg.mxu0
      %v640 = vld [vmem:[%s4] sm:$0x1]
      %v642 = vlaneseq
      %v643 = vshrl.u32 %v642, 7
      %v644 = vsub.s32 0, %v643
      %v645 = vrot.slane %v640, %v644
      %v647 = vmul.f32 %v514, %v645
      %v648 = vmul.f32 %v517, %v645
      %v649 = vmul.f32 %v522, %v645
      %v650 = vmul.f32 %v525, %v645
      %v651 = vmul.f32 %v530, %v645
      %v652 = vmul.f32 %v533, %v645
      %v653 = vmul.f32 %v538, %v645
      %v654 = vmul.f32 %v541, %v645
      %v655 = vmul.f32 %v546, %v645
      %v656 = vmul.f32 %v549, %v645
      %v657 = vmul.f32 %v554, %v645
      %v658 = vmul.f32 %v557, %v645
      %v659 = vmul.f32 %v562, %v645
      %v660 = vmul.f32 %v565, %v645
      %v661 = vmul.f32 %v570, %v645
      %v662 = vmul.f32 %v573, %v645
      %v663 = vmul.f32 %v578, %v645
      %v664 = vmul.f32 %v581, %v645
      %v665 = vmul.f32 %v586, %v645
      %v666 = vmul.f32 %v589, %v645
      %v667 = vmul.f32 %v594, %v645
      %v668 = vmul.f32 %v597, %v645
      %v669 = vmul.f32 %v602, %v645
      %v670 = vmul.f32 %v605, %v645
      %v671 = vmul.f32 %v610, %v645
      %v672 = vmul.f32 %v613, %v645
      %v673 = vmul.f32 %v618, %v645
      %v674 = vmul.f32 %v621, %v645
      %v675 = vmul.f32 %v626, %v645
      %v676 = vmul.f32 %v629, %v645
      %v677 = vmul.f32 %v634, %v645
      %v678 = vmul.f32 %v637, %v645
      %v679 = vld [vmem:[%s5] sm:$0x1]
      %v681 = vlaneseq
      %v682 = vshrl.u32 %v681, 7
      %v683 = vsub.s32 0, %v682
      %v684 = vrot.slane %v679, %v683
      %v686 = vadd.f32 %v647, %v684
      %v687 = vadd.f32 %v648, %v684
      %v688 = vadd.f32 %v649, %v684
      %v689 = vadd.f32 %v650, %v684
      %v690 = vadd.f32 %v651, %v684
      %v691 = vadd.f32 %v652, %v684
      %v692 = vadd.f32 %v653, %v684
      %v693 = vadd.f32 %v654, %v684
      %v694 = vadd.f32 %v655, %v684
      %v695 = vadd.f32 %v656, %v684
      %v696 = vadd.f32 %v657, %v684
      %v697 = vadd.f32 %v658, %v684
      %v698 = vadd.f32 %v659, %v684
      %v699 = vadd.f32 %v660, %v684
      %v700 = vadd.f32 %v661, %v684
      %v701 = vadd.f32 %v662, %v684
      %v702 = vadd.f32 %v663, %v684
      %v703 = vadd.f32 %v664, %v684
      %v704 = vadd.f32 %v665, %v684
      %v705 = vadd.f32 %v666, %v684
      %v706 = vadd.f32 %v667, %v684
      %v707 = vadd.f32 %v668, %v684
      %v708 = vadd.f32 %v669, %v684
      %v709 = vadd.f32 %v670, %v684
      %v710 = vadd.f32 %v671, %v684
      %v711 = vadd.f32 %v672, %v684
      %v712 = vadd.f32 %v673, %v684
      %v713 = vadd.f32 %v674, %v684
      %v714 = vadd.f32 %v675, %v684
      %v715 = vadd.f32 %v676, %v684
      %v716 = vadd.f32 %v677, %v684
      %v717 = vadd.f32 %v678, %v684
      %v718 = vmax.f32 %v686, 0.0
      %v719 = vmax.f32 %v687, 0.0
      %v720 = vmax.f32 %v688, 0.0
      %v721 = vmax.f32 %v689, 0.0
      %v722 = vmax.f32 %v690, 0.0
      %v723 = vmax.f32 %v691, 0.0
      %v724 = vmax.f32 %v692, 0.0
      %v725 = vmax.f32 %v693, 0.0
      %v726 = vmax.f32 %v694, 0.0
      %v727 = vmax.f32 %v695, 0.0
      %v728 = vmax.f32 %v696, 0.0
      %v729 = vmax.f32 %v697, 0.0
      %v730 = vmax.f32 %v698, 0.0
      %v731 = vmax.f32 %v699, 0.0
      %v732 = vmax.f32 %v700, 0.0
      %v733 = vmax.f32 %v701, 0.0
      %v734 = vmax.f32 %v702, 0.0
      %v735 = vmax.f32 %v703, 0.0
      %v736 = vmax.f32 %v704, 0.0
      %v737 = vmax.f32 %v705, 0.0
      %v738 = vmax.f32 %v706, 0.0
      %v739 = vmax.f32 %v707, 0.0
      %v740 = vmax.f32 %v708, 0.0
      %v741 = vmax.f32 %v709, 0.0
      %v742 = vmax.f32 %v710, 0.0
      %v743 = vmax.f32 %v711, 0.0
      %v744 = vmax.f32 %v712, 0.0
      %v745 = vmax.f32 %v713, 0.0
      %v746 = vmax.f32 %v714, 0.0
      %v747 = vmax.f32 %v715, 0.0
      %v748 = vmax.f32 %v716, 0.0
      %v749 = vmax.f32 %v717, 0.0
      %750 = vst.msk [vmem:[%s253] sm:$0xff] %vm430, %v718
      %751 = vst.msk [vmem:[%s253 + $0x8] sm:$0xff] %vm430, %v719
      %752 = vst.msk [vmem:[%s253 + $0x10] sm:$0xff] %vm430, %v720
      %753 = vst.msk [vmem:[%s253 + $0x18] sm:$0xff] %vm430, %v721
      %754 = vst.msk [vmem:[%s253 + $0x20] sm:$0xff] %vm430, %v722
      %755 = vst.msk [vmem:[%s253 + $0x28] sm:$0xff] %vm430, %v723
      %756 = vst.msk [vmem:[%s253 + $0x30] sm:$0xff] %vm430, %v724
      %757 = vst.msk [vmem:[%s253 + $0x38] sm:$0xff] %vm430, %v725
      %758 = vst.msk [vmem:[%s253 + $0x40] sm:$0xff] %vm430, %v726
      %759 = vst.msk [vmem:[%s253 + $0x48] sm:$0xff] %vm430, %v727
      %760 = vst.msk [vmem:[%s253 + $0x50] sm:$0xff] %vm430, %v728
      %761 = vst.msk [vmem:[%s253 + $0x58] sm:$0xff] %vm430, %v729
      %762 = vst.msk [vmem:[%s253 + $0x60] sm:$0xff] %vm430, %v730
      %763 = vst.msk [vmem:[%s253 + $0x68] sm:$0xff] %vm430, %v731
      %764 = vst.msk [vmem:[%s253 + $0x70] sm:$0xff] %vm430, %v732
      %765 = vst.msk [vmem:[%s253 + $0x78] sm:$0xff] %vm430, %v733
      %766 = vst.msk [vmem:[%s253 + $0x80] sm:$0xff] %vm430, %v734
      %767 = vst.msk [vmem:[%s253 + $0x88] sm:$0xff] %vm430, %v735
      %768 = vst.msk [vmem:[%s253 + $0x90] sm:$0xff] %vm430, %v736
      %769 = vst.msk [vmem:[%s253 + $0x98] sm:$0xff] %vm430, %v737
      %770 = vst.msk [vmem:[%s253 + $0xa0] sm:$0xff] %vm430, %v738
      %771 = vst.msk [vmem:[%s253 + $0xa8] sm:$0xff] %vm430, %v739
      %772 = vst.msk [vmem:[%s253 + $0xb0] sm:$0xff] %vm430, %v740
      %773 = vst.msk [vmem:[%s253 + $0xb8] sm:$0xff] %vm430, %v741
      %774 = vst.msk [vmem:[%s253 + $0xc0] sm:$0xff] %vm430, %v742
      %775 = vst.msk [vmem:[%s253 + $0xc8] sm:$0xff] %vm430, %v743
      %776 = vst.msk [vmem:[%s253 + $0xd0] sm:$0xff] %vm430, %v744
      %777 = vst.msk [vmem:[%s253 + $0xd8] sm:$0xff] %vm430, %v745
      %778 = vst.msk [vmem:[%s253 + $0xe0] sm:$0xff] %vm430, %v746
      %779 = vst.msk [vmem:[%s253 + $0xe8] sm:$0xff] %vm430, %v747
      %780 = vst.msk [vmem:[%s253 + $0xf0] sm:$0xff] %vm430, %v748
      %781 = vst.msk [vmem:[%s253 + $0xf8] sm:$0xff] %vm430, %v749
      %s782 = smul.u32 32, %s17
      %p783 = scmp.lt.s32.totalorder %s782, 63
      %s784 = scalar_select %p783, %s782, 63
      %s785 = smul.addr %s784, 8
      %s786 = scalar_lea.vmem %s6, %s785
      // Predicated region
      $region45: #{celeba_img_decoder_forward.17} parent=43 // pred_check
        %p787 = pneg %p166
      $region46: #{celeba_img_decoder_forward.17} parent=43 // pred_check_branch
        %789 = sbr.rel (%p787) target = $region48
      $region47: #{celeba_img_decoder_forward.17} parent=43 // pred_region
        %s790 = smul.u32 32, %s17
      $region48: #{celeba_img_decoder_forward.17} parent=43 // pred_fallthru
        _
    $region44: #{celeba_img_decoder_forward.17} parent=5 // pred_fallthru
      _
    %p791 = scmp.le.s32.totalorder 2, %s12
    // Predicated region
    $region49: #{celeba_img_decoder_forward.17} parent=5 // pred_check
      %p792 = pneg %p791
    $region50: #{celeba_img_decoder_forward.17} parent=5 // pred_check_branch
      %794 = sbr.rel (%p792) target = $region52
    $region51: #{celeba_img_decoder_forward.17} parent=5 // pred_region
      %s795 = ssub.s32 %s12, 2
      // Predicated region
      $region53: #{celeba_img_decoder_forward.17} parent=51 // pred_check
        %p796 = pneg %p172
      $region54: #{celeba_img_decoder_forward.17} parent=51 // pred_check_branch
        %798 = sbr.rel (%p796) target = $region56
      $region55: #{celeba_img_decoder_forward.17} parent=51 // pred_region
        %s799 = smul.u32 32, %s18
        %p800 = scmp.lt.s32.totalorder %s799, 63
        %s801 = scalar_select %p800, %s799, 63
        %s802 = smul.addr %s801, 8
        %s803 = scalar_lea.vmem %s6, %s802
      $region56: #{celeba_img_decoder_forward.17} parent=51 // pred_fallthru
        _
    $region52: #{celeba_img_decoder_forward.17} parent=5 // pred_fallthru
      _
  $region6: #{celeba_img_decoder_forward.17} parent=0 // loop_footer
    %s16 = sadd.s32 1, %s12
  $region7: #{celeba_img_decoder_forward.17} parent=0 // loop_footer_branch
    %11 = sbr.rel target = $region3
  $region8: #{celeba_img_decoder_forward.17} parent=0 // loop_exit
    _

// kernel: celeba_img_decoder_forward.18
$region0: #{celeba_img_decoder_forward.18}
  #allocation0 [shape = 'u32[]', space=smem, size = 0x4, offset = 0x4, fixed_abs, tag = 'smem constant byte address 0x4 - core index']
  #allocation1 [shape = 'u32[144,128]{1,0:T(1,128)}', space=vmem, size = 0x12000, scoped, tag = 'internal scratch']
  %s0 = inlined_call_operand.vmem [shape: f32[578,256], index: 0, kind: input, shape index: {}]
  %s1 = inlined_call_operand.vmem [shape: bf16[256,64], index: 1, kind: input, shape index: {}]
  %s2 = inlined_call_operand.vmem [shape: f32[1,64], index: 2, kind: input, shape index: {}]
  %s3 = inlined_call_operand.vmem [shape: f32[578,64], index: 3, kind: output, shape index: {}]
  %s4 = sld [smem:[#allocation0]]
  $region22: #{celeba_img_decoder_forward.18} parent=0
    _
  %s6 = ssub.s32 1, %s4
  %s7 = scalar_select 0, %s6, %s4
  // Predicated region
  $region2: #{celeba_img_decoder_forward.18} parent=0 // pred_check
    _
  $region3: #{celeba_img_decoder_forward.18} parent=0 // pred_check_branch
    %9 = sbr.rel (0) target = $region5
  $region4: #{celeba_img_decoder_forward.18} parent=0 // pred_region
    _
  $region5: #{celeba_img_decoder_forward.18} parent=0 // pred_fallthru
    _
  // Predicated region
  $region6: #{celeba_img_decoder_forward.18} parent=0 // pred_check
    _
  $region7: #{celeba_img_decoder_forward.18} parent=0 // pred_check_branch
    %11 = sbr.rel (0) target = $region9
  $region8: #{celeba_img_decoder_forward.18} parent=0 // pred_region
    _
  $region9: #{celeba_img_decoder_forward.18} parent=0 // pred_fallthru
    _
  // Predicated region
  $region10: #{celeba_img_decoder_forward.18} parent=0 // pred_check
    _
  $region11: #{celeba_img_decoder_forward.18} parent=0 // pred_check_branch
    %13 = sbr.rel (0) target = $region13
  $region12: #{celeba_img_decoder_forward.18} parent=0 // pred_region
    _
  $region13: #{celeba_img_decoder_forward.18} parent=0 // pred_fallthru
    _
  %v15 = vld [vmem:[%s0] sm:$0xff]
  %v16 = vld [vmem:[%s0 + $0x8] sm:$0xff]
  %v17 = vld [vmem:[%s0 + $0x10] sm:$0xff]
  %v18 = vld [vmem:[%s0 + $0x18] sm:$0xff]
  %v19 = vld [vmem:[%s0 + $0x20] sm:$0xff]
  %v20 = vld [vmem:[%s0 + $0x28] sm:$0xff]
  %v21 = vld [vmem:[%s0 + $0x30] sm:$0xff]
  %v22 = vld [vmem:[%s0 + $0x38] sm:$0xff]
  %v23 = vld [vmem:[%s0 + $0x40] sm:$0xff]
  %v24 = vld [vmem:[%s0 + $0x48] sm:$0xff]
  %v25 = vld [vmem:[%s0 + $0x50] sm:$0xff]
  %v26 = vld [vmem:[%s0 + $0x58] sm:$0xff]
  %v27 = vld [vmem:[%s0 + $0x60] sm:$0xff]
  %v28 = vld [vmem:[%s0 + $0x68] sm:$0xff]
  %v29 = vld [vmem:[%s0 + $0x70] sm:$0xff]
  %v30 = vld [vmem:[%s0 + $0x78] sm:$0xff]
  %v31 = vld [vmem:[%s0 + $0x80] sm:$0xff]
  %v32 = vld [vmem:[%s0 + $0x88] sm:$0xff]
  %v33 = vld [vmem:[%s0 + $0x90] sm:$0xff]
  %v34 = vld [vmem:[%s0 + $0x98] sm:$0xff]
  %v35 = vld [vmem:[%s0 + $0xa0] sm:$0xff]
  %v36 = vld [vmem:[%s0 + $0xa8] sm:$0xff]
  %v37 = vld [vmem:[%s0 + $0xb0] sm:$0xff]
  %v38 = vld [vmem:[%s0 + $0xb8] sm:$0xff]
  %v39 = vld [vmem:[%s0 + $0xc0] sm:$0xff]
  %v40 = vld [vmem:[%s0 + $0xc8] sm:$0xff]
  %v41 = vld [vmem:[%s0 + $0xd0] sm:$0xff]
  %v42 = vld [vmem:[%s0 + $0xd8] sm:$0xff]
  %v43 = vld [vmem:[%s0 + $0xe0] sm:$0xff]
  %v44 = vld [vmem:[%s0 + $0xe8] sm:$0xff]
  %v45 = vld [vmem:[%s0 + $0xf0] sm:$0xff]
  %v46 = vld [vmem:[%s0 + $0xf8] sm:$0xff]
  %v47 = vld [vmem:[%s0 + $0x100] sm:$0xff]
  %v48 = vld [vmem:[%s0 + $0x108] sm:$0xff]
  %v49 = vld [vmem:[%s0 + $0x110] sm:$0xff]
  %v50 = vld [vmem:[%s0 + $0x118] sm:$0xff]
  %v51 = vld [vmem:[%s0 + $0x120] sm:$0xff]
  %v52 = vld [vmem:[%s0 + $0x128] sm:$0xff]
  %v53 = vld [vmem:[%s0 + $0x130] sm:$0xff]
  %v54 = vld [vmem:[%s0 + $0x138] sm:$0xff]
  %v55 = vld [vmem:[%s0 + $0x140] sm:$0xff]
  %v56 = vld [vmem:[%s0 + $0x148] sm:$0xff]
  %v57 = vld [vmem:[%s0 + $0x150] sm:$0xff]
  %v58 = vld [vmem:[%s0 + $0x158] sm:$0xff]
  %v59 = vld [vmem:[%s0 + $0x160] sm:$0xff]
  %v60 = vld [vmem:[%s0 + $0x168] sm:$0xff]
  %v61 = vld [vmem:[%s0 + $0x170] sm:$0xff]
  %v62 = vld [vmem:[%s0 + $0x178] sm:$0xff]
  %v63 = vld [vmem:[%s0 + $0x180] sm:$0xff]
  %v64 = vld [vmem:[%s0 + $0x188] sm:$0xff]
  %v65 = vld [vmem:[%s0 + $0x190] sm:$0xff]
  %v66 = vld [vmem:[%s0 + $0x198] sm:$0xff]
  %v67 = vld [vmem:[%s0 + $0x1a0] sm:$0xff]
  %v68 = vld [vmem:[%s0 + $0x1a8] sm:$0xff]
  %v69 = vld [vmem:[%s0 + $0x1b0] sm:$0xff]
  %v70 = vld [vmem:[%s0 + $0x1b8] sm:$0xff]
  %v71 = vld [vmem:[%s0 + $0x1c0] sm:$0xff]
  %v72 = vld [vmem:[%s0 + $0x1c8] sm:$0xff]
  %v73 = vld [vmem:[%s0 + $0x1d0] sm:$0xff]
  %v74 = vld [vmem:[%s0 + $0x1d8] sm:$0xff]
  %v75 = vld [vmem:[%s0 + $0x1e0] sm:$0xff]
  %v76 = vld [vmem:[%s0 + $0x1e8] sm:$0xff]
  %v77 = vld [vmem:[%s0 + $0x1f0] sm:$0xff]
  %v78 = vld [vmem:[%s0 + $0x1f8] sm:$0xff]
  %v79 = vld [vmem:[%s0 + $0x200] sm:$0xff]
  %v80 = vld [vmem:[%s0 + $0x208] sm:$0xff]
  %v81 = vld [vmem:[%s0 + $0x210] sm:$0xff]
  %v82 = vld [vmem:[%s0 + $0x218] sm:$0xff]
  %v83 = vld [vmem:[%s0 + $0x220] sm:$0xff]
  %v84 = vld [vmem:[%s0 + $0x228] sm:$0xff]
  %v85 = vld [vmem:[%s0 + $0x230] sm:$0xff]
  %v86 = vld [vmem:[%s0 + $0x238] sm:$0xff]
  %v87 = vld [vmem:[%s0 + $0x240] sm:$0xff]
  %v88 = vld [vmem:[%s0 + $0x248] sm:$0xff]
  %v89 = vld [vmem:[%s0 + $0x250] sm:$0xff]
  %v90 = vld [vmem:[%s0 + $0x258] sm:$0xff]
  %v91 = vld [vmem:[%s0 + $0x260] sm:$0xff]
  %v92 = vld [vmem:[%s0 + $0x268] sm:$0xff]
  %v93 = vld [vmem:[%s0 + $0x270] sm:$0xff]
  %v94 = vld [vmem:[%s0 + $0x278] sm:$0xff]
  %v95 = vld [vmem:[%s0 + $0x280] sm:$0xff]
  %v96 = vld [vmem:[%s0 + $0x288] sm:$0xff]
  %v97 = vld [vmem:[%s0 + $0x290] sm:$0xff]
  %v98 = vld [vmem:[%s0 + $0x298] sm:$0xff]
  %v99 = vld [vmem:[%s0 + $0x2a0] sm:$0xff]
  %v100 = vld [vmem:[%s0 + $0x2a8] sm:$0xff]
  %v101 = vld [vmem:[%s0 + $0x2b0] sm:$0xff]
  %v102 = vld [vmem:[%s0 + $0x2b8] sm:$0xff]
  %v103 = vld [vmem:[%s0 + $0x2c0] sm:$0xff]
  %v104 = vld [vmem:[%s0 + $0x2c8] sm:$0xff]
  %v105 = vld [vmem:[%s0 + $0x2d0] sm:$0xff]
  %v106 = vld [vmem:[%s0 + $0x2d8] sm:$0xff]
  %v107 = vld [vmem:[%s0 + $0x2e0] sm:$0xff]
  %v108 = vld [vmem:[%s0 + $0x2e8] sm:$0xff]
  %v109 = vld [vmem:[%s0 + $0x2f0] sm:$0xff]
  %v110 = vld [vmem:[%s0 + $0x2f8] sm:$0xff]
  %v111 = vld [vmem:[%s0 + $0x300] sm:$0xff]
  %v112 = vld [vmem:[%s0 + $0x308] sm:$0xff]
  %v113 = vld [vmem:[%s0 + $0x310] sm:$0xff]
  %v114 = vld [vmem:[%s0 + $0x318] sm:$0xff]
  %v115 = vld [vmem:[%s0 + $0x320] sm:$0xff]
  %v116 = vld [vmem:[%s0 + $0x328] sm:$0xff]
  %v117 = vld [vmem:[%s0 + $0x330] sm:$0xff]
  %v118 = vld [vmem:[%s0 + $0x338] sm:$0xff]
  %v119 = vld [vmem:[%s0 + $0x340] sm:$0xff]
  %v120 = vld [vmem:[%s0 + $0x348] sm:$0xff]
  %v121 = vld [vmem:[%s0 + $0x350] sm:$0xff]
  %v122 = vld [vmem:[%s0 + $0x358] sm:$0xff]
  %v123 = vld [vmem:[%s0 + $0x360] sm:$0xff]
  %v124 = vld [vmem:[%s0 + $0x368] sm:$0xff]
  %v125 = vld [vmem:[%s0 + $0x370] sm:$0xff]
  %v126 = vld [vmem:[%s0 + $0x378] sm:$0xff]
  %v127 = vld [vmem:[%s0 + $0x380] sm:$0xff]
  %v128 = vld [vmem:[%s0 + $0x388] sm:$0xff]
  %v129 = vld [vmem:[%s0 + $0x390] sm:$0xff]
  %v130 = vld [vmem:[%s0 + $0x398] sm:$0xff]
  %v131 = vld [vmem:[%s0 + $0x3a0] sm:$0xff]
  %v132 = vld [vmem:[%s0 + $0x3a8] sm:$0xff]
  %v133 = vld [vmem:[%s0 + $0x3b0] sm:$0xff]
  %v134 = vld [vmem:[%s0 + $0x3b8] sm:$0xff]
  %v135 = vld [vmem:[%s0 + $0x3c0] sm:$0xff]
  %v136 = vld [vmem:[%s0 + $0x3c8] sm:$0xff]
  %v137 = vld [vmem:[%s0 + $0x3d0] sm:$0xff]
  %v138 = vld [vmem:[%s0 + $0x3d8] sm:$0xff]
  %v139 = vld [vmem:[%s0 + $0x3e0] sm:$0xff]
  %v140 = vld [vmem:[%s0 + $0x3e8] sm:$0xff]
  %v141 = vld [vmem:[%s0 + $0x3f0] sm:$0xff]
  %v142 = vld [vmem:[%s0 + $0x3f8] sm:$0xff]
  %v143 = vld [vmem:[%s0 + $0x400] sm:$0xff]
  %v144 = vld [vmem:[%s0 + $0x408] sm:$0xff]
  %v145 = vld [vmem:[%s0 + $0x410] sm:$0xff]
  %v146 = vld [vmem:[%s0 + $0x418] sm:$0xff]
  %v147 = vld [vmem:[%s0 + $0x420] sm:$0xff]
  %v148 = vld [vmem:[%s0 + $0x428] sm:$0xff]
  %v149 = vld [vmem:[%s0 + $0x430] sm:$0xff]
  %v150 = vld [vmem:[%s0 + $0x438] sm:$0xff]
  %v151 = vld [vmem:[%s0 + $0x440] sm:$0xff]
  %v152 = vld [vmem:[%s0 + $0x448] sm:$0xff]
  %v153 = vld [vmem:[%s0 + $0x450] sm:$0xff]
  %v154 = vld [vmem:[%s0 + $0x458] sm:$0xff]
  %v155 = vld [vmem:[%s0 + $0x460] sm:$0xff]
  %v156 = vld [vmem:[%s0 + $0x468] sm:$0xff]
  %v157 = vld [vmem:[%s0 + $0x470] sm:$0xff]
  %v158 = vld [vmem:[%s0 + $0x478] sm:$0xff]
  %v159 = vld [vmem:[%s0 + $0x480] sm:$0x3]
  %v160 = vld [vmem:[%s0 + $0x488] sm:$0x3]
  %v161 = vpack.c.bf16 %v17, %v15
  %v162 = vpack.c.bf16 %v18, %v16
  %v163 = vpack.c.bf16 %v21, %v19
  %v164 = vpack.c.bf16 %v22, %v20
  %v165 = vpack.c.bf16 %v25, %v23
  %v166 = vpack.c.bf16 %v26, %v24
  %v167 = vpack.c.bf16 %v29, %v27
  %v168 = vpack.c.bf16 %v30, %v28
  %v169 = vpack.c.bf16 %v33, %v31
  %v170 = vpack.c.bf16 %v34, %v32
  %v171 = vpack.c.bf16 %v37, %v35
  %v172 = vpack.c.bf16 %v38, %v36
  %v173 = vpack.c.bf16 %v41, %v39
  %v174 = vpack.c.bf16 %v42, %v40
  %v175 = vpack.c.bf16 %v45, %v43
  %v176 = vpack.c.bf16 %v46, %v44
  %v177 = vpack.c.bf16 %v49, %v47
  %v178 = vpack.c.bf16 %v50, %v48
  %v179 = vpack.c.bf16 %v53, %v51
  %v180 = vpack.c.bf16 %v54, %v52
  %v181 = vpack.c.bf16 %v57, %v55
  %v182 = vpack.c.bf16 %v58, %v56
  %v183 = vpack.c.bf16 %v61, %v59
  %v184 = vpack.c.bf16 %v62, %v60
  %v185 = vpack.c.bf16 %v65, %v63
  %v186 = vpack.c.bf16 %v66, %v64
  %v187 = vpack.c.bf16 %v69, %v67
  %v188 = vpack.c.bf16 %v70, %v68
  %v189 = vpack.c.bf16 %v73, %v71
  %v190 = vpack.c.bf16 %v74, %v72
  %v191 = vpack.c.bf16 %v77, %v75
  %v192 = vpack.c.bf16 %v78, %v76
  %v193 = vpack.c.bf16 %v81, %v79
  %v194 = vpack.c.bf16 %v82, %v80
  %v195 = vpack.c.bf16 %v85, %v83
  %v196 = vpack.c.bf16 %v86, %v84
  %v197 = vpack.c.bf16 %v89, %v87
  %v198 = vpack.c.bf16 %v90, %v88
  %v199 = vpack.c.bf16 %v93, %v91
  %v200 = vpack.c.bf16 %v94, %v92
  %v201 = vpack.c.bf16 %v97, %v95
  %v202 = vpack.c.bf16 %v98, %v96
  %v203 = vpack.c.bf16 %v101, %v99
  %v204 = vpack.c.bf16 %v102, %v100
  %v205 = vpack.c.bf16 %v105, %v103
  %v206 = vpack.c.bf16 %v106, %v104
  %v207 = vpack.c.bf16 %v109, %v107
  %v208 = vpack.c.bf16 %v110, %v108
  %v209 = vpack.c.bf16 %v113, %v111
  %v210 = vpack.c.bf16 %v114, %v112
  %v211 = vpack.c.bf16 %v117, %v115
  %v212 = vpack.c.bf16 %v118, %v116
  %v213 = vpack.c.bf16 %v121, %v119
  %v214 = vpack.c.bf16 %v122, %v120
  %v215 = vpack.c.bf16 %v125, %v123
  %v216 = vpack.c.bf16 %v126, %v124
  %v217 = vpack.c.bf16 %v129, %v127
  %v218 = vpack.c.bf16 %v130, %v128
  %v219 = vpack.c.bf16 %v133, %v131
  %v220 = vpack.c.bf16 %v134, %v132
  %v221 = vpack.c.bf16 %v137, %v135
  %v222 = vpack.c.bf16 %v138, %v136
  %v223 = vpack.c.bf16 %v141, %v139
  %v224 = vpack.c.bf16 %v142, %v140
  %v225 = vpack.c.bf16 %v145, %v143
  %v226 = vpack.c.bf16 %v146, %v144
  %v227 = vpack.c.bf16 %v149, %v147
  %v228 = vpack.c.bf16 %v150, %v148
  %v229 = vpack.c.bf16 %v153, %v151
  %v230 = vpack.c.bf16 %v154, %v152
  %v231 = vpack.c.bf16 %v157, %v155
  %v232 = vpack.c.bf16 %v158, %v156
  %v233 = vpack.c.bf16 %v159, %v159
  %v234 = vpack.c.bf16 %v160, %v160
  %v235 = vld [vmem:[%s1] sm:$0xf]
  %v236 = vld [vmem:[%s1 + $0x4] sm:$0xf]
  %v237 = vld [vmem:[%s1 + $0x8] sm:$0xf]
  %v238 = vld [vmem:[%s1 + $0xc] sm:$0xf]
  %v239 = vld [vmem:[%s1 + $0x10] sm:$0xf]
  %v240 = vld [vmem:[%s1 + $0x14] sm:$0xf]
  %v241 = vld [vmem:[%s1 + $0x18] sm:$0xf]
  %v242 = vld [vmem:[%s1 + $0x1c] sm:$0xf]
  %v243 = vld [vmem:[%s1 + $0x20] sm:$0xf]
  %v244 = vld [vmem:[%s1 + $0x24] sm:$0xf]
  %v245 = vld [vmem:[%s1 + $0x28] sm:$0xf]
  %v246 = vld [vmem:[%s1 + $0x2c] sm:$0xf]
  %v247 = vld [vmem:[%s1 + $0x30] sm:$0xf]
  %v248 = vld [vmem:[%s1 + $0x34] sm:$0xf]
  %v249 = vld [vmem:[%s1 + $0x38] sm:$0xf]
  %v250 = vld [vmem:[%s1 + $0x3c] sm:$0xf]
  %v251 = vld [vmem:[%s1 + $0x40] sm:$0xf]
  %v252 = vld [vmem:[%s1 + $0x44] sm:$0xf]
  %v253 = vld [vmem:[%s1 + $0x48] sm:$0xf]
  %v254 = vld [vmem:[%s1 + $0x4c] sm:$0xf]
  %v255 = vld [vmem:[%s1 + $0x50] sm:$0xf]
  %v256 = vld [vmem:[%s1 + $0x54] sm:$0xf]
  %v257 = vld [vmem:[%s1 + $0x58] sm:$0xf]
  %v258 = vld [vmem:[%s1 + $0x5c] sm:$0xf]
  %v259 = vld [vmem:[%s1 + $0x60] sm:$0xf]
  %v260 = vld [vmem:[%s1 + $0x64] sm:$0xf]
  %v261 = vld [vmem:[%s1 + $0x68] sm:$0xf]
  %v262 = vld [vmem:[%s1 + $0x6c] sm:$0xf]
  %v263 = vld [vmem:[%s1 + $0x70] sm:$0xf]
  %v264 = vld [vmem:[%s1 + $0x74] sm:$0xf]
  %v265 = vld [vmem:[%s1 + $0x78] sm:$0xf]
  %v266 = vld [vmem:[%s1 + $0x7c] sm:$0xf]
  %v267 = vld [vmem:[%s2] sm:$0x1]
  %v269 = vlaneseq
  %v270 = vshrl.u32 %v269, 7
  %v271 = vsub.s32 0, %v270
  %v272 = vrot.slane %v267, %v271
  %v306 = vunpack.c.l.b16 %v235
  %v307 = vunpack.c.l.b16 %v236
  %v308 = vunpack.c.l.b16 %v237
  %v309 = vunpack.c.l.b16 %v238
  %v310 = vunpack.c.l.b16 %v239
  %v311 = vunpack.c.l.b16 %v240
  %v312 = vunpack.c.l.b16 %v241
  %v313 = vunpack.c.l.b16 %v242
  %v314 = vunpack.c.l.b16 %v243
  %v315 = vunpack.c.l.b16 %v244
  %v316 = vunpack.c.l.b16 %v245
  %v317 = vunpack.c.l.b16 %v246
  %v318 = vunpack.c.l.b16 %v247
  %v319 = vunpack.c.l.b16 %v248
  %v320 = vunpack.c.l.b16 %v249
  %v321 = vunpack.c.l.b16 %v250
  %v322 = vunpack.c.l.b16 %v251
  %v323 = vunpack.c.l.b16 %v252
  %v324 = vunpack.c.l.b16 %v253
  %v325 = vunpack.c.l.b16 %v254
  %v326 = vunpack.c.l.b16 %v255
  %v327 = vunpack.c.l.b16 %v256
  %v328 = vunpack.c.l.b16 %v257
  %v329 = vunpack.c.l.b16 %v258
  %v330 = vunpack.c.l.b16 %v259
  %v331 = vunpack.c.l.b16 %v260
  %v332 = vunpack.c.l.b16 %v261
  %v333 = vunpack.c.l.b16 %v262
  %v334 = vunpack.c.l.b16 %v263
  %v335 = vunpack.c.l.b16 %v264
  %v336 = vunpack.c.l.b16 %v265
  %v337 = vunpack.c.l.b16 %v266
  %v338 = vpack.c.b16 %v307, %v306
  %v339 = vpack.c.b16 %v309, %v308
  %v340 = vpack.c.b16 %v311, %v310
  %v341 = vpack.c.b16 %v313, %v312
  %v342 = vpack.c.b16 %v315, %v314
  %v343 = vpack.c.b16 %v317, %v316
  %v344 = vpack.c.b16 %v319, %v318
  %v345 = vpack.c.b16 %v321, %v320
  %v346 = vpack.c.b16 %v323, %v322
  %v347 = vpack.c.b16 %v325, %v324
  %v348 = vpack.c.b16 %v327, %v326
  %v349 = vpack.c.b16 %v329, %v328
  %v350 = vpack.c.b16 %v331, %v330
  %v351 = vpack.c.b16 %v333, %v332
  %v352 = vpack.c.b16 %v335, %v334
  %v353 = vpack.c.b16 %v337, %v336
  %370 = vmatprep.subr.bf16.mxu0 0
  %371 = vmatpush1.bf16.msra.mxu0 %v338
  %372 = vmatprep.subr.bf16.mxu0 0
  %373 = vmatpush1.bf16.msra.mxu0 %v339
  %374 = vmatprep.subr.bf16.mxu0 0
  %375 = vmatpush1.bf16.msra.mxu0 %v340
  %376 = vmatprep.subr.bf16.mxu0 0
  %377 = vmatpush1.bf16.msra.mxu0 %v341
  %378 = vmatprep.subr.bf16.mxu0 0
  %379 = vmatpush1.bf16.msra.mxu0 %v342
  %380 = vmatprep.subr.bf16.mxu0 0
  %381 = vmatpush1.bf16.msra.mxu0 %v343
  %382 = vmatprep.subr.bf16.mxu0 0
  %383 = vmatpush1.bf16.msra.mxu0 %v344
  %384 = vmatprep.subr.bf16.mxu0 0
  %385 = vmatpush1.bf16.msra.mxu0 %v345
  %386 = vmatprep.subr.bf16.mxu0 0
  %387 = vmatpush1.bf16.msra.mxu0 %v346
  %388 = vmatprep.subr.bf16.mxu0 0
  %389 = vmatpush1.bf16.msra.mxu0 %v347
  %390 = vmatprep.subr.bf16.mxu0 0
  %391 = vmatpush1.bf16.msra.mxu0 %v348
  %392 = vmatprep.subr.bf16.mxu0 0
  %393 = vmatpush1.bf16.msra.mxu0 %v349
  %394 = vmatprep.subr.bf16.mxu0 0
  %395 = vmatpush1.bf16.msra.mxu0 %v350
  %396 = vmatprep.subr.bf16.mxu0 0
  %397 = vmatpush1.bf16.msra.mxu0 %v351
  %398 = vmatprep.subr.bf16.mxu0 0
  %399 = vmatpush1.bf16.msra.mxu0 %v352
  %400 = vmatprep.subr.bf16.mxu0 0
  %401 = vmatpush1.bf16.msra.mxu0 %v353
  %402 = vmatprep.mubr.bf16.mxu0 %v162
  %403 = vmatmul.mubr.bf16.gmra.mrb[0].mxu0 %v161
  %v404 = vpop.f32.mrb[0].mxu0
  %v405 = vadd.f32 %v272, %v404
  %v406 = vpop.f32.mrb[0].mxu0
  %v407 = vpop.f32.mrb[0].mxu0
  %v408 = vadd.f32 %v272, %v407
  %v409 = vpop.f32.mrb[0].mxu0
  %410 = vmatprep.mubr.bf16.mxu0 %v164
  %411 = vmatmul.mubr.bf16.gmra.mrb[0].mxu0 %v163
  %v412 = vpop.f32.mrb[0].mxu0
  %v413 = vadd.f32 %v272, %v412
  %v414 = vpop.f32.mrb[0].mxu0
  %v415 = vpop.f32.mrb[0].mxu0
  %v416 = vadd.f32 %v272, %v415
  %v417 = vpop.f32.mrb[0].mxu0
  %418 = vmatprep.mubr.bf16.mxu0 %v166
  %419 = vmatmul.mubr.bf16.gmra.mrb[0].mxu0 %v165
  %v420 = vpop.f32.mrb[0].mxu0
  %v421 = vadd.f32 %v272, %v420
  %v422 = vpop.f32.mrb[0].mxu0
  %v423 = vpop.f32.mrb[0].mxu0
  %v424 = vadd.f32 %v272, %v423
  %v425 = vpop.f32.mrb[0].mxu0
  %426 = vmatprep.mubr.bf16.mxu0 %v168
  %427 = vmatmul.mubr.bf16.gmra.mrb[0].mxu0 %v167
  %v428 = vpop.f32.mrb[0].mxu0
  %v429 = vadd.f32 %v272, %v428
  %v430 = vpop.f32.mrb[0].mxu0
  %v431 = vpop.f32.mrb[0].mxu0
  %v432 = vadd.f32 %v272, %v431
  %v433 = vpop.f32.mrb[0].mxu0
  %434 = vmatprep.mubr.bf16.mxu0 %v170
  %435 = vmatmul.mubr.bf16.gmra.mrb[0].mxu0 %v169
  %v436 = vpop.f32.mrb[0].mxu0
  %v437 = vadd.f32 %v272, %v436
  %v438 = vpop.f32.mrb[0].mxu0
  %v439 = vpop.f32.mrb[0].mxu0
  %v440 = vadd.f32 %v272, %v439
  %v441 = vpop.f32.mrb[0].mxu0
  %442 = vmatprep.mubr.bf16.mxu0 %v172
  %443 = vmatmul.mubr.bf16.gmra.mrb[0].mxu0 %v171
  %v444 = vpop.f32.mrb[0].mxu0
  %v445 = vadd.f32 %v272, %v444
  %v446 = vpop.f32.mrb[0].mxu0
  %v447 = vpop.f32.mrb[0].mxu0
  %v448 = vadd.f32 %v272, %v447
  %v449 = vpop.f32.mrb[0].mxu0
  %450 = vmatprep.mubr.bf16.mxu0 %v174
  %451 = vmatmul.mubr.bf16.gmra.mrb[0].mxu0 %v173
  %v452 = vpop.f32.mrb[0].mxu0
  %v453 = vadd.f32 %v272, %v452
  %v454 = vpop.f32.mrb[0].mxu0
  %v455 = vpop.f32.mrb[0].mxu0
  %v456 = vadd.f32 %v272, %v455
  %v457 = vpop.f32.mrb[0].mxu0
  %458 = vmatprep.mubr.bf16.mxu0 %v176
  %459 = vmatmul.mubr.bf16.gmra.mrb[0].mxu0 %v175
  %v460 = vpop.f32.mrb[0].mxu0
  %v461 = vadd.f32 %v272, %v460
  %v462 = vpop.f32.mrb[0].mxu0
  %v463 = vpop.f32.mrb[0].mxu0
  %v464 = vadd.f32 %v272, %v463
  %v465 = vpop.f32.mrb[0].mxu0
  %466 = vmatprep.mubr.bf16.mxu0 %v178
  %467 = vmatmul.mubr.bf16.gmra.mrb[0].mxu0 %v177
  %v468 = vpop.f32.mrb[0].mxu0
  %v469 = vadd.f32 %v272, %v468
  %v470 = vpop.f32.mrb[0].mxu0
  %v471 = vpop.f32.mrb[0].mxu0
  %v472 = vadd.f32 %v272, %v471
  %v473 = vpop.f32.mrb[0].mxu0
  %474 = vmatprep.mubr.bf16.mxu0 %v180
  %475 = vmatmul.mubr.bf16.gmra.mrb[0].mxu0 %v179
  %v476 = vpop.f32.mrb[0].mxu0
  %v477 = vadd.f32 %v272, %v476
  %v478 = vpop.f32.mrb[0].mxu0
  %v479 = vpop.f32.mrb[0].mxu0
  %v480 = vadd.f32 %v272, %v479
  %v481 = vpop.f32.mrb[0].mxu0
  %482 = vmatprep.mubr.bf16.mxu0 %v182
  %483 = vmatmul.mubr.bf16.gmra.mrb[0].mxu0 %v181
  %v484 = vpop.f32.mrb[0].mxu0
  %v485 = vadd.f32 %v272, %v484
  %v486 = vpop.f32.mrb[0].mxu0
  %v487 = vpop.f32.mrb[0].mxu0
  %v488 = vadd.f32 %v272, %v487
  %v489 = vpop.f32.mrb[0].mxu0
  %490 = vmatprep.mubr.bf16.mxu0 %v184
  %491 = vmatmul.mubr.bf16.gmra.mrb[0].mxu0 %v183
  %v492 = vpop.f32.mrb[0].mxu0
  %v493 = vadd.f32 %v272, %v492
  %v494 = vpop.f32.mrb[0].mxu0
  %v495 = vpop.f32.mrb[0].mxu0
  %v496 = vadd.f32 %v272, %v495
  %v497 = vpop.f32.mrb[0].mxu0
  %498 = vmatprep.mubr.bf16.mxu0 %v186
  %499 = vmatmul.mubr.bf16.gmra.mrb[0].mxu0 %v185
  %v500 = vpop.f32.mrb[0].mxu0
  %v501 = vadd.f32 %v272, %v500
  %v502 = vpop.f32.mrb[0].mxu0
  %v503 = vpop.f32.mrb[0].mxu0
  %v504 = vadd.f32 %v272, %v503
  %v505 = vpop.f32.mrb[0].mxu0
  %506 = vmatprep.mubr.bf16.mxu0 %v188
  %507 = vmatmul.mubr.bf16.gmra.mrb[0].mxu0 %v187
  %v508 = vpop.f32.mrb[0].mxu0
  %v509 = vadd.f32 %v272, %v508
  %v510 = vpop.f32.mrb[0].mxu0
  %v511 = vpop.f32.mrb[0].mxu0
  %v512 = vadd.f32 %v272, %v511
  %v513 = vpop.f32.mrb[0].mxu0
  %514 = vmatprep.mubr.bf16.mxu0 %v190
  %515 = vmatmul.mubr.bf16.gmra.mrb[0].mxu0 %v189
  %v516 = vpop.f32.mrb[0].mxu0
  %v517 = vadd.f32 %v272, %v516
  %v518 = vpop.f32.mrb[0].mxu0
  %v519 = vpop.f32.mrb[0].mxu0
  %v520 = vadd.f32 %v272, %v519
  %v521 = vpop.f32.mrb[0].mxu0
  %522 = vmatprep.mubr.bf16.mxu0 %v192
  %523 = vmatmul.mubr.bf16.gmra.mrb[0].mxu0 %v191
  %v524 = vpop.f32.mrb[0].mxu0
  %v525 = vadd.f32 %v272, %v524
  %v526 = vpop.f32.mrb[0].mxu0
  %v527 = vpop.f32.mrb[0].mxu0
  %v528 = vadd.f32 %v272, %v527
  %v529 = vpop.f32.mrb[0].mxu0
  %530 = vmatprep.mubr.bf16.mxu0 %v194
  %531 = vmatmul.mubr.bf16.gmra.mrb[0].mxu0 %v193
  %v532 = vpop.f32.mrb[0].mxu0
  %v533 = vadd.f32 %v272, %v532
  %v534 = vpop.f32.mrb[0].mxu0
  %v535 = vpop.f32.mrb[0].mxu0
  %v536 = vadd.f32 %v272, %v535
  %v537 = vpop.f32.mrb[0].mxu0
  %538 = vmatprep.mubr.bf16.mxu0 %v196
  %539 = vmatmul.mubr.bf16.gmra.mrb[0].mxu0 %v195
  %v540 = vpop.f32.mrb[0].mxu0
  %v541 = vadd.f32 %v272, %v540
  %v542 = vpop.f32.mrb[0].mxu0
  %v543 = vpop.f32.mrb[0].mxu0
  %v544 = vadd.f32 %v272, %v543
  %v545 = vpop.f32.mrb[0].mxu0
  %546 = vmatprep.mubr.bf16.mxu0 %v198
  %547 = vmatmul.mubr.bf16.gmra.mrb[0].mxu0 %v197
  %v548 = vpop.f32.mrb[0].mxu0
  %v549 = vadd.f32 %v272, %v548
  %v550 = vpop.f32.mrb[0].mxu0
  %v551 = vpop.f32.mrb[0].mxu0
  %v552 = vadd.f32 %v272, %v551
  %v553 = vpop.f32.mrb[0].mxu0
  %554 = vmatprep.mubr.bf16.mxu0 %v200
  %555 = vmatmul.mubr.bf16.gmra.mrb[0].mxu0 %v199
  %v556 = vpop.f32.mrb[0].mxu0
  %v557 = vadd.f32 %v272, %v556
  %v558 = vpop.f32.mrb[0].mxu0
  %v559 = vpop.f32.mrb[0].mxu0
  %v560 = vadd.f32 %v272, %v559
  %v561 = vpop.f32.mrb[0].mxu0
  %562 = vmatprep.mubr.bf16.mxu0 %v202
  %563 = vmatmul.mubr.bf16.gmra.mrb[0].mxu0 %v201
  %v564 = vpop.f32.mrb[0].mxu0
  %v565 = vadd.f32 %v272, %v564
  %v566 = vpop.f32.mrb[0].mxu0
  %v567 = vpop.f32.mrb[0].mxu0
  %v568 = vadd.f32 %v272, %v567
  %v569 = vpop.f32.mrb[0].mxu0
  %570 = vmatprep.mubr.bf16.mxu0 %v204
  %571 = vmatmul.mubr.bf16.gmra.mrb[0].mxu0 %v203
  %v572 = vpop.f32.mrb[0].mxu0
  %v573 = vadd.f32 %v272, %v572
  %v574 = vpop.f32.mrb[0].mxu0
  %v575 = vpop.f32.mrb[0].mxu0
  %v576 = vadd.f32 %v272, %v575
  %v577 = vpop.f32.mrb[0].mxu0
  %578 = vmatprep.mubr.bf16.mxu0 %v206
  %579 = vmatmul.mubr.bf16.gmra.mrb[0].mxu0 %v205
  %v580 = vpop.f32.mrb[0].mxu0
  %v581 = vadd.f32 %v272, %v580
  %v582 = vpop.f32.mrb[0].mxu0
  %v583 = vpop.f32.mrb[0].mxu0
  %v584 = vadd.f32 %v272, %v583
  %v585 = vpop.f32.mrb[0].mxu0
  %586 = vmatprep.mubr.bf16.mxu0 %v208
  %587 = vmatmul.mubr.bf16.gmra.mrb[0].mxu0 %v207
  %v588 = vpop.f32.mrb[0].mxu0
  %v589 = vadd.f32 %v272, %v588
  %v590 = vpop.f32.mrb[0].mxu0
  %v591 = vpop.f32.mrb[0].mxu0
  %v592 = vadd.f32 %v272, %v591
  %v593 = vpop.f32.mrb[0].mxu0
  %594 = vmatprep.mubr.bf16.mxu0 %v210
  %595 = vmatmul.mubr.bf16.gmra.mrb[0].mxu0 %v209
  %v596 = vpop.f32.mrb[0].mxu0
  %v597 = vadd.f32 %v272, %v596
  %v598 = vpop.f32.mrb[0].mxu0
  %v599 = vpop.f32.mrb[0].mxu0
  %v600 = vadd.f32 %v272, %v599
  %v601 = vpop.f32.mrb[0].mxu0
  %602 = vmatprep.mubr.bf16.mxu0 %v212
  %603 = vmatmul.mubr.bf16.gmra.mrb[0].mxu0 %v211
  %v604 = vpop.f32.mrb[0].mxu0
  %v605 = vadd.f32 %v272, %v604
  %v606 = vpop.f32.mrb[0].mxu0
  %v607 = vpop.f32.mrb[0].mxu0
  %v608 = vadd.f32 %v272, %v607
  %v609 = vpop.f32.mrb[0].mxu0
  %610 = vmatprep.mubr.bf16.mxu0 %v214
  %611 = vmatmul.mubr.bf16.gmra.mrb[0].mxu0 %v213
  %v612 = vpop.f32.mrb[0].mxu0
  %v613 = vadd.f32 %v272, %v612
  %v614 = vpop.f32.mrb[0].mxu0
  %v615 = vpop.f32.mrb[0].mxu0
  %v616 = vadd.f32 %v272, %v615
  %v617 = vpop.f32.mrb[0].mxu0
  %618 = vmatprep.mubr.bf16.mxu0 %v216
  %619 = vmatmul.mubr.bf16.gmra.mrb[0].mxu0 %v215
  %v620 = vpop.f32.mrb[0].mxu0
  %v621 = vadd.f32 %v272, %v620
  %v622 = vpop.f32.mrb[0].mxu0
  %v623 = vpop.f32.mrb[0].mxu0
  %v624 = vadd.f32 %v272, %v623
  %v625 = vpop.f32.mrb[0].mxu0
  %626 = vmatprep.mubr.bf16.mxu0 %v218
  %627 = vmatmul.mubr.bf16.gmra.mrb[0].mxu0 %v217
  %v628 = vpop.f32.mrb[0].mxu0
  %v629 = vadd.f32 %v272, %v628
  %v630 = vpop.f32.mrb[0].mxu0
  %v631 = vpop.f32.mrb[0].mxu0
  %v632 = vadd.f32 %v272, %v631
  %v633 = vpop.f32.mrb[0].mxu0
  %634 = vmatprep.mubr.bf16.mxu0 %v220
  %635 = vmatmul.mubr.bf16.gmra.mrb[0].mxu0 %v219
  %v636 = vpop.f32.mrb[0].mxu0
  %v637 = vadd.f32 %v272, %v636
  %v638 = vpop.f32.mrb[0].mxu0
  %v639 = vpop.f32.mrb[0].mxu0
  %v640 = vadd.f32 %v272, %v639
  %v641 = vpop.f32.mrb[0].mxu0
  %642 = vmatprep.mubr.bf16.mxu0 %v222
  %643 = vmatmul.mubr.bf16.gmra.mrb[0].mxu0 %v221
  %v644 = vpop.f32.mrb[0].mxu0
  %v645 = vadd.f32 %v272, %v644
  %v646 = vpop.f32.mrb[0].mxu0
  %v647 = vpop.f32.mrb[0].mxu0
  %v648 = vadd.f32 %v272, %v647
  %v649 = vpop.f32.mrb[0].mxu0
  %650 = vmatprep.mubr.bf16.mxu0 %v224
  %651 = vmatmul.mubr.bf16.gmra.mrb[0].mxu0 %v223
  %v652 = vpop.f32.mrb[0].mxu0
  %v653 = vadd.f32 %v272, %v652
  %v654 = vpop.f32.mrb[0].mxu0
  %v655 = vpop.f32.mrb[0].mxu0
  %v656 = vadd.f32 %v272, %v655
  %v657 = vpop.f32.mrb[0].mxu0
  %658 = vmatprep.mubr.bf16.mxu0 %v226
  %659 = vmatmul.mubr.bf16.gmra.mrb[0].mxu0 %v225
  %v660 = vpop.f32.mrb[0].mxu0
  %v661 = vadd.f32 %v272, %v660
  %v662 = vpop.f32.mrb[0].mxu0
  %v663 = vpop.f32.mrb[0].mxu0
  %v664 = vadd.f32 %v272, %v663
  %v665 = vpop.f32.mrb[0].mxu0
  %666 = vmatprep.mubr.bf16.mxu0 %v228
  %667 = vmatmul.mubr.bf16.gmra.mrb[0].mxu0 %v227
  %v668 = vpop.f32.mrb[0].mxu0
  %v669 = vadd.f32 %v272, %v668
  %v670 = vpop.f32.mrb[0].mxu0
  %v671 = vpop.f32.mrb[0].mxu0
  %v672 = vadd.f32 %v272, %v671
  %v673 = vpop.f32.mrb[0].mxu0
  %674 = vmatprep.mubr.bf16.mxu0 %v230
  %675 = vmatmul.mubr.bf16.gmra.mrb[0].mxu0 %v229
  %v676 = vpop.f32.mrb[0].mxu0
  %v677 = vadd.f32 %v272, %v676
  %v678 = vpop.f32.mrb[0].mxu0
  %v679 = vpop.f32.mrb[0].mxu0
  %v680 = vadd.f32 %v272, %v679
  %v681 = vpop.f32.mrb[0].mxu0
  %682 = vmatprep.mubr.bf16.mxu0 %v232
  %683 = vmatmul.mubr.bf16.gmra.mrb[0].mxu0 %v231
  %v684 = vpop.f32.mrb[0].mxu0
  %v685 = vadd.f32 %v272, %v684
  %v686 = vpop.f32.mrb[0].mxu0
  %v687 = vpop.f32.mrb[0].mxu0
  %v688 = vadd.f32 %v272, %v687
  %v689 = vpop.f32.mrb[0].mxu0
  %690 = vmatprep.mubr.bf16.mxu0 %v234
  %691 = vmatmul.mubr.bf16.gmra.mrb[0].mxu0 %v233
  %v692 = vpop.f32.mrb[0].mxu0
  %v693 = vadd.f32 %v272, %v692
  %v694 = vpop.f32.mrb[0].mxu0
  %v695 = vpop.f32.mrb[0].mxu0
  %v696 = vpop.f32.mrb[0].mxu0
  %697 = vdwg.mxu0
  %vm698 = vcmask 523264
  %699 = vst.msk [vmem:[%s3] sm:$0xff] %vm698, %v405
  %700 = vst.msk [vmem:[%s3 + $0x8] sm:$0xff] %vm698, %v408
  %701 = vst.msk [vmem:[%s3 + $0x10] sm:$0xff] %vm698, %v413
  %702 = vst.msk [vmem:[%s3 + $0x18] sm:$0xff] %vm698, %v416
  %703 = vst.msk [vmem:[%s3 + $0x20] sm:$0xff] %vm698, %v421
  %704 = vst.msk [vmem:[%s3 + $0x28] sm:$0xff] %vm698, %v424
  %705 = vst.msk [vmem:[%s3 + $0x30] sm:$0xff] %vm698, %v429
  %706 = vst.msk [vmem:[%s3 + $0x38] sm:$0xff] %vm698, %v432
  %707 = vst.msk [vmem:[%s3 + $0x40] sm:$0xff] %vm698, %v437
  %708 = vst.msk [vmem:[%s3 + $0x48] sm:$0xff] %vm698, %v440
  %709 = vst.msk [vmem:[%s3 + $0x50] sm:$0xff] %vm698, %v445
  %710 = vst.msk [vmem:[%s3 + $0x58] sm:$0xff] %vm698, %v448
  %711 = vst.msk [vmem:[%s3 + $0x60] sm:$0xff] %vm698, %v453
  %712 = vst.msk [vmem:[%s3 + $0x68] sm:$0xff] %vm698, %v456
  %713 = vst.msk [vmem:[%s3 + $0x70] sm:$0xff] %vm698, %v461
  %714 = vst.msk [vmem:[%s3 + $0x78] sm:$0xff] %vm698, %v464
  %715 = vst.msk [vmem:[%s3 + $0x80] sm:$0xff] %vm698, %v469
  %716 = vst.msk [vmem:[%s3 + $0x88] sm:$0xff] %vm698, %v472
  %717 = vst.msk [vmem:[%s3 + $0x90] sm:$0xff] %vm698, %v477
  %718 = vst.msk [vmem:[%s3 + $0x98] sm:$0xff] %vm698, %v480
  %719 = vst.msk [vmem:[%s3 + $0xa0] sm:$0xff] %vm698, %v485
  %720 = vst.msk [vmem:[%s3 + $0xa8] sm:$0xff] %vm698, %v488
  %721 = vst.msk [vmem:[%s3 + $0xb0] sm:$0xff] %vm698, %v493
  %722 = vst.msk [vmem:[%s3 + $0xb8] sm:$0xff] %vm698, %v496
  %723 = vst.msk [vmem:[%s3 + $0xc0] sm:$0xff] %vm698, %v501
  %724 = vst.msk [vmem:[%s3 + $0xc8] sm:$0xff] %vm698, %v504
  %725 = vst.msk [vmem:[%s3 + $0xd0] sm:$0xff] %vm698, %v509
  %726 = vst.msk [vmem:[%s3 + $0xd8] sm:$0xff] %vm698, %v512
  %727 = vst.msk [vmem:[%s3 + $0xe0] sm:$0xff] %vm698, %v517
  %728 = vst.msk [vmem:[%s3 + $0xe8] sm:$0xff] %vm698, %v520
  %729 = vst.msk [vmem:[%s3 + $0xf0] sm:$0xff] %vm698, %v525
  %730 = vst.msk [vmem:[%s3 + $0xf8] sm:$0xff] %vm698, %v528
  %731 = vst.msk [vmem:[%s3 + $0x100] sm:$0xff] %vm698, %v533
  %732 = vst.msk [vmem:[%s3 + $0x108] sm:$0xff] %vm698, %v536
  %733 = vst.msk [vmem:[%s3 + $0x110] sm:$0xff] %vm698, %v541
  %734 = vst.msk [vmem:[%s3 + $0x118] sm:$0xff] %vm698, %v544
  %735 = vst.msk [vmem:[%s3 + $0x120] sm:$0xff] %vm698, %v549
  %736 = vst.msk [vmem:[%s3 + $0x128] sm:$0xff] %vm698, %v552
  %737 = vst.msk [vmem:[%s3 + $0x130] sm:$0xff] %vm698, %v557
  %738 = vst.msk [vmem:[%s3 + $0x138] sm:$0xff] %vm698, %v560
  %739 = vst.msk [vmem:[%s3 + $0x140] sm:$0xff] %vm698, %v565
  %740 = vst.msk [vmem:[%s3 + $0x148] sm:$0xff] %vm698, %v568
  %741 = vst.msk [vmem:[%s3 + $0x150] sm:$0xff] %vm698, %v573
  %742 = vst.msk [vmem:[%s3 + $0x158] sm:$0xff] %vm698, %v576
  %743 = vst.msk [vmem:[%s3 + $0x160] sm:$0xff] %vm698, %v581
  %744 = vst.msk [vmem:[%s3 + $0x168] sm:$0xff] %vm698, %v584
  %745 = vst.msk [vmem:[%s3 + $0x170] sm:$0xff] %vm698, %v589
  %746 = vst.msk [vmem:[%s3 + $0x178] sm:$0xff] %vm698, %v592
  %747 = vst.msk [vmem:[%s3 + $0x180] sm:$0xff] %vm698, %v597
  %748 = vst.msk [vmem:[%s3 + $0x188] sm:$0xff] %vm698, %v600
  %749 = vst.msk [vmem:[%s3 + $0x190] sm:$0xff] %vm698, %v605
  %750 = vst.msk [vmem:[%s3 + $0x198] sm:$0xff] %vm698, %v608
  %751 = vst.msk [vmem:[%s3 + $0x1a0] sm:$0xff] %vm698, %v613
  %752 = vst.msk [vmem:[%s3 + $0x1a8] sm:$0xff] %vm698, %v616
  %753 = vst.msk [vmem:[%s3 + $0x1b0] sm:$0xff] %vm698, %v621
  %754 = vst.msk [vmem:[%s3 + $0x1b8] sm:$0xff] %vm698, %v624
  %755 = vst.msk [vmem:[%s3 + $0x1c0] sm:$0xff] %vm698, %v629
  %756 = vst.msk [vmem:[%s3 + $0x1c8] sm:$0xff] %vm698, %v632
  %757 = vst.msk [vmem:[%s3 + $0x1d0] sm:$0xff] %vm698, %v637
  %758 = vst.msk [vmem:[%s3 + $0x1d8] sm:$0xff] %vm698, %v640
  %759 = vst.msk [vmem:[%s3 + $0x1e0] sm:$0xff] %vm698, %v645
  %760 = vst.msk [vmem:[%s3 + $0x1e8] sm:$0xff] %vm698, %v648
  %761 = vst.msk [vmem:[%s3 + $0x1f0] sm:$0xff] %vm698, %v653
  %762 = vst.msk [vmem:[%s3 + $0x1f8] sm:$0xff] %vm698, %v656
  %763 = vst.msk [vmem:[%s3 + $0x200] sm:$0xff] %vm698, %v661
  %764 = vst.msk [vmem:[%s3 + $0x208] sm:$0xff] %vm698, %v664
  %765 = vst.msk [vmem:[%s3 + $0x210] sm:$0xff] %vm698, %v669
  %766 = vst.msk [vmem:[%s3 + $0x218] sm:$0xff] %vm698, %v672
  %767 = vst.msk [vmem:[%s3 + $0x220] sm:$0xff] %vm698, %v677
  %768 = vst.msk [vmem:[%s3 + $0x228] sm:$0xff] %vm698, %v680
  %769 = vst.msk [vmem:[%s3 + $0x230] sm:$0xff] %vm698, %v685
  %770 = vst.msk [vmem:[%s3 + $0x238] sm:$0xff] %vm698, %v688
  %vm771 = vcmask 517120
  %772 = vst.msk [vmem:[%s3 + $0x240] sm:$0x3] %vm771, %v693
  // Predicated region
  $region14: #{celeba_img_decoder_forward.18} parent=0 // pred_check
    _
  $region15: #{celeba_img_decoder_forward.18} parent=0 // pred_check_branch
    %774 = sbr.rel (0) target = $region17
  $region16: #{celeba_img_decoder_forward.18} parent=0 // pred_region
    _
  $region17: #{celeba_img_decoder_forward.18} parent=0 // pred_fallthru
    _
  // Predicated region
  $region18: #{celeba_img_decoder_forward.18} parent=0 // pred_check
    _
  $region19: #{celeba_img_decoder_forward.18} parent=0 // pred_check_branch
    %776 = sbr.rel (0) target = $region21
  $region20: #{celeba_img_decoder_forward.18} parent=0 // pred_region
    _
  $region21: #{celeba_img_decoder_forward.18} parent=0 // pred_fallthru
    _

// kernel: celeba_img_decoder_forward.19
$region0: #{celeba_img_decoder_forward.19}
  #allocation0 [shape = 'u32[]', space=smem, size = 0x4, offset = 0x4, fixed_abs, tag = 'smem constant byte address 0x4 - core index']
  #allocation1 [shape = 'u32[144,128]{1,0:T(1,128)}', space=vmem, size = 0x12000, scoped, tag = 'internal scratch']
  %s0 = inlined_call_operand.vmem [shape: f32[2048,64], index: 0, kind: input, shape index: {}]
  %s1 = inlined_call_operand.vmem [shape: bf16[64,12], index: 1, kind: input, shape index: {}]
  %s2 = inlined_call_operand.vmem [shape: f32[1,12], index: 2, kind: input, shape index: {}]
  %s3 = inlined_call_operand.vmem [shape: f32[2048,12], index: 3, kind: output, shape index: {}]
  %s4 = sld [smem:[#allocation0]]
  $region45: #{celeba_img_decoder_forward.19} parent=0
    _
  %s6 = ssub.s32 1, %s4
  %s7 = scalar_select 0, %s6, %s4
  loop: start=0, step=1, limit=10
  $region2: #{celeba_img_decoder_forward.19} parent=0 // loop_pre_header
    _
  $region3: #{celeba_img_decoder_forward.19} parent=0 // loop_header
    %s9 = sphi 0, %s13
    %p10 = scmp.ge.s32.totalorder %s9, 10
    %s19 = sphi 0, %s21
    %s22 = sphi 0, %s19
    %s23 = sphi 0, %s22
    %s39 = sphi 0, %s23
    %s43 = sphi 0, %s43
    %s45 = sphi 0, %s43
    %s46 = sphi 0, %s45
    %s60 = sphi 0, %s46
    %s64 = sphi 0, %s64
    %s66 = sphi 0, %s64
    %s67 = sphi 0, %s66
    %s81 = sphi 0, %s67
    %s87 = sphi 0, %s89
    %s90 = sphi 0, %s87
    %s91 = sphi 0, %s90
    %s107 = sphi 0, %s91
  $region4: #{celeba_img_decoder_forward.19} parent=0 // loop_header_branch
    %12 = sbr.rel (%p10) target = $region8
  $region5: #{celeba_img_decoder_forward.19} parent=0 // loop_body
    %s14 = ssub.s32 %s9, 1
    %s15 = ssub.s32 %s9, 2
    %s16 = sadd.s32 %s9, 1
    %s17 = ssub.s32 %s9, %s16
    %p18 = scmp.eq.s32.totalorder %s17, 0
    %s20 = sadd.s32 %s19, 1
    %s21 = scalar_select %p18, %s19, %s20
    %p24 = pneg %p18
    %p25 = scmp.eq.s32.totalorder %s9, 7
    %p26 = por %p24, %p25
    %p27 = scmp.ne.s32.totalorder %s19, %s22
    %p28 = scmp.eq.s32.totalorder %s9, 0
    %p29 = por %p27, %p28
    %p30 = scmp.ne.s32.totalorder %s19, %s22
    %p31 = scmp.eq.s32.totalorder %s14, 7
    %p32 = por %p30, %p31
    %p33 = scmp.ne.s32.totalorder %s22, %s23
    %p34 = scmp.eq.s32.totalorder %s14, 0
    %p35 = por %p33, %p34
    %p36 = scmp.ne.s32.totalorder %s22, %s23
    %p37 = scmp.eq.s32.totalorder %s15, 7
    %p38 = por %p36, %p37
    %p40 = scmp.ne.s32.totalorder %s23, %s39
    %p41 = scmp.eq.s32.totalorder %s15, 0
    %p42 = por %p40, %p41
    %s44 = sadd.s32 %s43, 1
    %p47 = scmp.eq.s32.totalorder %s9, 7
    %p48 = scmp.ne.s32.totalorder %s43, %s45
    %p49 = scmp.eq.s32.totalorder %s9, 0
    %p50 = por %p48, %p49
    %p51 = scmp.ne.s32.totalorder %s43, %s45
    %p52 = scmp.eq.s32.totalorder %s14, 7
    %p53 = por %p51, %p52
    %p54 = scmp.ne.s32.totalorder %s45, %s46
    %p55 = scmp.eq.s32.totalorder %s14, 0
    %p56 = por %p54, %p55
    %p57 = scmp.ne.s32.totalorder %s45, %s46
    %p58 = scmp.eq.s32.totalorder %s15, 7
    %p59 = por %p57, %p58
    %p61 = scmp.ne.s32.totalorder %s46, %s60
    %p62 = scmp.eq.s32.totalorder %s15, 0
    %p63 = por %p61, %p62
    %s65 = sadd.s32 %s64, 1
    %p68 = scmp.eq.s32.totalorder %s9, 7
    %p69 = scmp.ne.s32.totalorder %s64, %s66
    %p70 = scmp.eq.s32.totalorder %s9, 0
    %p71 = por %p69, %p70
    %p72 = scmp.ne.s32.totalorder %s64, %s66
    %p73 = scmp.eq.s32.totalorder %s14, 7
    %p74 = por %p72, %p73
    %p75 = scmp.ne.s32.totalorder %s66, %s67
    %p76 = scmp.eq.s32.totalorder %s14, 0
    %p77 = por %p75, %p76
    %p78 = scmp.ne.s32.totalorder %s66, %s67
    %p79 = scmp.eq.s32.totalorder %s15, 7
    %p80 = por %p78, %p79
    %p82 = scmp.ne.s32.totalorder %s67, %s81
    %p83 = scmp.eq.s32.totalorder %s15, 0
    %p84 = por %p82, %p83
    %s85 = ssub.s32 %s9, %s16
    %p86 = scmp.eq.s32.totalorder %s85, 0
    %s88 = sadd.s32 %s87, 1
    %s89 = scalar_select %p86, %s87, %s88
    %p92 = pneg %p86
    %p93 = scmp.eq.s32.totalorder %s9, 7
    %p94 = por %p92, %p93
    %p95 = scmp.ne.s32.totalorder %s87, %s90
    %p96 = scmp.eq.s32.totalorder %s9, 0
    %p97 = por %p95, %p96
    %p98 = scmp.ne.s32.totalorder %s87, %s90
    %p99 = scmp.eq.s32.totalorder %s14, 7
    %p100 = por %p98, %p99
    %p101 = scmp.ne.s32.totalorder %s90, %s91
    %p102 = scmp.eq.s32.totalorder %s14, 0
    %p103 = por %p101, %p102
    %p104 = scmp.ne.s32.totalorder %s90, %s91
    %p105 = scmp.eq.s32.totalorder %s15, 7
    %p106 = por %p104, %p105
    %p108 = scmp.ne.s32.totalorder %s91, %s107
    %p109 = scmp.eq.s32.totalorder %s15, 0
    %p110 = por %p108, %p109
    %p111 = scmp.le.s32.totalorder 1, %s9
    %p112 = scmp.lt.s32.totalorder %s9, 9
    %p113 = pnand %p111, %p112
    %p114 = pneg %p113
    // Predicated region
    $region9: #{celeba_img_decoder_forward.19} parent=5 // pred_check
      _
    $region10: #{celeba_img_decoder_forward.19} parent=5 // pred_check_branch
      %116 = sbr.rel (%p113) target = $region12
    $region11: #{celeba_img_decoder_forward.19} parent=5 // pred_region
      %s117 = ssub.s32 %s9, 1
      // Predicated region
      $region13: #{celeba_img_decoder_forward.19} parent=11 // pred_check
        %p118 = pneg %p56
      $region14: #{celeba_img_decoder_forward.19} parent=11 // pred_check_branch
        %120 = sbr.rel (%p118) target = $region16
      $region15: #{celeba_img_decoder_forward.19} parent=11 // pred_region
        _
      $region16: #{celeba_img_decoder_forward.19} parent=11 // pred_fallthru
        _
      // Predicated region
      $region17: #{celeba_img_decoder_forward.19} parent=11 // pred_check
        %p121 = pneg %p77
      $region18: #{celeba_img_decoder_forward.19} parent=11 // pred_check_branch
        %123 = sbr.rel (%p121) target = $region20
      $region19: #{celeba_img_decoder_forward.19} parent=11 // pred_region
        _
      $region20: #{celeba_img_decoder_forward.19} parent=11 // pred_fallthru
        _
    $region12: #{celeba_img_decoder_forward.19} parent=5 // pred_fallthru
      _
    %p124 = scmp.lt.s32.totalorder %s9, 8
    // Predicated region
    $region21: #{celeba_img_decoder_forward.19} parent=5 // pred_check
      %p125 = pneg %p124
    $region22: #{celeba_img_decoder_forward.19} parent=5 // pred_check_branch
      %127 = sbr.rel (%p125) target = $region24
    $region23: #{celeba_img_decoder_forward.19} parent=5 // pred_region
      // Predicated region
      $region25: #{celeba_img_decoder_forward.19} parent=23 // pred_check
        %p128 = pneg %p29
      $region26: #{celeba_img_decoder_forward.19} parent=23 // pred_check_branch
        %130 = sbr.rel (%p128) target = $region28
      $region27: #{celeba_img_decoder_forward.19} parent=23 // pred_region
        %s131 = smul.u32 32, %s9
        %p132 = scmp.lt.s32.totalorder %s131, 255
        %s133 = scalar_select %p132, %s131, 255
        %s134 = smul.addr %s133, 8
        %s135 = scalar_lea.vmem %s0, %s134
        %s136 = smul.u32 32, %s9
      $region28: #{celeba_img_decoder_forward.19} parent=23 // pred_fallthru
        _
    $region24: #{celeba_img_decoder_forward.19} parent=5 // pred_fallthru
      _
    %p137 = scmp.le.s32.totalorder 1, %s9
    %p138 = scmp.lt.s32.totalorder %s9, 9
    %p139 = pnand %p137, %p138
    %p140 = pneg %p139
    // Predicated region
    $region29: #{celeba_img_decoder_forward.19} parent=5 // pred_check
      _
    $region30: #{celeba_img_decoder_forward.19} parent=5 // pred_check_branch
      %142 = sbr.rel (%p139) target = $region32
    $region31: #{celeba_img_decoder_forward.19} parent=5 // pred_region
      %s143 = ssub.s32 %s9, 1
      %s144 = smul.u32 32, %s14
      %p145 = scmp.lt.s32.totalorder %s144, 255
      %s146 = scalar_select %p145, %s144, 255
      %s147 = smul.addr %s146, 8
      %s148 = scalar_lea.vmem %s0, %s147
      %p149 = pneg %p35
      %p150 = pneg %p32
      %p151 = pneg %p56
      %p152 = pneg %p53
      %p153 = pneg %p77
      %p154 = pneg %p74
      %p155 = pneg %p103
      %p156 = pneg %p100
      %s157 = smul.u32 32, %s14
      %p158 = scmp.lt.s32.totalorder %s157, 255
      %s159 = scalar_select %p158, %s157, 255
      %s160 = smul.addr %s159, 8
      %s161 = scalar_lea.vmem %s3, %s160
      %s162 = smul.u32 32, %s14
      %p163 = scmp.lt.s32.totalorder %s162, 255
      %s164 = scalar_select %p163, %s162, 255
      %s165 = smul.addr %s164, 8
      %s166 = scalar_lea.vmem %s0, %s165
      %s167 = smul.u32 32, %s14
      %s168 = smul.u32 32, %s14
      %p169 = scmp.lt.s32.totalorder %s168, 255
      %s170 = scalar_select %p169, %s168, 255
      %s171 = smul.addr %s170, 8
      %s172 = scalar_lea.vmem %s3, %s171
      %s173 = smul.u32 32, %s14
      %v175 = vld [vmem:[%s166] sm:$0xff]
      %v176 = vld [vmem:[%s166 + $0x8] sm:$0xff]
      %v177 = vld [vmem:[%s166 + $0x10] sm:$0xff]
      %v178 = vld [vmem:[%s166 + $0x18] sm:$0xff]
      %v179 = vld [vmem:[%s166 + $0x20] sm:$0xff]
      %v180 = vld [vmem:[%s166 + $0x28] sm:$0xff]
      %v181 = vld [vmem:[%s166 + $0x30] sm:$0xff]
      %v182 = vld [vmem:[%s166 + $0x38] sm:$0xff]
      %v183 = vld [vmem:[%s166 + $0x40] sm:$0xff]
      %v184 = vld [vmem:[%s166 + $0x48] sm:$0xff]
      %v185 = vld [vmem:[%s166 + $0x50] sm:$0xff]
      %v186 = vld [vmem:[%s166 + $0x58] sm:$0xff]
      %v187 = vld [vmem:[%s166 + $0x60] sm:$0xff]
      %v188 = vld [vmem:[%s166 + $0x68] sm:$0xff]
      %v189 = vld [vmem:[%s166 + $0x70] sm:$0xff]
      %v190 = vld [vmem:[%s166 + $0x78] sm:$0xff]
      %v191 = vld [vmem:[%s166 + $0x80] sm:$0xff]
      %v192 = vld [vmem:[%s166 + $0x88] sm:$0xff]
      %v193 = vld [vmem:[%s166 + $0x90] sm:$0xff]
      %v194 = vld [vmem:[%s166 + $0x98] sm:$0xff]
      %v195 = vld [vmem:[%s166 + $0xa0] sm:$0xff]
      %v196 = vld [vmem:[%s166 + $0xa8] sm:$0xff]
      %v197 = vld [vmem:[%s166 + $0xb0] sm:$0xff]
      %v198 = vld [vmem:[%s166 + $0xb8] sm:$0xff]
      %v199 = vld [vmem:[%s166 + $0xc0] sm:$0xff]
      %v200 = vld [vmem:[%s166 + $0xc8] sm:$0xff]
      %v201 = vld [vmem:[%s166 + $0xd0] sm:$0xff]
      %v202 = vld [vmem:[%s166 + $0xd8] sm:$0xff]
      %v203 = vld [vmem:[%s166 + $0xe0] sm:$0xff]
      %v204 = vld [vmem:[%s166 + $0xe8] sm:$0xff]
      %v205 = vld [vmem:[%s166 + $0xf0] sm:$0xff]
      %v206 = vld [vmem:[%s166 + $0xf8] sm:$0xff]
      %v207 = vpack.c.bf16 %v176, %v175
      %v208 = vpack.c.bf16 %v178, %v177
      %v209 = vpack.c.bf16 %v180, %v179
      %v210 = vpack.c.bf16 %v182, %v181
      %v211 = vpack.c.bf16 %v184, %v183
      %v212 = vpack.c.bf16 %v186, %v185
      %v213 = vpack.c.bf16 %v188, %v187
      %v214 = vpack.c.bf16 %v190, %v189
      %v215 = vpack.c.bf16 %v192, %v191
      %v216 = vpack.c.bf16 %v194, %v193
      %v217 = vpack.c.bf16 %v196, %v195
      %v218 = vpack.c.bf16 %v198, %v197
      %v219 = vpack.c.bf16 %v200, %v199
      %v220 = vpack.c.bf16 %v202, %v201
      %v221 = vpack.c.bf16 %v204, %v203
      %v222 = vpack.c.bf16 %v206, %v205
      %v223 = vld [vmem:[%s1] sm:$0xf]
      %v224 = vld [vmem:[%s1 + $0x4] sm:$0xf]
      %v225 = vld [vmem:[%s1 + $0x8] sm:$0xf]
      %v226 = vld [vmem:[%s1 + $0xc] sm:$0xf]
      %v227 = vld [vmem:[%s1 + $0x10] sm:$0xf]
      %v228 = vld [vmem:[%s1 + $0x14] sm:$0xf]
      %v229 = vld [vmem:[%s1 + $0x18] sm:$0xf]
      %v230 = vld [vmem:[%s1 + $0x1c] sm:$0xf]
      %v231 = vld [vmem:[%s2] sm:$0x1]
      %v233 = vlaneseq
      %v234 = vshrl.u32 %v233, 7
      %v235 = vsub.s32 0, %v234
      %v236 = vrot.slane %v231, %v235
      %v246 = vunpack.c.l.b16 %v223
      %v247 = vunpack.c.l.b16 %v224
      %v248 = vunpack.c.l.b16 %v225
      %v249 = vunpack.c.l.b16 %v226
      %v250 = vunpack.c.l.b16 %v227
      %v251 = vunpack.c.l.b16 %v228
      %v252 = vunpack.c.l.b16 %v229
      %v253 = vunpack.c.l.b16 %v230
      %v254 = vpack.c.b16 %v247, %v246
      %v255 = vpack.c.b16 %v249, %v248
      %v256 = vpack.c.b16 %v251, %v250
      %v257 = vpack.c.b16 %v253, %v252
      %vm262 = vcmask 523264
      %v264 = vsel %vm262, %v207, 0
      %v267 = vsel %vm262, %v208, 0
      %v270 = vsel %vm262, %v209, 0
      %v273 = vsel %vm262, %v210, 0
      %v276 = vsel %vm262, %v211, 0
      %v279 = vsel %vm262, %v212, 0
      %v282 = vsel %vm262, %v213, 0
      %v285 = vsel %vm262, %v214, 0
      %v288 = vsel %vm262, %v215, 0
      %v291 = vsel %vm262, %v216, 0
      %v294 = vsel %vm262, %v217, 0
      %v297 = vsel %vm262, %v218, 0
      %v300 = vsel %vm262, %v219, 0
      %v303 = vsel %vm262, %v220, 0
      %v306 = vsel %vm262, %v221, 0
      %v309 = vsel %vm262, %v222, 0
      %311 = vmatprep.subr.bf16.mxu0 0
      %312 = vmatpush1.bf16.msra.mxu0 %v254
      %313 = vmatprep.subr.bf16.mxu0 0
      %314 = vmatpush1.bf16.msra.mxu0 %v255
      %315 = vmatprep.subr.bf16.mxu0 0
      %316 = vmatpush1.bf16.msra.mxu0 %v256
      %317 = vmatprep.subr.bf16.mxu0 0
      %318 = vmatpush1.bf16.msra.mxu0 %v257
      %319 = vmatprep.subr.bf16.mxu0 0
      %320 = vmatpush1.bf16.msra.mxu0 0
      %321 = vmatprep.subr.bf16.mxu0 0
      %322 = vmatpush1.bf16.msra.mxu0 0
      %323 = vmatprep.subr.bf16.mxu0 0
      %324 = vmatpush1.bf16.msra.mxu0 0
      %325 = vmatprep.subr.bf16.mxu0 0
      %326 = vmatpush1.bf16.msra.mxu0 0
      %327 = vmatprep.subr.bf16.mxu0 0
      %328 = vmatpush1.bf16.msra.mxu0 0
      %329 = vmatprep.subr.bf16.mxu0 0
      %330 = vmatpush1.bf16.msra.mxu0 0
      %331 = vmatprep.subr.bf16.mxu0 0
      %332 = vmatpush1.bf16.msra.mxu0 0
      %333 = vmatprep.subr.bf16.mxu0 0
      %334 = vmatpush1.bf16.msra.mxu0 0
      %335 = vmatprep.subr.bf16.mxu0 0
      %336 = vmatpush1.bf16.msra.mxu0 0
      %337 = vmatprep.subr.bf16.mxu0 0
      %338 = vmatpush1.bf16.msra.mxu0 0
      %339 = vmatprep.subr.bf16.mxu0 0
      %340 = vmatpush1.bf16.msra.mxu0 0
      %341 = vmatprep.subr.bf16.mxu0 0
      %342 = vmatpush1.bf16.msra.mxu0 0
      %343 = vmatprep.mubr.bf16.mxu0 0
      %344 = vmatmul.mubr.bf16.gmra.mrb[0].mxu0 %v264
      %v345 = vpop.f32.mrb[0].mxu0
      %v346 = vadd.f32 %v236, %v345
      %v347 = vpop.f32.mrb[0].mxu0
      %v348 = vpop.f32.mrb[0].mxu0
      %v349 = vadd.f32 %v236, %v348
      %v350 = vpop.f32.mrb[0].mxu0
      %351 = vmatprep.mubr.bf16.mxu0 0
      %352 = vmatmul.mubr.bf16.gmra.mrb[0].mxu0 %v267
      %v353 = vpop.f32.mrb[0].mxu0
      %v354 = vadd.f32 %v236, %v353
      %v355 = vpop.f32.mrb[0].mxu0
      %v356 = vpop.f32.mrb[0].mxu0
      %v357 = vadd.f32 %v236, %v356
      %v358 = vpop.f32.mrb[0].mxu0
      %359 = vmatprep.mubr.bf16.mxu0 0
      %360 = vmatmul.mubr.bf16.gmra.mrb[0].mxu0 %v270
      %v361 = vpop.f32.mrb[0].mxu0
      %v362 = vadd.f32 %v236, %v361
      %v363 = vpop.f32.mrb[0].mxu0
      %v364 = vpop.f32.mrb[0].mxu0
      %v365 = vadd.f32 %v236, %v364
      %v366 = vpop.f32.mrb[0].mxu0
      %367 = vmatprep.mubr.bf16.mxu0 0
      %368 = vmatmul.mubr.bf16.gmra.mrb[0].mxu0 %v273
      %v369 = vpop.f32.mrb[0].mxu0
      %v370 = vadd.f32 %v236, %v369
      %v371 = vpop.f32.mrb[0].mxu0
      %v372 = vpop.f32.mrb[0].mxu0
      %v373 = vadd.f32 %v236, %v372
      %v374 = vpop.f32.mrb[0].mxu0
      %375 = vmatprep.mubr.bf16.mxu0 0
      %376 = vmatmul.mubr.bf16.gmra.mrb[0].mxu0 %v276
      %v377 = vpop.f32.mrb[0].mxu0
      %v378 = vadd.f32 %v236, %v377
      %v379 = vpop.f32.mrb[0].mxu0
      %v380 = vpop.f32.mrb[0].mxu0
      %v381 = vadd.f32 %v236, %v380
      %v382 = vpop.f32.mrb[0].mxu0
      %383 = vmatprep.mubr.bf16.mxu0 0
      %384 = vmatmul.mubr.bf16.gmra.mrb[0].mxu0 %v279
      %v385 = vpop.f32.mrb[0].mxu0
      %v386 = vadd.f32 %v236, %v385
      %v387 = vpop.f32.mrb[0].mxu0
      %v388 = vpop.f32.mrb[0].mxu0
      %v389 = vadd.f32 %v236, %v388
      %v390 = vpop.f32.mrb[0].mxu0
      %391 = vmatprep.mubr.bf16.mxu0 0
      %392 = vmatmul.mubr.bf16.gmra.mrb[0].mxu0 %v282
      %v393 = vpop.f32.mrb[0].mxu0
      %v394 = vadd.f32 %v236, %v393
      %v395 = vpop.f32.mrb[0].mxu0
      %v396 = vpop.f32.mrb[0].mxu0
      %v397 = vadd.f32 %v236, %v396
      %v398 = vpop.f32.mrb[0].mxu0
      %399 = vmatprep.mubr.bf16.mxu0 0
      %400 = vmatmul.mubr.bf16.gmra.mrb[0].mxu0 %v285
      %v401 = vpop.f32.mrb[0].mxu0
      %v402 = vadd.f32 %v236, %v401
      %v403 = vpop.f32.mrb[0].mxu0
      %v404 = vpop.f32.mrb[0].mxu0
      %v405 = vadd.f32 %v236, %v404
      %v406 = vpop.f32.mrb[0].mxu0
      %407 = vmatprep.mubr.bf16.mxu0 0
      %408 = vmatmul.mubr.bf16.gmra.mrb[0].mxu0 %v288
      %v409 = vpop.f32.mrb[0].mxu0
      %v410 = vadd.f32 %v236, %v409
      %v411 = vpop.f32.mrb[0].mxu0
      %v412 = vpop.f32.mrb[0].mxu0
      %v413 = vadd.f32 %v236, %v412
      %v414 = vpop.f32.mrb[0].mxu0
      %415 = vmatprep.mubr.bf16.mxu0 0
      %416 = vmatmul.mubr.bf16.gmra.mrb[0].mxu0 %v291
      %v417 = vpop.f32.mrb[0].mxu0
      %v418 = vadd.f32 %v236, %v417
      %v419 = vpop.f32.mrb[0].mxu0
      %v420 = vpop.f32.mrb[0].mxu0
      %v421 = vadd.f32 %v236, %v420
      %v422 = vpop.f32.mrb[0].mxu0
      %423 = vmatprep.mubr.bf16.mxu0 0
      %424 = vmatmul.mubr.bf16.gmra.mrb[0].mxu0 %v294
      %v425 = vpop.f32.mrb[0].mxu0
      %v426 = vadd.f32 %v236, %v425
      %v427 = vpop.f32.mrb[0].mxu0
      %v428 = vpop.f32.mrb[0].mxu0
      %v429 = vadd.f32 %v236, %v428
      %v430 = vpop.f32.mrb[0].mxu0
      %431 = vmatprep.mubr.bf16.mxu0 0
      %432 = vmatmul.mubr.bf16.gmra.mrb[0].mxu0 %v297
      %v433 = vpop.f32.mrb[0].mxu0
      %v434 = vadd.f32 %v236, %v433
      %v435 = vpop.f32.mrb[0].mxu0
      %v436 = vpop.f32.mrb[0].mxu0
      %v437 = vadd.f32 %v236, %v436
      %v438 = vpop.f32.mrb[0].mxu0
      %439 = vmatprep.mubr.bf16.mxu0 0
      %440 = vmatmul.mubr.bf16.gmra.mrb[0].mxu0 %v300
      %v441 = vpop.f32.mrb[0].mxu0
      %v442 = vadd.f32 %v236, %v441
      %v443 = vpop.f32.mrb[0].mxu0
      %v444 = vpop.f32.mrb[0].mxu0
      %v445 = vadd.f32 %v236, %v444
      %v446 = vpop.f32.mrb[0].mxu0
      %447 = vmatprep.mubr.bf16.mxu0 0
      %448 = vmatmul.mubr.bf16.gmra.mrb[0].mxu0 %v303
      %v449 = vpop.f32.mrb[0].mxu0
      %v450 = vadd.f32 %v236, %v449
      %v451 = vpop.f32.mrb[0].mxu0
      %v452 = vpop.f32.mrb[0].mxu0
      %v453 = vadd.f32 %v236, %v452
      %v454 = vpop.f32.mrb[0].mxu0
      %455 = vmatprep.mubr.bf16.mxu0 0
      %456 = vmatmul.mubr.bf16.gmra.mrb[0].mxu0 %v306
      %v457 = vpop.f32.mrb[0].mxu0
      %v458 = vadd.f32 %v236, %v457
      %v459 = vpop.f32.mrb[0].mxu0
      %v460 = vpop.f32.mrb[0].mxu0
      %v461 = vadd.f32 %v236, %v460
      %v462 = vpop.f32.mrb[0].mxu0
      %463 = vmatprep.mubr.bf16.mxu0 0
      %464 = vmatmul.mubr.bf16.gmra.mrb[0].mxu0 %v309
      %v465 = vpop.f32.mrb[0].mxu0
      %v466 = vadd.f32 %v236, %v465
      %v467 = vpop.f32.mrb[0].mxu0
      %v468 = vpop.f32.mrb[0].mxu0
      %v469 = vadd.f32 %v236, %v468
      %v470 = vpop.f32.mrb[0].mxu0
      %471 = vdwg.mxu0
      %vm472 = vcmask 97280
      %473 = vst.msk [vmem:[%s172] sm:$0xff] %vm472, %v346
      %474 = vst.msk [vmem:[%s172 + $0x8] sm:$0xff] %vm472, %v349
      %475 = vst.msk [vmem:[%s172 + $0x10] sm:$0xff] %vm472, %v354
      %476 = vst.msk [vmem:[%s172 + $0x18] sm:$0xff] %vm472, %v357
      %477 = vst.msk [vmem:[%s172 + $0x20] sm:$0xff] %vm472, %v362
      %478 = vst.msk [vmem:[%s172 + $0x28] sm:$0xff] %vm472, %v365
      %479 = vst.msk [vmem:[%s172 + $0x30] sm:$0xff] %vm472, %v370
      %480 = vst.msk [vmem:[%s172 + $0x38] sm:$0xff] %vm472, %v373
      %481 = vst.msk [vmem:[%s172 + $0x40] sm:$0xff] %vm472, %v378
      %482 = vst.msk [vmem:[%s172 + $0x48] sm:$0xff] %vm472, %v381
      %483 = vst.msk [vmem:[%s172 + $0x50] sm:$0xff] %vm472, %v386
      %484 = vst.msk [vmem:[%s172 + $0x58] sm:$0xff] %vm472, %v389
      %485 = vst.msk [vmem:[%s172 + $0x60] sm:$0xff] %vm472, %v394
      %486 = vst.msk [vmem:[%s172 + $0x68] sm:$0xff] %vm472, %v397
      %487 = vst.msk [vmem:[%s172 + $0x70] sm:$0xff] %vm472, %v402
      %488 = vst.msk [vmem:[%s172 + $0x78] sm:$0xff] %vm472, %v405
      %489 = vst.msk [vmem:[%s172 + $0x80] sm:$0xff] %vm472, %v410
      %490 = vst.msk [vmem:[%s172 + $0x88] sm:$0xff] %vm472, %v413
      %491 = vst.msk [vmem:[%s172 + $0x90] sm:$0xff] %vm472, %v418
      %492 = vst.msk [vmem:[%s172 + $0x98] sm:$0xff] %vm472, %v421
      %493 = vst.msk [vmem:[%s172 + $0xa0] sm:$0xff] %vm472, %v426
      %494 = vst.msk [vmem:[%s172 + $0xa8] sm:$0xff] %vm472, %v429
      %495 = vst.msk [vmem:[%s172 + $0xb0] sm:$0xff] %vm472, %v434
      %496 = vst.msk [vmem:[%s172 + $0xb8] sm:$0xff] %vm472, %v437
      %497 = vst.msk [vmem:[%s172 + $0xc0] sm:$0xff] %vm472, %v442
      %498 = vst.msk [vmem:[%s172 + $0xc8] sm:$0xff] %vm472, %v445
      %499 = vst.msk [vmem:[%s172 + $0xd0] sm:$0xff] %vm472, %v450
      %500 = vst.msk [vmem:[%s172 + $0xd8] sm:$0xff] %vm472, %v453
      %501 = vst.msk [vmem:[%s172 + $0xe0] sm:$0xff] %vm472, %v458
      %502 = vst.msk [vmem:[%s172 + $0xe8] sm:$0xff] %vm472, %v461
      %503 = vst.msk [vmem:[%s172 + $0xf0] sm:$0xff] %vm472, %v466
      %504 = vst.msk [vmem:[%s172 + $0xf8] sm:$0xff] %vm472, %v469
      %s505 = smul.u32 32, %s14
      %p506 = scmp.lt.s32.totalorder %s505, 255
      %s507 = scalar_select %p506, %s505, 255
      %s508 = smul.addr %s507, 8
      %s509 = scalar_lea.vmem %s3, %s508
      // Predicated region
      $region33: #{celeba_img_decoder_forward.19} parent=31 // pred_check
        %p510 = pneg %p100
      $region34: #{celeba_img_decoder_forward.19} parent=31 // pred_check_branch
        %512 = sbr.rel (%p510) target = $region36
      $region35: #{celeba_img_decoder_forward.19} parent=31 // pred_region
        %s513 = smul.u32 32, %s14
      $region36: #{celeba_img_decoder_forward.19} parent=31 // pred_fallthru
        _
    $region32: #{celeba_img_decoder_forward.19} parent=5 // pred_fallthru
      _
    %p514 = scmp.le.s32.totalorder 2, %s9
    // Predicated region
    $region37: #{celeba_img_decoder_forward.19} parent=5 // pred_check
      %p515 = pneg %p514
    $region38: #{celeba_img_decoder_forward.19} parent=5 // pred_check_branch
      %517 = sbr.rel (%p515) target = $region40
    $region39: #{celeba_img_decoder_forward.19} parent=5 // pred_region
      %s518 = ssub.s32 %s9, 2
      // Predicated region
      $region41: #{celeba_img_decoder_forward.19} parent=39 // pred_check
        %p519 = pneg %p106
      $region42: #{celeba_img_decoder_forward.19} parent=39 // pred_check_branch
        %521 = sbr.rel (%p519) target = $region44
      $region43: #{celeba_img_decoder_forward.19} parent=39 // pred_region
        %s522 = smul.u32 32, %s15
        %p523 = scmp.lt.s32.totalorder %s522, 255
        %s524 = scalar_select %p523, %s522, 255
        %s525 = smul.addr %s524, 8
        %s526 = scalar_lea.vmem %s3, %s525
      $region44: #{celeba_img_decoder_forward.19} parent=39 // pred_fallthru
        _
    $region40: #{celeba_img_decoder_forward.19} parent=5 // pred_fallthru
      _
  $region6: #{celeba_img_decoder_forward.19} parent=0 // loop_footer
    %s13 = sadd.s32 1, %s9
  $region7: #{celeba_img_decoder_forward.19} parent=0 // loop_footer_branch
    %8 = sbr.rel target = $region3
  $region8: #{celeba_img_decoder_forward.19} parent=0 // loop_exit
    _

</llo_original>
